<compile_context>
chip_gen: v7x
topology: tpu7x:2x2x1
jax: 0.10.0
libtpu: 0.0.40
codegen_flags: <defaults>
</compile_context>

<pallas_src>
import functools

import jax
import jax.numpy as jnp
import numpy as np
from jax import lax
from jax.experimental import pallas as pl
from jax.experimental.pallas import tpu as pltpu

EPS = 1e-5


def basic_block_kernel(H, x_ref, w1_ref, g1_ref, b1_ref, w2_ref, g2_ref, b2_ref,
                       out_ref, stack_ref):
    """Fused conv3x3 -> BN -> relu -> conv3x3 -> BN -> +residual -> relu.

    Shapes (all 2-D, lane axis last):
      x_ref      : (M, WC)      f32, M = N*H, WC = W*C (lane index = x*C + c)
      w{1,2}_ref : (3*WC, WC)   bf16 stacked block-Toeplitz conv weights
                                 (rows [ky*WC : (ky+1)*WC] = taps for ky)
      g*/b*      : (1, C)       f32 BN gamma / beta
      out_ref    : (M, WC)      f32
      stack_ref  : (M, 3*WC)    bf16 scratch holding [up | src | dn]
    """
    M, WC = x_ref.shape
    C = g1_ref.shape[-1]
    W = WC // C
    inv_count = 1.0 / float(M * W)                  # 1 / (N*H*W)

    x = x_ref[...]                                  # f32; also the residual

    # Boundary masks for the +-1 row shifts, built in-kernel (no inputs).
    row = lax.broadcasted_iota(jnp.int32, (M, WC), 0)
    top_row = (row % H) == 0                        # receiving row = image top
    bot_row = (row % H) == (H - 1)                  # receiving row = image bottom

    # Lane-position <-> channel 0/1 matrices for per-channel BN statistics,
    # also generated in-kernel from iotas (hoisted once; no HBM traffic).
    lane_f = lax.broadcasted_iota(jnp.int32, (WC, C), 0)
    chan_f = lax.broadcasted_iota(jnp.int32, (WC, C), 1)
    fold = (lane_f % C == chan_f).astype(jnp.float32)        # (WC, C)
    chan_e = lax.broadcasted_iota(jnp.int32, (C, WC), 0)
    lane_e = lax.broadcasted_iota(jnp.int32, (C, WC), 1)
    expand = (lane_e % C == chan_e).astype(jnp.float32)      # (C, WC)

    def conv3x3(src_f32, w_ref):
        # Vertical taps: sublane roll (XLU) + boundary zeroing (VPU select),
        # rolls done on unpacked f32 rows; bf16 only for the MXU operands.
        up = jnp.where(top_row, 0.0, pltpu.roll(src_f32, shift=1, axis=0))
        dn = jnp.where(bot_row, 0.0, pltpu.roll(src_f32, shift=M - 1, axis=0))
        # K-stacked operand [up | src | dn]: unmasked stores at lane offsets
        # 0 / WC / 2*WC (multiples of 128).
        stack_ref[:, 0:WC] = up.astype(jnp.bfloat16)
        stack_ref[:, WC:2 * WC] = src_f32.astype(jnp.bfloat16)
        stack_ref[:, 2 * WC:3 * WC] = dn.astype(jnp.bfloat16)
        # Single K = 3*WC bf16 MXU matmul, f32 accumulation.
        return jnp.dot(stack_ref[...], w_ref[...],
                       preferred_element_type=jnp.float32)   # (M, WC) f32

    def bn_train(acc, gamma, beta):
        # Single pass over acc: per-lane sum / sum-of-squares, then fold the
        # W lane-groups into per-channel stats with a tiny 0/1 matmul.
        rs = jnp.sum(acc, axis=0, keepdims=True)              # (1, WC)
        rss = jnp.sum(acc * acc, axis=0, keepdims=True)       # (1, WC)
        mean = jnp.dot(rs, fold, preferred_element_type=jnp.float32) * inv_count
        ex2 = jnp.dot(rss, fold, preferred_element_type=jnp.float32) * inv_count
        var = ex2 - mean * mean                               # biased variance
        scale = gamma * lax.rsqrt(var + EPS)                  # (1, C)
        shift = beta - mean * scale
        scale_b = jnp.dot(scale, expand, preferred_element_type=jnp.float32)
        shift_b = jnp.dot(shift, expand, preferred_element_type=jnp.float32)
        return acc * scale_b + shift_b

    y = jnp.maximum(bn_train(conv3x3(x, w1_ref), g1_ref[...], b1_ref[...]), 0.0)
    z = bn_train(conv3x3(y, w2_ref), g2_ref[...], b2_ref[...])
    out_ref[...] = jnp.maximum(z + x, 0.0)


def _row_toeplitz(w_hwio, W):
    """(3, 3, Cin, Cout) conv weight -> (3, W*Cin, W*Cout) block-Toeplitz.

    Wb[ky][xi*Cin + ci, xo*Cout + co] = w[ky, xi - xo + 1, ci, co] when the
    horizontal tap is in range, else 0 -- i.e. x-direction 'SAME' padding is
    baked into the matrix.
    """
    KH, KW, Cin, Cout = w_hwio.shape
    xi = jnp.arange(W)[:, None]
    xo = jnp.arange(W)[None, :]
    dx = xi - xo + 1                                           # (W, W)
    valid = (dx >= 0) & (dx < KW)
    wt = w_hwio[:, jnp.clip(dx, 0, KW - 1)]                    # (KH, W, W, Cin, Cout)
    wt = jnp.where(valid[None, :, :, None, None], wt, 0.0)
    wt = jnp.transpose(wt, (0, 1, 3, 2, 4))                    # (KH, W, Cin, W, Cout)
    return wt.reshape(KH, W * Cin, W * Cout)


def basic_block_forward(x_nchw, params):
    """NCHW in / NCHW out; all hot-path compute inside one Pallas kernel."""
    x_nchw = x_nchw.astype(jnp.float32)
    N, C, H, W = x_nchw.shape
    M, WC = N * H, W * C

    # Row-packed layout: (N, C, H, W) -> (N, H, W, C) -> (N*H, W*C).
    x_rows = jnp.transpose(x_nchw, (0, 2, 3, 1)).reshape(M, WC)

    # PyTorch conv weight (Cout, Cin, 3, 3) -> (ky, kx, Cin, Cout) -> Toeplitz,
    # then K-stacked to (3*WC, WC) to match the [up|src|dn] operand.
    wb1 = _row_toeplitz(jnp.transpose(params["w1"], (2, 3, 1, 0)), W)
    wb1 = wb1.reshape(3 * WC, WC).astype(jnp.bfloat16)
    wb2 = _row_toeplitz(jnp.transpose(params["w2"], (2, 3, 1, 0)), W)
    wb2 = wb2.reshape(3 * WC, WC).astype(jnp.bfloat16)

    g1 = params["gamma1"].reshape(1, C).astype(jnp.float32)
    b1 = params["beta1"].reshape(1, C).astype(jnp.float32)
    g2 = params["gamma2"].reshape(1, C).astype(jnp.float32)
    b2 = params["beta2"].reshape(1, C).astype(jnp.float32)

    # Two K=3*WC conv matmuls dominate; BN fold/expand matmuls are negligible.
    flops = 2 * (2 * M * (3 * WC) * WC)
    bytes_accessed = (2 * M * WC * 4                 # x in + out (f32)
                      + (wb1.size + wb2.size) * 2    # bf16 weights
                      + 4 * C * 4)                   # BN params

    vmem = pl.BlockSpec(memory_space=pltpu.MemorySpace.VMEM)
    out_rows = pl.pallas_call(
        functools.partial(basic_block_kernel, H),
        out_shape=jax.ShapeDtypeStruct((M, WC), jnp.float32),
        in_specs=[vmem] * 7,
        out_specs=vmem,
        scratch_shapes=[pltpu.VMEM((M, 3 * WC), jnp.bfloat16)],
        compiler_params=pltpu.CompilerParams(vmem_limit_bytes=32 * 1024 * 1024),
        cost_estimate=pl.CostEstimate(flops=flops, transcendentals=2 * C,
                                      bytes_accessed=bytes_accessed),
    )(x_rows, wb1, g1, b1, wb2, g2, b2)

    # (N*H, W*C) -> (N, H, W, C) -> NCHW.
    return jnp.transpose(out_rows.reshape(N, H, W, C), (0, 3, 1, 2))


def basic_block_reference(x_nchw, params):
    """Pure-JAX f32 reference (NCHW) for correctness checking."""
    def conv(x, w):
        return lax.conv_general_dilated(
            x, w, window_strides=(1, 1), padding="SAME",
            dimension_numbers=("NCHW", "OIHW", "NCHW"))

    def bn(x, gamma, beta):
        mu = jnp.mean(x, axis=(0, 2, 3), keepdims=True)
        var = jnp.mean((x - mu) ** 2, axis=(0, 2, 3), keepdims=True)
        g = gamma.reshape(1, -1, 1, 1)
        b = beta.reshape(1, -1, 1, 1)
        return (x - mu) * lax.rsqrt(var + EPS) * g + b

    out = jnp.maximum(bn(conv(x_nchw, params["w1"]), params["gamma1"], params["beta1"]), 0.0)
    out = bn(conv(out, params["w2"]), params["gamma2"], params["beta2"])
    return jnp.maximum(out + x_nchw, 0.0)


def init_params(key, inplanes, planes):
    k1, k2, k3, k4, k5, k6 = jax.random.split(key, 6)
    return {
        "w1": 0.1 * jax.random.normal(k1, (planes, inplanes, 3, 3), jnp.float32),
        "w2": 0.1 * jax.random.normal(k2, (planes, planes, 3, 3), jnp.float32),
        "gamma1": 1.0 + 0.1 * jax.random.normal(k3, (planes,), jnp.float32),
        "beta1": 0.1 * jax.random.normal(k4, (planes,), jnp.float32),
        "gamma2": 1.0 + 0.1 * jax.random.normal(k5, (planes,), jnp.float32),
        "beta2": 0.1 * jax.random.normal(k6, (planes,), jnp.float32),
    }


if __name__ == "__main__":
    key = jax.random.PRNGKey(0)
    kx, kp = jax.random.split(key)

    # inplanes = planes = 8 so W*C = 128 lanes; N*H = 256 rows fills the MXU
    # M dimension on every TPU generation (v5e 128-wide, v6e/v7x 256-wide).
    N, C, H, W = 16, 8, 16, 16
    x = jax.random.normal(kx, (N, C, H, W), jnp.float32)
    params = init_params(kp, inplanes=C, planes=C)

    out = jax.block_until_ready(jax.jit(basic_block_forward)(x, params))
    ref = jax.block_until_ready(basic_block_reference(x, params))

    assert out.shape == (N, C, H, W)
    # Tolerance loosened vs a pure-f32 kernel: conv operands run in bf16 on the
    # MXU (f32 accumulation); BN/relu/residual stay f32.
    np.testing.assert_allclose(np.asarray(out), np.asarray(ref), rtol=5e-2, atol=5e-2)
    print("KERNEL_OK")
</pallas_src>

<mosaic_0001>
module attributes {stable_mosaic.version = 11 : i64} {
  func.func @basic_block_kernel(%arg0: memref<256x128xf32, #tpu.memory_space<vmem>>, %arg1: memref<384x128xbf16, #tpu.memory_space<vmem>>, %arg2: memref<1x8xf32, #tpu.memory_space<vmem>>, %arg3: memref<1x8xf32, #tpu.memory_space<vmem>>, %arg4: memref<384x128xbf16, #tpu.memory_space<vmem>>, %arg5: memref<1x8xf32, #tpu.memory_space<vmem>>, %arg6: memref<1x8xf32, #tpu.memory_space<vmem>>, %arg7: memref<256x128xf32, #tpu.memory_space<vmem>>, %arg8: memref<256x384xbf16, #tpu.memory_space<vmem>>) attributes {dimension_semantics = [], scalar_prefetch = 0 : i64, scratch_operands = 1 : i64, tpu.core_type = #tpu.core_type<tc>} {
    %c0 = arith.constant 0 : index
    %c0_0 = arith.constant 0 : index
    %0 = vector.load %arg0[%c0, %c0_0] : memref<256x128xf32, #tpu.memory_space<vmem>>, vector<256x128xf32>
    %1 = tpu.iota {dimensions = array<i32: 0>} : vector<256x128xi32>
    %c16_i32 = arith.constant 16 : i32
    %c0_i32 = arith.constant 0 : i32
    %2 = arith.cmpi eq, %c16_i32, %c0_i32 : i32
    %c1_i32 = arith.constant 1 : i32
    %3 = arith.select %2, %c1_i32, %c16_i32 : i32
    %4 = vector.broadcast %3 : i32 to vector<256x128xi32>
    %5 = arith.remsi %1, %4 : vector<256x128xi32>
    %c0_i32_1 = arith.constant 0 : i32
    %6 = vector.broadcast %c0_i32_1 : i32 to vector<256x128xi32>
    %7 = arith.cmpi ne, %5, %6 : vector<256x128xi32>
    %c0_i32_2 = arith.constant 0 : i32
    %8 = vector.broadcast %c0_i32_2 : i32 to vector<256x128xi32>
    %9 = arith.cmpi slt, %5, %8 : vector<256x128xi32>
    %c0_i32_3 = arith.constant 0 : i32
    %10 = arith.cmpi slt, %3, %c0_i32_3 : i32
    %11 = vector.broadcast %10 : i1 to vector<256x128xi1>
    %12 = vector.broadcast %11 : vector<256x128xi1> to vector<256x128xi1>
    %13 = arith.xori %9, %12 : vector<256x128xi1>
    %14 = arith.andi %13, %7 : vector<256x128xi1>
    %15 = vector.broadcast %3 : i32 to vector<256x128xi32>
    %16 = arith.addi %5, %15 : vector<256x128xi32>
    %17 = arith.select %14, %16, %5 : vector<256x128xi1>, vector<256x128xi32>
    %c0_i32_4 = arith.constant 0 : i32
    %18 = vector.broadcast %c0_i32_4 : i32 to vector<256x128xi32>
    %19 = arith.cmpi eq, %17, %18 : vector<256x128xi32>
    %c16_i32_5 = arith.constant 16 : i32
    %c0_i32_6 = arith.constant 0 : i32
    %20 = arith.cmpi eq, %c16_i32_5, %c0_i32_6 : i32
    %c1_i32_7 = arith.constant 1 : i32
    %21 = arith.select %20, %c1_i32_7, %c16_i32_5 : i32
    %22 = vector.broadcast %21 : i32 to vector<256x128xi32>
    %23 = arith.remsi %1, %22 : vector<256x128xi32>
    %c0_i32_8 = arith.constant 0 : i32
    %24 = vector.broadcast %c0_i32_8 : i32 to vector<256x128xi32>
    %25 = arith.cmpi ne, %23, %24 : vector<256x128xi32>
    %c0_i32_9 = arith.constant 0 : i32
    %26 = vector.broadcast %c0_i32_9 : i32 to vector<256x128xi32>
    %27 = arith.cmpi slt, %23, %26 : vector<256x128xi32>
    %c0_i32_10 = arith.constant 0 : i32
    %28 = arith.cmpi slt, %21, %c0_i32_10 : i32
    %29 = vector.broadcast %28 : i1 to vector<256x128xi1>
    %30 = vector.broadcast %29 : vector<256x128xi1> to vector<256x128xi1>
    %31 = arith.xori %27, %30 : vector<256x128xi1>
    %32 = arith.andi %31, %25 : vector<256x128xi1>
    %33 = vector.broadcast %21 : i32 to vector<256x128xi32>
    %34 = arith.addi %23, %33 : vector<256x128xi32>
    %35 = arith.select %32, %34, %23 : vector<256x128xi1>, vector<256x128xi32>
    %c15_i32 = arith.constant 15 : i32
    %36 = vector.broadcast %c15_i32 : i32 to vector<256x128xi32>
    %37 = arith.cmpi eq, %35, %36 : vector<256x128xi32>
    %38 = tpu.iota {dimensions = array<i32: 0>} : vector<128x8xi32>
    %39 = tpu.iota {dimensions = array<i32: 1>} : vector<128x8xi32>
    %c8_i32 = arith.constant 8 : i32
    %c0_i32_11 = arith.constant 0 : i32
    %40 = arith.cmpi eq, %c8_i32, %c0_i32_11 : i32
    %c1_i32_12 = arith.constant 1 : i32
    %41 = arith.select %40, %c1_i32_12, %c8_i32 : i32
    %42 = vector.broadcast %41 : i32 to vector<128x8xi32>
    %43 = arith.remsi %38, %42 : vector<128x8xi32>
    %c0_i32_13 = arith.constant 0 : i32
    %44 = vector.broadcast %c0_i32_13 : i32 to vector<128x8xi32>
    %45 = arith.cmpi ne, %43, %44 : vector<128x8xi32>
    %c0_i32_14 = arith.constant 0 : i32
    %46 = vector.broadcast %c0_i32_14 : i32 to vector<128x8xi32>
    %47 = arith.cmpi slt, %43, %46 : vector<128x8xi32>
    %c0_i32_15 = arith.constant 0 : i32
    %48 = arith.cmpi slt, %41, %c0_i32_15 : i32
    %49 = vector.broadcast %48 : i1 to vector<128x8xi1>
    %50 = vector.broadcast %49 : vector<128x8xi1> to vector<128x8xi1>
    %51 = arith.xori %47, %50 : vector<128x8xi1>
    %52 = arith.andi %51, %45 : vector<128x8xi1>
    %53 = vector.broadcast %41 : i32 to vector<128x8xi32>
    %54 = arith.addi %43, %53 : vector<128x8xi32>
    %55 = arith.select %52, %54, %43 : vector<128x8xi1>, vector<128x8xi32>
    %56 = arith.cmpi eq, %55, %39 : vector<128x8xi32>
    %57 = arith.extui %56 : vector<128x8xi1> to vector<128x8xi32>
    %58 = arith.sitofp %57 : vector<128x8xi32> to vector<128x8xf32>
    %59 = tpu.iota {dimensions = array<i32: 0>} : vector<8x128xi32>
    %60 = tpu.iota {dimensions = array<i32: 1>} : vector<8x128xi32>
    %c8_i32_16 = arith.constant 8 : i32
    %c0_i32_17 = arith.constant 0 : i32
    %61 = arith.cmpi eq, %c8_i32_16, %c0_i32_17 : i32
    %c1_i32_18 = arith.constant 1 : i32
    %62 = arith.select %61, %c1_i32_18, %c8_i32_16 : i32
    %63 = vector.broadcast %62 : i32 to vector<8x128xi32>
    %64 = arith.remsi %60, %63 : vector<8x128xi32>
    %c0_i32_19 = arith.constant 0 : i32
    %65 = vector.broadcast %c0_i32_19 : i32 to vector<8x128xi32>
    %66 = arith.cmpi ne, %64, %65 : vector<8x128xi32>
    %c0_i32_20 = arith.constant 0 : i32
    %67 = vector.broadcast %c0_i32_20 : i32 to vector<8x128xi32>
    %68 = arith.cmpi slt, %64, %67 : vector<8x128xi32>
    %c0_i32_21 = arith.constant 0 : i32
    %69 = arith.cmpi slt, %62, %c0_i32_21 : i32
    %70 = vector.broadcast %69 : i1 to vector<8x128xi1>
    %71 = vector.broadcast %70 : vector<8x128xi1> to vector<8x128xi1>
    %72 = arith.xori %68, %71 : vector<8x128xi1>
    %73 = arith.andi %72, %66 : vector<8x128xi1>
    %74 = vector.broadcast %62 : i32 to vector<8x128xi32>
    %75 = arith.addi %64, %74 : vector<8x128xi32>
    %76 = arith.select %73, %75, %64 : vector<8x128xi1>, vector<8x128xi32>
    %77 = arith.cmpi eq, %76, %59 : vector<8x128xi32>
    %78 = arith.extui %77 : vector<8x128xi1> to vector<8x128xi32>
    %79 = arith.sitofp %78 : vector<8x128xi32> to vector<8x128xf32>
    %c1_i32_22 = arith.constant 1 : i32
    %80 = tpu.dynamic_rotate %0 by %c1_i32_22 dim 0 : vector<256x128xf32>, i32 -> vector<256x128xf32>
    %cst = arith.constant 0.000000e+00 : f32
    %81 = vector.broadcast %cst : f32 to vector<256x128xf32>
    %82 = arith.select %19, %81, %80 : vector<256x128xi1>, vector<256x128xf32>
    %c255_i32 = arith.constant 255 : i32
    %83 = tpu.dynamic_rotate %0 by %c255_i32 dim 0 : vector<256x128xf32>, i32 -> vector<256x128xf32>
    %cst_23 = arith.constant 0.000000e+00 : f32
    %84 = vector.broadcast %cst_23 : f32 to vector<256x128xf32>
    %85 = arith.select %37, %84, %83 : vector<256x128xi1>, vector<256x128xf32>
    %86 = arith.truncf %82 : vector<256x128xf32> to vector<256x128xbf16>
    %c0_24 = arith.constant 0 : index
    %c0_25 = arith.constant 0 : index
    %87 = vector.load %arg8[%c0_24, %c0_25] : memref<256x384xbf16, #tpu.memory_space<vmem>>, vector<256x128xbf16>
    tpu.vector_store %arg8[%c0_24, %c0_25], %86 {strides = array<i32>} : memref<256x384xbf16, #tpu.memory_space<vmem>>, vector<256x128xbf16>,
    %88 = arith.truncf %0 : vector<256x128xf32> to vector<256x128xbf16>
    %c0_26 = arith.constant 0 : index
    %c128 = arith.constant 128 : index
    %89 = vector.load %arg8[%c0_26, %c128] : memref<256x384xbf16, #tpu.memory_space<vmem>>, vector<256x128xbf16>
    tpu.vector_store %arg8[%c0_26, %c128], %88 {strides = array<i32>} : memref<256x384xbf16, #tpu.memory_space<vmem>>, vector<256x128xbf16>,
    %90 = arith.truncf %85 : vector<256x128xf32> to vector<256x128xbf16>
    %c0_27 = arith.constant 0 : index
    %c256 = arith.constant 256 : index
    %91 = vector.load %arg8[%c0_27, %c256] : memref<256x384xbf16, #tpu.memory_space<vmem>>, vector<256x128xbf16>
    tpu.vector_store %arg8[%c0_27, %c256], %90 {strides = array<i32>} : memref<256x384xbf16, #tpu.memory_space<vmem>>, vector<256x128xbf16>,
    %c0_28 = arith.constant 0 : index
    %c0_29 = arith.constant 0 : index
    %92 = vector.load %arg8[%c0_28, %c0_29] : memref<256x384xbf16, #tpu.memory_space<vmem>>, vector<256x384xbf16>
    %c0_30 = arith.constant 0 : index
    %c0_31 = arith.constant 0 : index
    %93 = vector.load %arg1[%c0_30, %c0_31] : memref<384x128xbf16, #tpu.memory_space<vmem>>, vector<384x128xbf16>
    %cst_32 = arith.constant dense<0.000000e+00> : vector<256x128xf32>
    %94 = tpu.matmul %92, %93, %cst_32 {dimension_numbers = #tpu.dot_dimension_numbers<[1], [0], [0], [1], [0, 0, 1, 1], [], []>} : vector<256x384xbf16>, vector<384x128xbf16>, vector<256x128xf32> -> vector<256x128xf32>
    %c0_33 = arith.constant 0 : index
    %c0_34 = arith.constant 0 : index
    %95 = vector.load %arg2[%c0_33, %c0_34] : memref<1x8xf32, #tpu.memory_space<vmem>>, vector<1x8xf32>
    %c0_35 = arith.constant 0 : index
    %c0_36 = arith.constant 0 : index
    %96 = vector.load %arg3[%c0_35, %c0_36] : memref<1x8xf32, #tpu.memory_space<vmem>>, vector<1x8xf32>
    %cst_37 = arith.constant dense<0.000000e+00> : vector<128xf32>
    %97 = vector.multi_reduction <add>, %94, %cst_37 [0] : vector<256x128xf32> to vector<128xf32>
    %98 = vector.shape_cast %97 : vector<128xf32> to vector<1x128xf32>
    %99 = arith.mulf %94, %94 : vector<256x128xf32>
    %cst_38 = arith.constant dense<0.000000e+00> : vector<128xf32>
    %100 = vector.multi_reduction <add>, %99, %cst_38 [0] : vector<256x128xf32> to vector<128xf32>
    %101 = vector.shape_cast %100 : vector<128xf32> to vector<1x128xf32>
    %cst_39 = arith.constant dense<0.000000e+00> : vector<1x8xf32>
    %102 = tpu.matmul %98, %58, %cst_39 {dimension_numbers = #tpu.dot_dimension_numbers<[1], [0], [0], [1], [0, 0, 1, 1], [], []>} : vector<1x128xf32>, vector<128x8xf32>, vector<1x8xf32> -> vector<1x8xf32>
    %cst_40 = arith.constant 2.44140625E-4 : f32
    %103 = vector.broadcast %cst_40 : f32 to vector<1x8xf32>
    %104 = arith.mulf %102, %103 : vector<1x8xf32>
    %cst_41 = arith.constant dense<0.000000e+00> : vector<1x8xf32>
    %105 = tpu.matmul %101, %58, %cst_41 {dimension_numbers = #tpu.dot_dimension_numbers<[1], [0], [0], [1], [0, 0, 1, 1], [], []>} : vector<1x128xf32>, vector<128x8xf32>, vector<1x8xf32> -> vector<1x8xf32>
    %cst_42 = arith.constant 2.44140625E-4 : f32
    %106 = vector.broadcast %cst_42 : f32 to vector<1x8xf32>
    %107 = arith.mulf %105, %106 : vector<1x8xf32>
    %108 = arith.mulf %104, %104 : vector<1x8xf32>
    %109 = arith.subf %107, %108 : vector<1x8xf32>
    %cst_43 = arith.constant 9.99999974E-6 : f32
    %110 = vector.broadcast %cst_43 : f32 to vector<1x8xf32>
    %111 = arith.addf %109, %110 : vector<1x8xf32>
    %112 = math.rsqrt %111 : vector<1x8xf32>
    %113 = arith.mulf %95, %112 : vector<1x8xf32>
    %114 = arith.mulf %104, %113 : vector<1x8xf32>
    %115 = arith.subf %96, %114 : vector<1x8xf32>
    %cst_44 = arith.constant dense<0.000000e+00> : vector<1x128xf32>
    %116 = tpu.matmul %113, %79, %cst_44 {dimension_numbers = #tpu.dot_dimension_numbers<[1], [0], [0], [1], [0, 0, 1, 1], [], []>} : vector<1x8xf32>, vector<8x128xf32>, vector<1x128xf32> -> vector<1x128xf32>
    %cst_45 = arith.constant dense<0.000000e+00> : vector<1x128xf32>
    %117 = tpu.matmul %115, %79, %cst_45 {dimension_numbers = #tpu.dot_dimension_numbers<[1], [0], [0], [1], [0, 0, 1, 1], [], []>} : vector<1x8xf32>, vector<8x128xf32>, vector<1x128xf32> -> vector<1x128xf32>
    %118 = vector.broadcast %116 : vector<1x128xf32> to vector<256x128xf32>
    %119 = arith.mulf %94, %118 : vector<256x128xf32>
    %120 = vector.broadcast %117 : vector<1x128xf32> to vector<256x128xf32>
    %121 = arith.addf %119, %120 : vector<256x128xf32>
    %cst_46 = arith.constant 0.000000e+00 : f32
    %122 = vector.broadcast %cst_46 : f32 to vector<256x128xf32>
    %123 = arith.maximumf %121, %122 : vector<256x128xf32>
    %c1_i32_47 = arith.constant 1 : i32
    %124 = tpu.dynamic_rotate %123 by %c1_i32_47 dim 0 : vector<256x128xf32>, i32 -> vector<256x128xf32>
    %cst_48 = arith.constant 0.000000e+00 : f32
    %125 = vector.broadcast %cst_48 : f32 to vector<256x128xf32>
    %126 = arith.select %19, %125, %124 : vector<256x128xi1>, vector<256x128xf32>
    %c255_i32_49 = arith.constant 255 : i32
    %127 = tpu.dynamic_rotate %123 by %c255_i32_49 dim 0 : vector<256x128xf32>, i32 -> vector<256x128xf32>
    %cst_50 = arith.constant 0.000000e+00 : f32
    %128 = vector.broadcast %cst_50 : f32 to vector<256x128xf32>
    %129 = arith.select %37, %128, %127 : vector<256x128xi1>, vector<256x128xf32>
    %130 = arith.truncf %126 : vector<256x128xf32> to vector<256x128xbf16>
    %c0_51 = arith.constant 0 : index
    %c0_52 = arith.constant 0 : index
    %131 = vector.load %arg8[%c0_51, %c0_52] : memref<256x384xbf16, #tpu.memory_space<vmem>>, vector<256x128xbf16>
    tpu.vector_store %arg8[%c0_51, %c0_52], %130 {strides = array<i32>} : memref<256x384xbf16, #tpu.memory_space<vmem>>, vector<256x128xbf16>,
    %132 = arith.truncf %123 : vector<256x128xf32> to vector<256x128xbf16>
    %c0_53 = arith.constant 0 : index
    %c128_54 = arith.constant 128 : index
    %133 = vector.load %arg8[%c0_53, %c128_54] : memref<256x384xbf16, #tpu.memory_space<vmem>>, vector<256x128xbf16>
    tpu.vector_store %arg8[%c0_53, %c128_54], %132 {strides = array<i32>} : memref<256x384xbf16, #tpu.memory_space<vmem>>, vector<256x128xbf16>,
    %134 = arith.truncf %129 : vector<256x128xf32> to vector<256x128xbf16>
    %c0_55 = arith.constant 0 : index
    %c256_56 = arith.constant 256 : index
    %135 = vector.load %arg8[%c0_55, %c256_56] : memref<256x384xbf16, #tpu.memory_space<vmem>>, vector<256x128xbf16>
    tpu.vector_store %arg8[%c0_55, %c256_56], %134 {strides = array<i32>} : memref<256x384xbf16, #tpu.memory_space<vmem>>, vector<256x128xbf16>,
    %c0_57 = arith.constant 0 : index
    %c0_58 = arith.constant 0 : index
    %136 = vector.load %arg8[%c0_57, %c0_58] : memref<256x384xbf16, #tpu.memory_space<vmem>>, vector<256x384xbf16>
    %c0_59 = arith.constant 0 : index
    %c0_60 = arith.constant 0 : index
    %137 = vector.load %arg4[%c0_59, %c0_60] : memref<384x128xbf16, #tpu.memory_space<vmem>>, vector<384x128xbf16>
    %cst_61 = arith.constant dense<0.000000e+00> : vector<256x128xf32>
    %138 = tpu.matmul %136, %137, %cst_61 {dimension_numbers = #tpu.dot_dimension_numbers<[1], [0], [0], [1], [0, 0, 1, 1], [], []>} : vector<256x384xbf16>, vector<384x128xbf16>, vector<256x128xf32> -> vector<256x128xf32>
    %c0_62 = arith.constant 0 : index
    %c0_63 = arith.constant 0 : index
    %139 = vector.load %arg5[%c0_62, %c0_63] : memref<1x8xf32, #tpu.memory_space<vmem>>, vector<1x8xf32>
    %c0_64 = arith.constant 0 : index
    %c0_65 = arith.constant 0 : index
    %140 = vector.load %arg6[%c0_64, %c0_65] : memref<1x8xf32, #tpu.memory_space<vmem>>, vector<1x8xf32>
    %cst_66 = arith.constant dense<0.000000e+00> : vector<128xf32>
    %141 = vector.multi_reduction <add>, %138, %cst_66 [0] : vector<256x128xf32> to vector<128xf32>
    %142 = vector.shape_cast %141 : vector<128xf32> to vector<1x128xf32>
    %143 = arith.mulf %138, %138 : vector<256x128xf32>
    %cst_67 = arith.constant dense<0.000000e+00> : vector<128xf32>
    %144 = vector.multi_reduction <add>, %143, %cst_67 [0] : vector<256x128xf32> to vector<128xf32>
    %145 = vector.shape_cast %144 : vector<128xf32> to vector<1x128xf32>
    %cst_68 = arith.constant dense<0.000000e+00> : vector<1x8xf32>
    %146 = tpu.matmul %142, %58, %cst_68 {dimension_numbers = #tpu.dot_dimension_numbers<[1], [0], [0], [1], [0, 0, 1, 1], [], []>} : vector<1x128xf32>, vector<128x8xf32>, vector<1x8xf32> -> vector<1x8xf32>
    %cst_69 = arith.constant 2.44140625E-4 : f32
    %147 = vector.broadcast %cst_69 : f32 to vector<1x8xf32>
    %148 = arith.mulf %146, %147 : vector<1x8xf32>
    %cst_70 = arith.constant dense<0.000000e+00> : vector<1x8xf32>
    %149 = tpu.matmul %145, %58, %cst_70 {dimension_numbers = #tpu.dot_dimension_numbers<[1], [0], [0], [1], [0, 0, 1, 1], [], []>} : vector<1x128xf32>, vector<128x8xf32>, vector<1x8xf32> -> vector<1x8xf32>
    %cst_71 = arith.constant 2.44140625E-4 : f32
    %150 = vector.broadcast %cst_71 : f32 to vector<1x8xf32>
    %151 = arith.mulf %149, %150 : vector<1x8xf32>
    %152 = arith.mulf %148, %148 : vector<1x8xf32>
    %153 = arith.subf %151, %152 : vector<1x8xf32>
    %cst_72 = arith.constant 9.99999974E-6 : f32
    %154 = vector.broadcast %cst_72 : f32 to vector<1x8xf32>
    %155 = arith.addf %153, %154 : vector<1x8xf32>
    %156 = math.rsqrt %155 : vector<1x8xf32>
    %157 = arith.mulf %139, %156 : vector<1x8xf32>
    %158 = arith.mulf %148, %157 : vector<1x8xf32>
    %159 = arith.subf %140, %158 : vector<1x8xf32>
    %cst_73 = arith.constant dense<0.000000e+00> : vector<1x128xf32>
    %160 = tpu.matmul %157, %79, %cst_73 {dimension_numbers = #tpu.dot_dimension_numbers<[1], [0], [0], [1], [0, 0, 1, 1], [], []>} : vector<1x8xf32>, vector<8x128xf32>, vector<1x128xf32> -> vector<1x128xf32>
    %cst_74 = arith.constant dense<0.000000e+00> : vector<1x128xf32>
    %161 = tpu.matmul %159, %79, %cst_74 {dimension_numbers = #tpu.dot_dimension_numbers<[1], [0], [0], [1], [0, 0, 1, 1], [], []>} : vector<1x8xf32>, vector<8x128xf32>, vector<1x128xf32> -> vector<1x128xf32>
    %162 = vector.broadcast %160 : vector<1x128xf32> to vector<256x128xf32>
    %163 = arith.mulf %138, %162 : vector<256x128xf32>
    %164 = vector.broadcast %161 : vector<1x128xf32> to vector<256x128xf32>
    %165 = arith.addf %163, %164 : vector<256x128xf32>
    %166 = arith.addf %165, %0 : vector<256x128xf32>
    %cst_75 = arith.constant 0.000000e+00 : f32
    %167 = vector.broadcast %cst_75 : f32 to vector<256x128xf32>
    %168 = arith.maximumf %166, %167 : vector<256x128xf32>
    %c0_76 = arith.constant 0 : index
    %c0_77 = arith.constant 0 : index
    %169 = vector.load %arg7[%c0_76, %c0_77] : memref<256x128xf32, #tpu.memory_space<vmem>>, vector<256x128xf32>
    tpu.vector_store %arg7[%c0_76, %c0_77], %168 {strides = array<i32>} : memref<256x128xf32, #tpu.memory_space<vmem>>, vector<256x128xf32>,
    return
  }
}

</mosaic_0001>

<llo_original>
// kernel: basic_block_forward.1
$region0: #{basic_block_forward.1}
  #allocation0 [shape = 'u32[]', space=smem, size = 0x4, offset = 0x4, fixed_abs, tag = 'smem constant byte address 0x4 - core index']
  #allocation1 [shape = 'u32[144,128]{1,0:T(1,128)}', space=vmem, size = 0x12000, scoped, tag = 'internal scratch']
  #allocation2 [shape = 'bf16[256,384]{1,0:T(16,128)(2,1)}', space=vmem, size = 0x30000, scoped, tag = 'scratch operand']
  %s0 = inlined_call_operand.vmem [shape: f32[256,128], index: 0, kind: input, shape index: {}]
  %s1 = inlined_call_operand.vmem [shape: bf16[384,128], index: 1, kind: input, shape index: {}]
  %s2 = inlined_call_operand.vmem [shape: f32[1,8], index: 2, kind: input, shape index: {}]
  %s3 = inlined_call_operand.vmem [shape: f32[1,8], index: 3, kind: input, shape index: {}]
  %s4 = inlined_call_operand.vmem [shape: bf16[384,128], index: 4, kind: input, shape index: {}]
  %s5 = inlined_call_operand.vmem [shape: f32[1,8], index: 5, kind: input, shape index: {}]
  %s6 = inlined_call_operand.vmem [shape: f32[1,8], index: 6, kind: input, shape index: {}]
  %s7 = inlined_call_operand.vmem [shape: f32[256,128], index: 7, kind: output, shape index: {}]
  %s8 = sld [smem:[#allocation0]]
  $region38: #{basic_block_forward.1} parent=0
    _
  %s10 = ssub.s32 1, %s8
  %s11 = scalar_select 0, %s10, %s8
  // Predicated region
  $region2: #{basic_block_forward.1} parent=0 // pred_check
    _
  $region3: #{basic_block_forward.1} parent=0 // pred_check_branch
    %13 = sbr.rel (0) target = $region5
  $region4: #{basic_block_forward.1} parent=0 // pred_region
    _
  $region5: #{basic_block_forward.1} parent=0 // pred_fallthru
    _
  // Predicated region
  $region6: #{basic_block_forward.1} parent=0 // pred_check
    _
  $region7: #{basic_block_forward.1} parent=0 // pred_check_branch
    %15 = sbr.rel (0) target = $region9
  $region8: #{basic_block_forward.1} parent=0 // pred_region
    _
  $region9: #{basic_block_forward.1} parent=0 // pred_fallthru
    _
  // Predicated region
  $region10: #{basic_block_forward.1} parent=0 // pred_check
    _
  $region11: #{basic_block_forward.1} parent=0 // pred_check_branch
    %17 = sbr.rel (0) target = $region13
  $region12: #{basic_block_forward.1} parent=0 // pred_region
    _
  $region13: #{basic_block_forward.1} parent=0 // pred_fallthru
    _
  // Predicated region
  $region14: #{basic_block_forward.1} parent=0 // pred_check
    _
  $region15: #{basic_block_forward.1} parent=0 // pred_check_branch
    %19 = sbr.rel (0) target = $region17
  $region16: #{basic_block_forward.1} parent=0 // pred_region
    _
  $region17: #{basic_block_forward.1} parent=0 // pred_fallthru
    _
  // Predicated region
  $region18: #{basic_block_forward.1} parent=0 // pred_check
    _
  $region19: #{basic_block_forward.1} parent=0 // pred_check_branch
    %21 = sbr.rel (0) target = $region21
  $region20: #{basic_block_forward.1} parent=0 // pred_region
    _
  $region21: #{basic_block_forward.1} parent=0 // pred_fallthru
    _
  // Predicated region
  $region22: #{basic_block_forward.1} parent=0 // pred_check
    _
  $region23: #{basic_block_forward.1} parent=0 // pred_check_branch
    %23 = sbr.rel (0) target = $region25
  $region24: #{basic_block_forward.1} parent=0 // pred_region
    _
  $region25: #{basic_block_forward.1} parent=0 // pred_fallthru
    _
  // Predicated region
  $region26: #{basic_block_forward.1} parent=0 // pred_check
    _
  $region27: #{basic_block_forward.1} parent=0 // pred_check_branch
    %25 = sbr.rel (0) target = $region29
  $region28: #{basic_block_forward.1} parent=0 // pred_region
    _
  $region29: #{basic_block_forward.1} parent=0 // pred_fallthru
    _
  %v27 = vld [vmem:[%s0] sm:$0xff]
  %v28 = vld [vmem:[%s0 + $0x8] sm:$0xff]
  %v29 = vld [vmem:[%s0 + $0x10] sm:$0xff]
  %v30 = vld [vmem:[%s0 + $0x18] sm:$0xff]
  %v31 = vld [vmem:[%s0 + $0x20] sm:$0xff]
  %v32 = vld [vmem:[%s0 + $0x28] sm:$0xff]
  %v33 = vld [vmem:[%s0 + $0x30] sm:$0xff]
  %v34 = vld [vmem:[%s0 + $0x38] sm:$0xff]
  %v35 = vld [vmem:[%s0 + $0x40] sm:$0xff]
  %v36 = vld [vmem:[%s0 + $0x48] sm:$0xff]
  %v37 = vld [vmem:[%s0 + $0x50] sm:$0xff]
  %v38 = vld [vmem:[%s0 + $0x58] sm:$0xff]
  %v39 = vld [vmem:[%s0 + $0x60] sm:$0xff]
  %v40 = vld [vmem:[%s0 + $0x68] sm:$0xff]
  %v41 = vld [vmem:[%s0 + $0x70] sm:$0xff]
  %v42 = vld [vmem:[%s0 + $0x78] sm:$0xff]
  %v43 = vld [vmem:[%s0 + $0x80] sm:$0xff]
  %v44 = vld [vmem:[%s0 + $0x88] sm:$0xff]
  %v45 = vld [vmem:[%s0 + $0x90] sm:$0xff]
  %v46 = vld [vmem:[%s0 + $0x98] sm:$0xff]
  %v47 = vld [vmem:[%s0 + $0xa0] sm:$0xff]
  %v48 = vld [vmem:[%s0 + $0xa8] sm:$0xff]
  %v49 = vld [vmem:[%s0 + $0xb0] sm:$0xff]
  %v50 = vld [vmem:[%s0 + $0xb8] sm:$0xff]
  %v51 = vld [vmem:[%s0 + $0xc0] sm:$0xff]
  %v52 = vld [vmem:[%s0 + $0xc8] sm:$0xff]
  %v53 = vld [vmem:[%s0 + $0xd0] sm:$0xff]
  %v54 = vld [vmem:[%s0 + $0xd8] sm:$0xff]
  %v55 = vld [vmem:[%s0 + $0xe0] sm:$0xff]
  %v56 = vld [vmem:[%s0 + $0xe8] sm:$0xff]
  %v57 = vld [vmem:[%s0 + $0xf0] sm:$0xff]
  %v58 = vld [vmem:[%s0 + $0xf8] sm:$0xff]
  %v59 = vlaneseq
  %v60 = vshrl.u32 %v59, 7
  %v61 = vadd.s32 %v60, 8
  %v62 = vadd.s32 %v60, 16
  %v63 = vadd.s32 %v60, 24
  %v64 = vadd.s32 %v60, 32
  %v65 = vadd.s32 %v60, 40
  %v66 = vadd.s32 %v60, 48
  %v67 = vadd.s32 %v60, 56
  %v68 = vadd.s32 %v60, 64
  %v69 = vadd.s32 %v60, 72
  %v70 = vadd.s32 %v60, 80
  %v71 = vadd.s32 %v60, 88
  %v72 = vadd.s32 %v60, 96
  %v73 = vadd.s32 %v60, 104
  %v74 = vadd.s32 %v60, 112
  %v75 = vadd.s32 %v60, 120
  %v76 = vadd.s32 %v60, 128
  %v77 = vadd.s32 %v60, 136
  %v78 = vadd.s32 %v60, 144
  %v79 = vadd.s32 %v60, 152
  %v80 = vadd.s32 %v60, 160
  %v81 = vadd.s32 %v60, 168
  %v82 = vadd.s32 %v60, 176
  %v83 = vadd.s32 %v60, 184
  %v84 = vadd.s32 %v60, 192
  %v85 = vadd.s32 %v60, 200
  %v86 = vadd.s32 %v60, 208
  %v87 = vadd.s32 %v60, 216
  %v88 = vadd.s32 %v60, 224
  %v89 = vadd.s32 %v60, 232
  %v90 = vadd.s32 %v60, 240
  %v91 = vadd.s32 %v60, 248
  %vm92 = vcmp.lt.s32.totalorder %v60, 0
  %v93 = vsub.s32 0, %v60
  %v94 = vsel %vm92, %v93, %v60
  %v95 = vshrl.u32 %v94, 4
  %v96 = vand.u32 %v94, 15
  %v97 = vsub.s32 0, %v96
  %v98 = vsel %vm92, %v97, %v96
  %vm99 = vcmp.lt.s32.totalorder %v61, 0
  %v100 = vsub.s32 0, %v61
  %v101 = vsel %vm99, %v100, %v61
  %v102 = vshrl.u32 %v101, 4
  %v103 = vand.u32 %v101, 15
  %v104 = vsub.s32 0, %v103
  %v105 = vsel %vm99, %v104, %v103
  %vm106 = vcmp.lt.s32.totalorder %v62, 0
  %v107 = vsub.s32 0, %v62
  %v108 = vsel %vm106, %v107, %v62
  %v109 = vshrl.u32 %v108, 4
  %v110 = vand.u32 %v108, 15
  %v111 = vsub.s32 0, %v110
  %v112 = vsel %vm106, %v111, %v110
  %vm113 = vcmp.lt.s32.totalorder %v63, 0
  %v114 = vsub.s32 0, %v63
  %v115 = vsel %vm113, %v114, %v63
  %v116 = vshrl.u32 %v115, 4
  %v117 = vand.u32 %v115, 15
  %v118 = vsub.s32 0, %v117
  %v119 = vsel %vm113, %v118, %v117
  %vm120 = vcmp.lt.s32.totalorder %v64, 0
  %v121 = vsub.s32 0, %v64
  %v122 = vsel %vm120, %v121, %v64
  %v123 = vshrl.u32 %v122, 4
  %v124 = vand.u32 %v122, 15
  %v125 = vsub.s32 0, %v124
  %v126 = vsel %vm120, %v125, %v124
  %vm127 = vcmp.lt.s32.totalorder %v65, 0
  %v128 = vsub.s32 0, %v65
  %v129 = vsel %vm127, %v128, %v65
  %v130 = vshrl.u32 %v129, 4
  %v131 = vand.u32 %v129, 15
  %v132 = vsub.s32 0, %v131
  %v133 = vsel %vm127, %v132, %v131
  %vm134 = vcmp.lt.s32.totalorder %v66, 0
  %v135 = vsub.s32 0, %v66
  %v136 = vsel %vm134, %v135, %v66
  %v137 = vshrl.u32 %v136, 4
  %v138 = vand.u32 %v136, 15
  %v139 = vsub.s32 0, %v138
  %v140 = vsel %vm134, %v139, %v138
  %vm141 = vcmp.lt.s32.totalorder %v67, 0
  %v142 = vsub.s32 0, %v67
  %v143 = vsel %vm141, %v142, %v67
  %v144 = vshrl.u32 %v143, 4
  %v145 = vand.u32 %v143, 15
  %v146 = vsub.s32 0, %v145
  %v147 = vsel %vm141, %v146, %v145
  %vm148 = vcmp.lt.s32.totalorder %v68, 0
  %v149 = vsub.s32 0, %v68
  %v150 = vsel %vm148, %v149, %v68
  %v151 = vshrl.u32 %v150, 4
  %v152 = vand.u32 %v150, 15
  %v153 = vsub.s32 0, %v152
  %v154 = vsel %vm148, %v153, %v152
  %vm155 = vcmp.lt.s32.totalorder %v69, 0
  %v156 = vsub.s32 0, %v69
  %v157 = vsel %vm155, %v156, %v69
  %v158 = vshrl.u32 %v157, 4
  %v159 = vand.u32 %v157, 15
  %v160 = vsub.s32 0, %v159
  %v161 = vsel %vm155, %v160, %v159
  %vm162 = vcmp.lt.s32.totalorder %v70, 0
  %v163 = vsub.s32 0, %v70
  %v164 = vsel %vm162, %v163, %v70
  %v165 = vshrl.u32 %v164, 4
  %v166 = vand.u32 %v164, 15
  %v167 = vsub.s32 0, %v166
  %v168 = vsel %vm162, %v167, %v166
  %vm169 = vcmp.lt.s32.totalorder %v71, 0
  %v170 = vsub.s32 0, %v71
  %v171 = vsel %vm169, %v170, %v71
  %v172 = vshrl.u32 %v171, 4
  %v173 = vand.u32 %v171, 15
  %v174 = vsub.s32 0, %v173
  %v175 = vsel %vm169, %v174, %v173
  %vm176 = vcmp.lt.s32.totalorder %v72, 0
  %v177 = vsub.s32 0, %v72
  %v178 = vsel %vm176, %v177, %v72
  %v179 = vshrl.u32 %v178, 4
  %v180 = vand.u32 %v178, 15
  %v181 = vsub.s32 0, %v180
  %v182 = vsel %vm176, %v181, %v180
  %vm183 = vcmp.lt.s32.totalorder %v73, 0
  %v184 = vsub.s32 0, %v73
  %v185 = vsel %vm183, %v184, %v73
  %v186 = vshrl.u32 %v185, 4
  %v187 = vand.u32 %v185, 15
  %v188 = vsub.s32 0, %v187
  %v189 = vsel %vm183, %v188, %v187
  %vm190 = vcmp.lt.s32.totalorder %v74, 0
  %v191 = vsub.s32 0, %v74
  %v192 = vsel %vm190, %v191, %v74
  %v193 = vshrl.u32 %v192, 4
  %v194 = vand.u32 %v192, 15
  %v195 = vsub.s32 0, %v194
  %v196 = vsel %vm190, %v195, %v194
  %vm197 = vcmp.lt.s32.totalorder %v75, 0
  %v198 = vsub.s32 0, %v75
  %v199 = vsel %vm197, %v198, %v75
  %v200 = vshrl.u32 %v199, 4
  %v201 = vand.u32 %v199, 15
  %v202 = vsub.s32 0, %v201
  %v203 = vsel %vm197, %v202, %v201
  %vm204 = vcmp.lt.s32.totalorder %v76, 0
  %v205 = vsub.s32 0, %v76
  %v206 = vsel %vm204, %v205, %v76
  %v207 = vshrl.u32 %v206, 4
  %v208 = vand.u32 %v206, 15
  %v209 = vsub.s32 0, %v208
  %v210 = vsel %vm204, %v209, %v208
  %vm211 = vcmp.lt.s32.totalorder %v77, 0
  %v212 = vsub.s32 0, %v77
  %v213 = vsel %vm211, %v212, %v77
  %v214 = vshrl.u32 %v213, 4
  %v215 = vand.u32 %v213, 15
  %v216 = vsub.s32 0, %v215
  %v217 = vsel %vm211, %v216, %v215
  %vm218 = vcmp.lt.s32.totalorder %v78, 0
  %v219 = vsub.s32 0, %v78
  %v220 = vsel %vm218, %v219, %v78
  %v221 = vshrl.u32 %v220, 4
  %v222 = vand.u32 %v220, 15
  %v223 = vsub.s32 0, %v222
  %v224 = vsel %vm218, %v223, %v222
  %vm225 = vcmp.lt.s32.totalorder %v79, 0
  %v226 = vsub.s32 0, %v79
  %v227 = vsel %vm225, %v226, %v79
  %v228 = vshrl.u32 %v227, 4
  %v229 = vand.u32 %v227, 15
  %v230 = vsub.s32 0, %v229
  %v231 = vsel %vm225, %v230, %v229
  %vm232 = vcmp.lt.s32.totalorder %v80, 0
  %v233 = vsub.s32 0, %v80
  %v234 = vsel %vm232, %v233, %v80
  %v235 = vshrl.u32 %v234, 4
  %v236 = vand.u32 %v234, 15
  %v237 = vsub.s32 0, %v236
  %v238 = vsel %vm232, %v237, %v236
  %vm239 = vcmp.lt.s32.totalorder %v81, 0
  %v240 = vsub.s32 0, %v81
  %v241 = vsel %vm239, %v240, %v81
  %v242 = vshrl.u32 %v241, 4
  %v243 = vand.u32 %v241, 15
  %v244 = vsub.s32 0, %v243
  %v245 = vsel %vm239, %v244, %v243
  %vm246 = vcmp.lt.s32.totalorder %v82, 0
  %v247 = vsub.s32 0, %v82
  %v248 = vsel %vm246, %v247, %v82
  %v249 = vshrl.u32 %v248, 4
  %v250 = vand.u32 %v248, 15
  %v251 = vsub.s32 0, %v250
  %v252 = vsel %vm246, %v251, %v250
  %vm253 = vcmp.lt.s32.totalorder %v83, 0
  %v254 = vsub.s32 0, %v83
  %v255 = vsel %vm253, %v254, %v83
  %v256 = vshrl.u32 %v255, 4
  %v257 = vand.u32 %v255, 15
  %v258 = vsub.s32 0, %v257
  %v259 = vsel %vm253, %v258, %v257
  %vm260 = vcmp.lt.s32.totalorder %v84, 0
  %v261 = vsub.s32 0, %v84
  %v262 = vsel %vm260, %v261, %v84
  %v263 = vshrl.u32 %v262, 4
  %v264 = vand.u32 %v262, 15
  %v265 = vsub.s32 0, %v264
  %v266 = vsel %vm260, %v265, %v264
  %vm267 = vcmp.lt.s32.totalorder %v85, 0
  %v268 = vsub.s32 0, %v85
  %v269 = vsel %vm267, %v268, %v85
  %v270 = vshrl.u32 %v269, 4
  %v271 = vand.u32 %v269, 15
  %v272 = vsub.s32 0, %v271
  %v273 = vsel %vm267, %v272, %v271
  %vm274 = vcmp.lt.s32.totalorder %v86, 0
  %v275 = vsub.s32 0, %v86
  %v276 = vsel %vm274, %v275, %v86
  %v277 = vshrl.u32 %v276, 4
  %v278 = vand.u32 %v276, 15
  %v279 = vsub.s32 0, %v278
  %v280 = vsel %vm274, %v279, %v278
  %vm281 = vcmp.lt.s32.totalorder %v87, 0
  %v282 = vsub.s32 0, %v87
  %v283 = vsel %vm281, %v282, %v87
  %v284 = vshrl.u32 %v283, 4
  %v285 = vand.u32 %v283, 15
  %v286 = vsub.s32 0, %v285
  %v287 = vsel %vm281, %v286, %v285
  %vm288 = vcmp.lt.s32.totalorder %v88, 0
  %v289 = vsub.s32 0, %v88
  %v290 = vsel %vm288, %v289, %v88
  %v291 = vshrl.u32 %v290, 4
  %v292 = vand.u32 %v290, 15
  %v293 = vsub.s32 0, %v292
  %v294 = vsel %vm288, %v293, %v292
  %vm295 = vcmp.lt.s32.totalorder %v89, 0
  %v296 = vsub.s32 0, %v89
  %v297 = vsel %vm295, %v296, %v89
  %v298 = vshrl.u32 %v297, 4
  %v299 = vand.u32 %v297, 15
  %v300 = vsub.s32 0, %v299
  %v301 = vsel %vm295, %v300, %v299
  %vm302 = vcmp.lt.s32.totalorder %v90, 0
  %v303 = vsub.s32 0, %v90
  %v304 = vsel %vm302, %v303, %v90
  %v305 = vshrl.u32 %v304, 4
  %v306 = vand.u32 %v304, 15
  %v307 = vsub.s32 0, %v306
  %v308 = vsel %vm302, %v307, %v306
  %vm309 = vcmp.lt.s32.totalorder %v91, 0
  %v310 = vsub.s32 0, %v91
  %v311 = vsel %vm309, %v310, %v91
  %v312 = vshrl.u32 %v311, 4
  %v313 = vand.u32 %v311, 15
  %v314 = vsub.s32 0, %v313
  %v315 = vsel %vm309, %v314, %v313
  %vm316 = vcmp.ne.s32.totalorder %v98, 0
  %vm317 = vcmp.ne.s32.totalorder %v105, 0
  %vm318 = vcmp.ne.s32.totalorder %v112, 0
  %vm319 = vcmp.ne.s32.totalorder %v119, 0
  %vm320 = vcmp.ne.s32.totalorder %v126, 0
  %vm321 = vcmp.ne.s32.totalorder %v133, 0
  %vm322 = vcmp.ne.s32.totalorder %v140, 0
  %vm323 = vcmp.ne.s32.totalorder %v147, 0
  %vm324 = vcmp.ne.s32.totalorder %v154, 0
  %vm325 = vcmp.ne.s32.totalorder %v161, 0
  %vm326 = vcmp.ne.s32.totalorder %v168, 0
  %vm327 = vcmp.ne.s32.totalorder %v175, 0
  %vm328 = vcmp.ne.s32.totalorder %v182, 0
  %vm329 = vcmp.ne.s32.totalorder %v189, 0
  %vm330 = vcmp.ne.s32.totalorder %v196, 0
  %vm331 = vcmp.ne.s32.totalorder %v203, 0
  %vm332 = vcmp.ne.s32.totalorder %v210, 0
  %vm333 = vcmp.ne.s32.totalorder %v217, 0
  %vm334 = vcmp.ne.s32.totalorder %v224, 0
  %vm335 = vcmp.ne.s32.totalorder %v231, 0
  %vm336 = vcmp.ne.s32.totalorder %v238, 0
  %vm337 = vcmp.ne.s32.totalorder %v245, 0
  %vm338 = vcmp.ne.s32.totalorder %v252, 0
  %vm339 = vcmp.ne.s32.totalorder %v259, 0
  %vm340 = vcmp.ne.s32.totalorder %v266, 0
  %vm341 = vcmp.ne.s32.totalorder %v273, 0
  %vm342 = vcmp.ne.s32.totalorder %v280, 0
  %vm343 = vcmp.ne.s32.totalorder %v287, 0
  %vm344 = vcmp.ne.s32.totalorder %v294, 0
  %vm345 = vcmp.ne.s32.totalorder %v301, 0
  %vm346 = vcmp.ne.s32.totalorder %v308, 0
  %vm347 = vcmp.ne.s32.totalorder %v315, 0
  %vm348 = vcmp.lt.s32.totalorder %v98, 0
  %vm349 = vcmp.lt.s32.totalorder %v105, 0
  %vm350 = vcmp.lt.s32.totalorder %v112, 0
  %vm351 = vcmp.lt.s32.totalorder %v119, 0
  %vm352 = vcmp.lt.s32.totalorder %v126, 0
  %vm353 = vcmp.lt.s32.totalorder %v133, 0
  %vm354 = vcmp.lt.s32.totalorder %v140, 0
  %vm355 = vcmp.lt.s32.totalorder %v147, 0
  %vm356 = vcmp.lt.s32.totalorder %v154, 0
  %vm357 = vcmp.lt.s32.totalorder %v161, 0
  %vm358 = vcmp.lt.s32.totalorder %v168, 0
  %vm359 = vcmp.lt.s32.totalorder %v175, 0
  %vm360 = vcmp.lt.s32.totalorder %v182, 0
  %vm361 = vcmp.lt.s32.totalorder %v189, 0
  %vm362 = vcmp.lt.s32.totalorder %v196, 0
  %vm363 = vcmp.lt.s32.totalorder %v203, 0
  %vm364 = vcmp.lt.s32.totalorder %v210, 0
  %vm365 = vcmp.lt.s32.totalorder %v217, 0
  %vm366 = vcmp.lt.s32.totalorder %v224, 0
  %vm367 = vcmp.lt.s32.totalorder %v231, 0
  %vm368 = vcmp.lt.s32.totalorder %v238, 0
  %vm369 = vcmp.lt.s32.totalorder %v245, 0
  %vm370 = vcmp.lt.s32.totalorder %v252, 0
  %vm371 = vcmp.lt.s32.totalorder %v259, 0
  %vm372 = vcmp.lt.s32.totalorder %v266, 0
  %vm373 = vcmp.lt.s32.totalorder %v273, 0
  %vm374 = vcmp.lt.s32.totalorder %v280, 0
  %vm375 = vcmp.lt.s32.totalorder %v287, 0
  %vm376 = vcmp.lt.s32.totalorder %v294, 0
  %vm377 = vcmp.lt.s32.totalorder %v301, 0
  %vm378 = vcmp.lt.s32.totalorder %v308, 0
  %vm379 = vcmp.lt.s32.totalorder %v315, 0
  %vm380 = vmand %vm348, %vm316
  %vm381 = vmand %vm349, %vm317
  %vm382 = vmand %vm350, %vm318
  %vm383 = vmand %vm351, %vm319
  %vm384 = vmand %vm352, %vm320
  %vm385 = vmand %vm353, %vm321
  %vm386 = vmand %vm354, %vm322
  %vm387 = vmand %vm355, %vm323
  %vm388 = vmand %vm356, %vm324
  %vm389 = vmand %vm357, %vm325
  %vm390 = vmand %vm358, %vm326
  %vm391 = vmand %vm359, %vm327
  %vm392 = vmand %vm360, %vm328
  %vm393 = vmand %vm361, %vm329
  %vm394 = vmand %vm362, %vm330
  %vm395 = vmand %vm363, %vm331
  %vm396 = vmand %vm364, %vm332
  %vm397 = vmand %vm365, %vm333
  %vm398 = vmand %vm366, %vm334
  %vm399 = vmand %vm367, %vm335
  %vm400 = vmand %vm368, %vm336
  %vm401 = vmand %vm369, %vm337
  %vm402 = vmand %vm370, %vm338
  %vm403 = vmand %vm371, %vm339
  %vm404 = vmand %vm372, %vm340
  %vm405 = vmand %vm373, %vm341
  %vm406 = vmand %vm374, %vm342
  %vm407 = vmand %vm375, %vm343
  %vm408 = vmand %vm376, %vm344
  %vm409 = vmand %vm377, %vm345
  %vm410 = vmand %vm378, %vm346
  %vm411 = vmand %vm379, %vm347
  %v412 = vadd.s32 %v98, 16
  %v413 = vadd.s32 %v105, 16
  %v414 = vadd.s32 %v112, 16
  %v415 = vadd.s32 %v119, 16
  %v416 = vadd.s32 %v126, 16
  %v417 = vadd.s32 %v133, 16
  %v418 = vadd.s32 %v140, 16
  %v419 = vadd.s32 %v147, 16
  %v420 = vadd.s32 %v154, 16
  %v421 = vadd.s32 %v161, 16
  %v422 = vadd.s32 %v168, 16
  %v423 = vadd.s32 %v175, 16
  %v424 = vadd.s32 %v182, 16
  %v425 = vadd.s32 %v189, 16
  %v426 = vadd.s32 %v196, 16
  %v427 = vadd.s32 %v203, 16
  %v428 = vadd.s32 %v210, 16
  %v429 = vadd.s32 %v217, 16
  %v430 = vadd.s32 %v224, 16
  %v431 = vadd.s32 %v231, 16
  %v432 = vadd.s32 %v238, 16
  %v433 = vadd.s32 %v245, 16
  %v434 = vadd.s32 %v252, 16
  %v435 = vadd.s32 %v259, 16
  %v436 = vadd.s32 %v266, 16
  %v437 = vadd.s32 %v273, 16
  %v438 = vadd.s32 %v280, 16
  %v439 = vadd.s32 %v287, 16
  %v440 = vadd.s32 %v294, 16
  %v441 = vadd.s32 %v301, 16
  %v442 = vadd.s32 %v308, 16
  %v443 = vadd.s32 %v315, 16
  %v444 = vsel %vm380, %v412, %v98
  %v445 = vsel %vm381, %v413, %v105
  %v446 = vsel %vm382, %v414, %v112
  %v447 = vsel %vm383, %v415, %v119
  %v448 = vsel %vm384, %v416, %v126
  %v449 = vsel %vm385, %v417, %v133
  %v450 = vsel %vm386, %v418, %v140
  %v451 = vsel %vm387, %v419, %v147
  %v452 = vsel %vm388, %v420, %v154
  %v453 = vsel %vm389, %v421, %v161
  %v454 = vsel %vm390, %v422, %v168
  %v455 = vsel %vm391, %v423, %v175
  %v456 = vsel %vm392, %v424, %v182
  %v457 = vsel %vm393, %v425, %v189
  %v458 = vsel %vm394, %v426, %v196
  %v459 = vsel %vm395, %v427, %v203
  %v460 = vsel %vm396, %v428, %v210
  %v461 = vsel %vm397, %v429, %v217
  %v462 = vsel %vm398, %v430, %v224
  %v463 = vsel %vm399, %v431, %v231
  %v464 = vsel %vm400, %v432, %v238
  %v465 = vsel %vm401, %v433, %v245
  %v466 = vsel %vm402, %v434, %v252
  %v467 = vsel %vm403, %v435, %v259
  %v468 = vsel %vm404, %v436, %v266
  %v469 = vsel %vm405, %v437, %v273
  %v470 = vsel %vm406, %v438, %v280
  %v471 = vsel %vm407, %v439, %v287
  %v472 = vsel %vm408, %v440, %v294
  %v473 = vsel %vm409, %v441, %v301
  %v474 = vsel %vm410, %v442, %v308
  %v475 = vsel %vm411, %v443, %v315
  %vm476 = vcmp.eq.s32.totalorder %v444, 0
  %vm477 = vcmp.eq.s32.totalorder %v445, 0
  %vm478 = vcmp.eq.s32.totalorder %v446, 0
  %vm479 = vcmp.eq.s32.totalorder %v447, 0
  %vm480 = vcmp.eq.s32.totalorder %v448, 0
  %vm481 = vcmp.eq.s32.totalorder %v449, 0
  %vm482 = vcmp.eq.s32.totalorder %v450, 0
  %vm483 = vcmp.eq.s32.totalorder %v451, 0
  %vm484 = vcmp.eq.s32.totalorder %v452, 0
  %vm485 = vcmp.eq.s32.totalorder %v453, 0
  %vm486 = vcmp.eq.s32.totalorder %v454, 0
  %vm487 = vcmp.eq.s32.totalorder %v455, 0
  %vm488 = vcmp.eq.s32.totalorder %v456, 0
  %vm489 = vcmp.eq.s32.totalorder %v457, 0
  %vm490 = vcmp.eq.s32.totalorder %v458, 0
  %vm491 = vcmp.eq.s32.totalorder %v459, 0
  %vm492 = vcmp.eq.s32.totalorder %v460, 0
  %vm493 = vcmp.eq.s32.totalorder %v461, 0
  %vm494 = vcmp.eq.s32.totalorder %v462, 0
  %vm495 = vcmp.eq.s32.totalorder %v463, 0
  %vm496 = vcmp.eq.s32.totalorder %v464, 0
  %vm497 = vcmp.eq.s32.totalorder %v465, 0
  %vm498 = vcmp.eq.s32.totalorder %v466, 0
  %vm499 = vcmp.eq.s32.totalorder %v467, 0
  %vm500 = vcmp.eq.s32.totalorder %v468, 0
  %vm501 = vcmp.eq.s32.totalorder %v469, 0
  %vm502 = vcmp.eq.s32.totalorder %v470, 0
  %vm503 = vcmp.eq.s32.totalorder %v471, 0
  %vm504 = vcmp.eq.s32.totalorder %v472, 0
  %vm505 = vcmp.eq.s32.totalorder %v473, 0
  %vm506 = vcmp.eq.s32.totalorder %v474, 0
  %vm507 = vcmp.eq.s32.totalorder %v475, 0
  %vm508 = vcmp.eq.s32.totalorder %v444, 15
  %vm509 = vcmp.eq.s32.totalorder %v445, 15
  %vm510 = vcmp.eq.s32.totalorder %v446, 15
  %vm511 = vcmp.eq.s32.totalorder %v447, 15
  %vm512 = vcmp.eq.s32.totalorder %v448, 15
  %vm513 = vcmp.eq.s32.totalorder %v449, 15
  %vm514 = vcmp.eq.s32.totalorder %v450, 15
  %vm515 = vcmp.eq.s32.totalorder %v451, 15
  %vm516 = vcmp.eq.s32.totalorder %v452, 15
  %vm517 = vcmp.eq.s32.totalorder %v453, 15
  %vm518 = vcmp.eq.s32.totalorder %v454, 15
  %vm519 = vcmp.eq.s32.totalorder %v455, 15
  %vm520 = vcmp.eq.s32.totalorder %v456, 15
  %vm521 = vcmp.eq.s32.totalorder %v457, 15
  %vm522 = vcmp.eq.s32.totalorder %v458, 15
  %vm523 = vcmp.eq.s32.totalorder %v459, 15
  %vm524 = vcmp.eq.s32.totalorder %v460, 15
  %vm525 = vcmp.eq.s32.totalorder %v461, 15
  %vm526 = vcmp.eq.s32.totalorder %v462, 15
  %vm527 = vcmp.eq.s32.totalorder %v463, 15
  %vm528 = vcmp.eq.s32.totalorder %v464, 15
  %vm529 = vcmp.eq.s32.totalorder %v465, 15
  %vm530 = vcmp.eq.s32.totalorder %v466, 15
  %vm531 = vcmp.eq.s32.totalorder %v467, 15
  %vm532 = vcmp.eq.s32.totalorder %v468, 15
  %vm533 = vcmp.eq.s32.totalorder %v469, 15
  %vm534 = vcmp.eq.s32.totalorder %v470, 15
  %vm535 = vcmp.eq.s32.totalorder %v471, 15
  %vm536 = vcmp.eq.s32.totalorder %v472, 15
  %vm537 = vcmp.eq.s32.totalorder %v473, 15
  %vm538 = vcmp.eq.s32.totalorder %v474, 15
  %vm539 = vcmp.eq.s32.totalorder %v475, 15
  %v540 = vlaneseq
  %v541 = vand.u32 %v540, 127
  %vm542 = vcmp.lt.s32.totalorder %v60, 0
  %v543 = vsub.s32 0, %v60
  %v544 = vsel %vm542, %v543, %v60
  %v545 = vshrl.u32 %v544, 3
  %v546 = vand.u32 %v544, 7
  %v547 = vsub.s32 0, %v546
  %v548 = vsel %vm542, %v547, %v546
  %vm549 = vcmp.lt.s32.totalorder %v61, 0
  %v550 = vsub.s32 0, %v61
  %v551 = vsel %vm549, %v550, %v61
  %v552 = vshrl.u32 %v551, 3
  %v553 = vand.u32 %v551, 7
  %v554 = vsub.s32 0, %v553
  %v555 = vsel %vm549, %v554, %v553
  %vm556 = vcmp.lt.s32.totalorder %v62, 0
  %v557 = vsub.s32 0, %v62
  %v558 = vsel %vm556, %v557, %v62
  %v559 = vshrl.u32 %v558, 3
  %v560 = vand.u32 %v558, 7
  %v561 = vsub.s32 0, %v560
  %v562 = vsel %vm556, %v561, %v560
  %vm563 = vcmp.lt.s32.totalorder %v63, 0
  %v564 = vsub.s32 0, %v63
  %v565 = vsel %vm563, %v564, %v63
  %v566 = vshrl.u32 %v565, 3
  %v567 = vand.u32 %v565, 7
  %v568 = vsub.s32 0, %v567
  %v569 = vsel %vm563, %v568, %v567
  %vm570 = vcmp.lt.s32.totalorder %v64, 0
  %v571 = vsub.s32 0, %v64
  %v572 = vsel %vm570, %v571, %v64
  %v573 = vshrl.u32 %v572, 3
  %v574 = vand.u32 %v572, 7
  %v575 = vsub.s32 0, %v574
  %v576 = vsel %vm570, %v575, %v574
  %vm577 = vcmp.lt.s32.totalorder %v65, 0
  %v578 = vsub.s32 0, %v65
  %v579 = vsel %vm577, %v578, %v65
  %v580 = vshrl.u32 %v579, 3
  %v581 = vand.u32 %v579, 7
  %v582 = vsub.s32 0, %v581
  %v583 = vsel %vm577, %v582, %v581
  %vm584 = vcmp.lt.s32.totalorder %v66, 0
  %v585 = vsub.s32 0, %v66
  %v586 = vsel %vm584, %v585, %v66
  %v587 = vshrl.u32 %v586, 3
  %v588 = vand.u32 %v586, 7
  %v589 = vsub.s32 0, %v588
  %v590 = vsel %vm584, %v589, %v588
  %vm591 = vcmp.lt.s32.totalorder %v67, 0
  %v592 = vsub.s32 0, %v67
  %v593 = vsel %vm591, %v592, %v67
  %v594 = vshrl.u32 %v593, 3
  %v595 = vand.u32 %v593, 7
  %v596 = vsub.s32 0, %v595
  %v597 = vsel %vm591, %v596, %v595
  %vm598 = vcmp.lt.s32.totalorder %v68, 0
  %v599 = vsub.s32 0, %v68
  %v600 = vsel %vm598, %v599, %v68
  %v601 = vshrl.u32 %v600, 3
  %v602 = vand.u32 %v600, 7
  %v603 = vsub.s32 0, %v602
  %v604 = vsel %vm598, %v603, %v602
  %vm605 = vcmp.lt.s32.totalorder %v69, 0
  %v606 = vsub.s32 0, %v69
  %v607 = vsel %vm605, %v606, %v69
  %v608 = vshrl.u32 %v607, 3
  %v609 = vand.u32 %v607, 7
  %v610 = vsub.s32 0, %v609
  %v611 = vsel %vm605, %v610, %v609
  %vm612 = vcmp.lt.s32.totalorder %v70, 0
  %v613 = vsub.s32 0, %v70
  %v614 = vsel %vm612, %v613, %v70
  %v615 = vshrl.u32 %v614, 3
  %v616 = vand.u32 %v614, 7
  %v617 = vsub.s32 0, %v616
  %v618 = vsel %vm612, %v617, %v616
  %vm619 = vcmp.lt.s32.totalorder %v71, 0
  %v620 = vsub.s32 0, %v71
  %v621 = vsel %vm619, %v620, %v71
  %v622 = vshrl.u32 %v621, 3
  %v623 = vand.u32 %v621, 7
  %v624 = vsub.s32 0, %v623
  %v625 = vsel %vm619, %v624, %v623
  %vm626 = vcmp.lt.s32.totalorder %v72, 0
  %v627 = vsub.s32 0, %v72
  %v628 = vsel %vm626, %v627, %v72
  %v629 = vshrl.u32 %v628, 3
  %v630 = vand.u32 %v628, 7
  %v631 = vsub.s32 0, %v630
  %v632 = vsel %vm626, %v631, %v630
  %vm633 = vcmp.lt.s32.totalorder %v73, 0
  %v634 = vsub.s32 0, %v73
  %v635 = vsel %vm633, %v634, %v73
  %v636 = vshrl.u32 %v635, 3
  %v637 = vand.u32 %v635, 7
  %v638 = vsub.s32 0, %v637
  %v639 = vsel %vm633, %v638, %v637
  %vm640 = vcmp.lt.s32.totalorder %v74, 0
  %v641 = vsub.s32 0, %v74
  %v642 = vsel %vm640, %v641, %v74
  %v643 = vshrl.u32 %v642, 3
  %v644 = vand.u32 %v642, 7
  %v645 = vsub.s32 0, %v644
  %v646 = vsel %vm640, %v645, %v644
  %vm647 = vcmp.lt.s32.totalorder %v75, 0
  %v648 = vsub.s32 0, %v75
  %v649 = vsel %vm647, %v648, %v75
  %v650 = vshrl.u32 %v649, 3
  %v651 = vand.u32 %v649, 7
  %v652 = vsub.s32 0, %v651
  %v653 = vsel %vm647, %v652, %v651
  %vm654 = vcmp.ne.s32.totalorder %v548, 0
  %vm655 = vcmp.ne.s32.totalorder %v555, 0
  %vm656 = vcmp.ne.s32.totalorder %v562, 0
  %vm657 = vcmp.ne.s32.totalorder %v569, 0
  %vm658 = vcmp.ne.s32.totalorder %v576, 0
  %vm659 = vcmp.ne.s32.totalorder %v583, 0
  %vm660 = vcmp.ne.s32.totalorder %v590, 0
  %vm661 = vcmp.ne.s32.totalorder %v597, 0
  %vm662 = vcmp.ne.s32.totalorder %v604, 0
  %vm663 = vcmp.ne.s32.totalorder %v611, 0
  %vm664 = vcmp.ne.s32.totalorder %v618, 0
  %vm665 = vcmp.ne.s32.totalorder %v625, 0
  %vm666 = vcmp.ne.s32.totalorder %v632, 0
  %vm667 = vcmp.ne.s32.totalorder %v639, 0
  %vm668 = vcmp.ne.s32.totalorder %v646, 0
  %vm669 = vcmp.ne.s32.totalorder %v653, 0
  %vm670 = vcmp.lt.s32.totalorder %v548, 0
  %vm671 = vcmp.lt.s32.totalorder %v555, 0
  %vm672 = vcmp.lt.s32.totalorder %v562, 0
  %vm673 = vcmp.lt.s32.totalorder %v569, 0
  %vm674 = vcmp.lt.s32.totalorder %v576, 0
  %vm675 = vcmp.lt.s32.totalorder %v583, 0
  %vm676 = vcmp.lt.s32.totalorder %v590, 0
  %vm677 = vcmp.lt.s32.totalorder %v597, 0
  %vm678 = vcmp.lt.s32.totalorder %v604, 0
  %vm679 = vcmp.lt.s32.totalorder %v611, 0
  %vm680 = vcmp.lt.s32.totalorder %v618, 0
  %vm681 = vcmp.lt.s32.totalorder %v625, 0
  %vm682 = vcmp.lt.s32.totalorder %v632, 0
  %vm683 = vcmp.lt.s32.totalorder %v639, 0
  %vm684 = vcmp.lt.s32.totalorder %v646, 0
  %vm685 = vcmp.lt.s32.totalorder %v653, 0
  %vm686 = vmand %vm670, %vm654
  %vm687 = vmand %vm671, %vm655
  %vm688 = vmand %vm672, %vm656
  %vm689 = vmand %vm673, %vm657
  %vm690 = vmand %vm674, %vm658
  %vm691 = vmand %vm675, %vm659
  %vm692 = vmand %vm676, %vm660
  %vm693 = vmand %vm677, %vm661
  %vm694 = vmand %vm678, %vm662
  %vm695 = vmand %vm679, %vm663
  %vm696 = vmand %vm680, %vm664
  %vm697 = vmand %vm681, %vm665
  %vm698 = vmand %vm682, %vm666
  %vm699 = vmand %vm683, %vm667
  %vm700 = vmand %vm684, %vm668
  %vm701 = vmand %vm685, %vm669
  %v702 = vadd.s32 %v548, 8
  %v703 = vadd.s32 %v555, 8
  %v704 = vadd.s32 %v562, 8
  %v705 = vadd.s32 %v569, 8
  %v706 = vadd.s32 %v576, 8
  %v707 = vadd.s32 %v583, 8
  %v708 = vadd.s32 %v590, 8
  %v709 = vadd.s32 %v597, 8
  %v710 = vadd.s32 %v604, 8
  %v711 = vadd.s32 %v611, 8
  %v712 = vadd.s32 %v618, 8
  %v713 = vadd.s32 %v625, 8
  %v714 = vadd.s32 %v632, 8
  %v715 = vadd.s32 %v639, 8
  %v716 = vadd.s32 %v646, 8
  %v717 = vadd.s32 %v653, 8
  %v718 = vsel %vm686, %v702, %v548
  %v719 = vsel %vm687, %v703, %v555
  %v720 = vsel %vm688, %v704, %v562
  %v721 = vsel %vm689, %v705, %v569
  %v722 = vsel %vm690, %v706, %v576
  %v723 = vsel %vm691, %v707, %v583
  %v724 = vsel %vm692, %v708, %v590
  %v725 = vsel %vm693, %v709, %v597
  %v726 = vsel %vm694, %v710, %v604
  %v727 = vsel %vm695, %v711, %v611
  %v728 = vsel %vm696, %v712, %v618
  %v729 = vsel %vm697, %v713, %v625
  %v730 = vsel %vm698, %v714, %v632
  %v731 = vsel %vm699, %v715, %v639
  %v732 = vsel %vm700, %v716, %v646
  %v733 = vsel %vm701, %v717, %v653
  %vm734 = vcmp.eq.s32.totalorder %v718, %v541
  %vm735 = vcmp.eq.s32.totalorder %v719, %v541
  %vm736 = vcmp.eq.s32.totalorder %v720, %v541
  %vm737 = vcmp.eq.s32.totalorder %v721, %v541
  %vm738 = vcmp.eq.s32.totalorder %v722, %v541
  %vm739 = vcmp.eq.s32.totalorder %v723, %v541
  %vm740 = vcmp.eq.s32.totalorder %v724, %v541
  %vm741 = vcmp.eq.s32.totalorder %v725, %v541
  %vm742 = vcmp.eq.s32.totalorder %v726, %v541
  %vm743 = vcmp.eq.s32.totalorder %v727, %v541
  %vm744 = vcmp.eq.s32.totalorder %v728, %v541
  %vm745 = vcmp.eq.s32.totalorder %v729, %v541
  %vm746 = vcmp.eq.s32.totalorder %v730, %v541
  %vm747 = vcmp.eq.s32.totalorder %v731, %v541
  %vm748 = vcmp.eq.s32.totalorder %v732, %v541
  %vm749 = vcmp.eq.s32.totalorder %v733, %v541
  %v750 = vsel %vm734, 1, 0
  %v751 = vsel %vm735, 1, 0
  %v752 = vsel %vm736, 1, 0
  %v753 = vsel %vm737, 1, 0
  %v754 = vsel %vm738, 1, 0
  %v755 = vsel %vm739, 1, 0
  %v756 = vsel %vm740, 1, 0
  %v757 = vsel %vm741, 1, 0
  %v758 = vsel %vm742, 1, 0
  %v759 = vsel %vm743, 1, 0
  %v760 = vsel %vm744, 1, 0
  %v761 = vsel %vm745, 1, 0
  %v762 = vsel %vm746, 1, 0
  %v763 = vsel %vm747, 1, 0
  %v764 = vsel %vm748, 1, 0
  %v765 = vsel %vm749, 1, 0
  %v766 = vcvt.s32.f32 %v750
  %v767 = vcvt.s32.f32 %v751
  %v768 = vcvt.s32.f32 %v752
  %v769 = vcvt.s32.f32 %v753
  %v770 = vcvt.s32.f32 %v754
  %v771 = vcvt.s32.f32 %v755
  %v772 = vcvt.s32.f32 %v756
  %v773 = vcvt.s32.f32 %v757
  %v774 = vcvt.s32.f32 %v758
  %v775 = vcvt.s32.f32 %v759
  %v776 = vcvt.s32.f32 %v760
  %v777 = vcvt.s32.f32 %v761
  %v778 = vcvt.s32.f32 %v762
  %v779 = vcvt.s32.f32 %v763
  %v780 = vcvt.s32.f32 %v764
  %v781 = vcvt.s32.f32 %v765
  %vm782 = vcmp.lt.s32.totalorder %v541, 0
  %v783 = vsub.s32 0, %v541
  %v784 = vsel %vm782, %v783, %v541
  %v785 = vshrl.u32 %v784, 3
  %v786 = vand.u32 %v784, 7
  %v787 = vsub.s32 0, %v786
  %v788 = vsel %vm782, %v787, %v786
  %vm789 = vcmp.ne.s32.totalorder %v788, 0
  %vm790 = vcmp.lt.s32.totalorder %v788, 0
  %vm791 = vmand %vm790, %vm789
  %v792 = vadd.s32 %v788, 8
  %v793 = vsel %vm791, %v792, %v788
  %vm794 = vcmp.eq.s32.totalorder %v793, %v60
  %v795 = vsel %vm794, 1, 0
  %v796 = vcvt.s32.f32 %v795
  %v797 = vrot.slane %v27, 7
  %v798 = vrot.slane %v28, 7
  %v799 = vrot.slane %v29, 7
  %v800 = vrot.slane %v30, 7
  %v801 = vrot.slane %v31, 7
  %v802 = vrot.slane %v32, 7
  %v803 = vrot.slane %v33, 7
  %v804 = vrot.slane %v34, 7
  %v805 = vrot.slane %v35, 7
  %v806 = vrot.slane %v36, 7
  %v807 = vrot.slane %v37, 7
  %v808 = vrot.slane %v38, 7
  %v809 = vrot.slane %v39, 7
  %v810 = vrot.slane %v40, 7
  %v811 = vrot.slane %v41, 7
  %v812 = vrot.slane %v42, 7
  %v813 = vrot.slane %v43, 7
  %v814 = vrot.slane %v44, 7
  %v815 = vrot.slane %v45, 7
  %v816 = vrot.slane %v46, 7
  %v817 = vrot.slane %v47, 7
  %v818 = vrot.slane %v48, 7
  %v819 = vrot.slane %v49, 7
  %v820 = vrot.slane %v50, 7
  %v821 = vrot.slane %v51, 7
  %v822 = vrot.slane %v52, 7
  %v823 = vrot.slane %v53, 7
  %v824 = vrot.slane %v54, 7
  %v825 = vrot.slane %v55, 7
  %v826 = vrot.slane %v56, 7
  %v827 = vrot.slane %v57, 7
  %v828 = vrot.slane %v58, 7
  %vm829 = vcmp.lt.s32.totalorder %v60, 1
  %v830 = vsel %vm829, %v827, %v828
  %v831 = vsel %vm829, %v826, %v827
  %v832 = vsel %vm829, %v825, %v826
  %v833 = vsel %vm829, %v824, %v825
  %v834 = vsel %vm829, %v823, %v824
  %v835 = vsel %vm829, %v822, %v823
  %v836 = vsel %vm829, %v821, %v822
  %v837 = vsel %vm829, %v820, %v821
  %v838 = vsel %vm829, %v819, %v820
  %v839 = vsel %vm829, %v818, %v819
  %v840 = vsel %vm829, %v817, %v818
  %v841 = vsel %vm829, %v816, %v817
  %v842 = vsel %vm829, %v815, %v816
  %v843 = vsel %vm829, %v814, %v815
  %v844 = vsel %vm829, %v813, %v814
  %v845 = vsel %vm829, %v812, %v813
  %v846 = vsel %vm829, %v811, %v812
  %v847 = vsel %vm829, %v810, %v811
  %v848 = vsel %vm829, %v809, %v810
  %v849 = vsel %vm829, %v808, %v809
  %v850 = vsel %vm829, %v807, %v808
  %v851 = vsel %vm829, %v806, %v807
  %v852 = vsel %vm829, %v805, %v806
  %v853 = vsel %vm829, %v804, %v805
  %v854 = vsel %vm829, %v803, %v804
  %v855 = vsel %vm829, %v802, %v803
  %v856 = vsel %vm829, %v801, %v802
  %v857 = vsel %vm829, %v800, %v801
  %v858 = vsel %vm829, %v799, %v800
  %v859 = vsel %vm829, %v798, %v799
  %v860 = vsel %vm829, %v797, %v798
  %v861 = vsel %vm829, %v828, %v797
  %v862 = vsel %vm476, 0.0, %v861
  %v863 = vsel %vm477, 0.0, %v860
  %v864 = vsel %vm478, 0.0, %v859
  %v865 = vsel %vm479, 0.0, %v858
  %v866 = vsel %vm480, 0.0, %v857
  %v867 = vsel %vm481, 0.0, %v856
  %v868 = vsel %vm482, 0.0, %v855
  %v869 = vsel %vm483, 0.0, %v854
  %v870 = vsel %vm484, 0.0, %v853
  %v871 = vsel %vm485, 0.0, %v852
  %v872 = vsel %vm486, 0.0, %v851
  %v873 = vsel %vm487, 0.0, %v850
  %v874 = vsel %vm488, 0.0, %v849
  %v875 = vsel %vm489, 0.0, %v848
  %v876 = vsel %vm490, 0.0, %v847
  %v877 = vsel %vm491, 0.0, %v846
  %v878 = vsel %vm492, 0.0, %v845
  %v879 = vsel %vm493, 0.0, %v844
  %v880 = vsel %vm494, 0.0, %v843
  %v881 = vsel %vm495, 0.0, %v842
  %v882 = vsel %vm496, 0.0, %v841
  %v883 = vsel %vm497, 0.0, %v840
  %v884 = vsel %vm498, 0.0, %v839
  %v885 = vsel %vm499, 0.0, %v838
  %v886 = vsel %vm500, 0.0, %v837
  %v887 = vsel %vm501, 0.0, %v836
  %v888 = vsel %vm502, 0.0, %v835
  %v889 = vsel %vm503, 0.0, %v834
  %v890 = vsel %vm504, 0.0, %v833
  %v891 = vsel %vm505, 0.0, %v832
  %v892 = vsel %vm506, 0.0, %v831
  %v893 = vsel %vm507, 0.0, %v830
  %v894 = vrot.slane %v27, 1
  %v895 = vrot.slane %v28, 1
  %v896 = vrot.slane %v29, 1
  %v897 = vrot.slane %v30, 1
  %v898 = vrot.slane %v31, 1
  %v899 = vrot.slane %v32, 1
  %v900 = vrot.slane %v33, 1
  %v901 = vrot.slane %v34, 1
  %v902 = vrot.slane %v35, 1
  %v903 = vrot.slane %v36, 1
  %v904 = vrot.slane %v37, 1
  %v905 = vrot.slane %v38, 1
  %v906 = vrot.slane %v39, 1
  %v907 = vrot.slane %v40, 1
  %v908 = vrot.slane %v41, 1
  %v909 = vrot.slane %v42, 1
  %v910 = vrot.slane %v43, 1
  %v911 = vrot.slane %v44, 1
  %v912 = vrot.slane %v45, 1
  %v913 = vrot.slane %v46, 1
  %v914 = vrot.slane %v47, 1
  %v915 = vrot.slane %v48, 1
  %v916 = vrot.slane %v49, 1
  %v917 = vrot.slane %v50, 1
  %v918 = vrot.slane %v51, 1
  %v919 = vrot.slane %v52, 1
  %v920 = vrot.slane %v53, 1
  %v921 = vrot.slane %v54, 1
  %v922 = vrot.slane %v55, 1
  %v923 = vrot.slane %v56, 1
  %v924 = vrot.slane %v57, 1
  %v925 = vrot.slane %v58, 1
  %vm926 = vcmp.lt.s32.totalorder %v60, 7
  %v927 = vsel %vm926, %v924, %v925
  %v928 = vsel %vm926, %v923, %v924
  %v929 = vsel %vm926, %v922, %v923
  %v930 = vsel %vm926, %v921, %v922
  %v931 = vsel %vm926, %v920, %v921
  %v932 = vsel %vm926, %v919, %v920
  %v933 = vsel %vm926, %v918, %v919
  %v934 = vsel %vm926, %v917, %v918
  %v935 = vsel %vm926, %v916, %v917
  %v936 = vsel %vm926, %v915, %v916
  %v937 = vsel %vm926, %v914, %v915
  %v938 = vsel %vm926, %v913, %v914
  %v939 = vsel %vm926, %v912, %v913
  %v940 = vsel %vm926, %v911, %v912
  %v941 = vsel %vm926, %v910, %v911
  %v942 = vsel %vm926, %v909, %v910
  %v943 = vsel %vm926, %v908, %v909
  %v944 = vsel %vm926, %v907, %v908
  %v945 = vsel %vm926, %v906, %v907
  %v946 = vsel %vm926, %v905, %v906
  %v947 = vsel %vm926, %v904, %v905
  %v948 = vsel %vm926, %v903, %v904
  %v949 = vsel %vm926, %v902, %v903
  %v950 = vsel %vm926, %v901, %v902
  %v951 = vsel %vm926, %v900, %v901
  %v952 = vsel %vm926, %v899, %v900
  %v953 = vsel %vm926, %v898, %v899
  %v954 = vsel %vm926, %v897, %v898
  %v955 = vsel %vm926, %v896, %v897
  %v956 = vsel %vm926, %v895, %v896
  %v957 = vsel %vm926, %v894, %v895
  %v958 = vsel %vm926, %v925, %v894
  %v959 = vsel %vm508, 0.0, %v957
  %v960 = vsel %vm509, 0.0, %v956
  %v961 = vsel %vm510, 0.0, %v955
  %v962 = vsel %vm511, 0.0, %v954
  %v963 = vsel %vm512, 0.0, %v953
  %v964 = vsel %vm513, 0.0, %v952
  %v965 = vsel %vm514, 0.0, %v951
  %v966 = vsel %vm515, 0.0, %v950
  %v967 = vsel %vm516, 0.0, %v949
  %v968 = vsel %vm517, 0.0, %v948
  %v969 = vsel %vm518, 0.0, %v947
  %v970 = vsel %vm519, 0.0, %v946
  %v971 = vsel %vm520, 0.0, %v945
  %v972 = vsel %vm521, 0.0, %v944
  %v973 = vsel %vm522, 0.0, %v943
  %v974 = vsel %vm523, 0.0, %v942
  %v975 = vsel %vm524, 0.0, %v941
  %v976 = vsel %vm525, 0.0, %v940
  %v977 = vsel %vm526, 0.0, %v939
  %v978 = vsel %vm527, 0.0, %v938
  %v979 = vsel %vm528, 0.0, %v937
  %v980 = vsel %vm529, 0.0, %v936
  %v981 = vsel %vm530, 0.0, %v935
  %v982 = vsel %vm531, 0.0, %v934
  %v983 = vsel %vm532, 0.0, %v933
  %v984 = vsel %vm533, 0.0, %v932
  %v985 = vsel %vm534, 0.0, %v931
  %v986 = vsel %vm535, 0.0, %v930
  %v987 = vsel %vm536, 0.0, %v929
  %v988 = vsel %vm537, 0.0, %v928
  %v989 = vsel %vm538, 0.0, %v927
  %v990 = vsel %vm539, 0.0, %v958
  %v991 = vpack.c.bf16 %v863, %v862
  %v992 = vpack.c.bf16 %v865, %v864
  %v993 = vpack.c.bf16 %v867, %v866
  %v994 = vpack.c.bf16 %v869, %v868
  %v995 = vpack.c.bf16 %v871, %v870
  %v996 = vpack.c.bf16 %v873, %v872
  %v997 = vpack.c.bf16 %v875, %v874
  %v998 = vpack.c.bf16 %v877, %v876
  %v999 = vpack.c.bf16 %v879, %v878
  %v1000 = vpack.c.bf16 %v881, %v880
  %v1001 = vpack.c.bf16 %v883, %v882
  %v1002 = vpack.c.bf16 %v885, %v884
  %v1003 = vpack.c.bf16 %v887, %v886
  %v1004 = vpack.c.bf16 %v889, %v888
  %v1005 = vpack.c.bf16 %v891, %v890
  %v1006 = vpack.c.bf16 %v893, %v892
  %1007 = vst [vmem:[#allocation2] sm:$0xff] %v991
  %1008 = vst [vmem:[#allocation2 + $0x18] sm:$0xff] %v992
  %1009 = vst [vmem:[#allocation2 + $0x30] sm:$0xff] %v993
  %1010 = vst [vmem:[#allocation2 + $0x48] sm:$0xff] %v994
  %1011 = vst [vmem:[#allocation2 + $0x60] sm:$0xff] %v995
  %1012 = vst [vmem:[#allocation2 + $0x78] sm:$0xff] %v996
  %1013 = vst [vmem:[#allocation2 + $0x90] sm:$0xff] %v997
  %1014 = vst [vmem:[#allocation2 + $0xa8] sm:$0xff] %v998
  %1015 = vst [vmem:[#allocation2 + $0xc0] sm:$0xff] %v999
  %1016 = vst [vmem:[#allocation2 + $0xd8] sm:$0xff] %v1000
  %1017 = vst [vmem:[#allocation2 + $0xf0] sm:$0xff] %v1001
  %1018 = vst [vmem:[#allocation2 + $0x108] sm:$0xff] %v1002
  %1019 = vst [vmem:[#allocation2 + $0x120] sm:$0xff] %v1003
  %1020 = vst [vmem:[#allocation2 + $0x138] sm:$0xff] %v1004
  %1021 = vst [vmem:[#allocation2 + $0x150] sm:$0xff] %v1005
  %1022 = vst [vmem:[#allocation2 + $0x168] sm:$0xff] %v1006
  %v1023 = vpack.c.bf16 %v28, %v27
  %v1024 = vpack.c.bf16 %v30, %v29
  %v1025 = vpack.c.bf16 %v32, %v31
  %v1026 = vpack.c.bf16 %v34, %v33
  %v1027 = vpack.c.bf16 %v36, %v35
  %v1028 = vpack.c.bf16 %v38, %v37
  %v1029 = vpack.c.bf16 %v40, %v39
  %v1030 = vpack.c.bf16 %v42, %v41
  %v1031 = vpack.c.bf16 %v44, %v43
  %v1032 = vpack.c.bf16 %v46, %v45
  %v1033 = vpack.c.bf16 %v48, %v47
  %v1034 = vpack.c.bf16 %v50, %v49
  %v1035 = vpack.c.bf16 %v52, %v51
  %v1036 = vpack.c.bf16 %v54, %v53
  %v1037 = vpack.c.bf16 %v56, %v55
  %v1038 = vpack.c.bf16 %v58, %v57
  %1039 = vst [vmem:[#allocation2 + $0x8] sm:$0xff] %v1023
  %1040 = vst [vmem:[#allocation2 + $0x20] sm:$0xff] %v1024
  %1041 = vst [vmem:[#allocation2 + $0x38] sm:$0xff] %v1025
  %1042 = vst [vmem:[#allocation2 + $0x50] sm:$0xff] %v1026
  %1043 = vst [vmem:[#allocation2 + $0x68] sm:$0xff] %v1027
  %1044 = vst [vmem:[#allocation2 + $0x80] sm:$0xff] %v1028
  %1045 = vst [vmem:[#allocation2 + $0x98] sm:$0xff] %v1029
  %1046 = vst [vmem:[#allocation2 + $0xb0] sm:$0xff] %v1030
  %1047 = vst [vmem:[#allocation2 + $0xc8] sm:$0xff] %v1031
  %1048 = vst [vmem:[#allocation2 + $0xe0] sm:$0xff] %v1032
  %1049 = vst [vmem:[#allocation2 + $0xf8] sm:$0xff] %v1033
  %1050 = vst [vmem:[#allocation2 + $0x110] sm:$0xff] %v1034
  %1051 = vst [vmem:[#allocation2 + $0x128] sm:$0xff] %v1035
  %1052 = vst [vmem:[#allocation2 + $0x140] sm:$0xff] %v1036
  %1053 = vst [vmem:[#allocation2 + $0x158] sm:$0xff] %v1037
  %1054 = vst [vmem:[#allocation2 + $0x170] sm:$0xff] %v1038
  %v1055 = vpack.c.bf16 %v960, %v959
  %v1056 = vpack.c.bf16 %v962, %v961
  %v1057 = vpack.c.bf16 %v964, %v963
  %v1058 = vpack.c.bf16 %v966, %v965
  %v1059 = vpack.c.bf16 %v968, %v967
  %v1060 = vpack.c.bf16 %v970, %v969
  %v1061 = vpack.c.bf16 %v972, %v971
  %v1062 = vpack.c.bf16 %v974, %v973
  %v1063 = vpack.c.bf16 %v976, %v975
  %v1064 = vpack.c.bf16 %v978, %v977
  %v1065 = vpack.c.bf16 %v980, %v979
  %v1066 = vpack.c.bf16 %v982, %v981
  %v1067 = vpack.c.bf16 %v984, %v983
  %v1068 = vpack.c.bf16 %v986, %v985
  %v1069 = vpack.c.bf16 %v988, %v987
  %v1070 = vpack.c.bf16 %v990, %v989
  %1071 = vst [vmem:[#allocation2 + $0x10] sm:$0xff] %v1055
  %1072 = vst [vmem:[#allocation2 + $0x28] sm:$0xff] %v1056
  %1073 = vst [vmem:[#allocation2 + $0x40] sm:$0xff] %v1057
  %1074 = vst [vmem:[#allocation2 + $0x58] sm:$0xff] %v1058
  %1075 = vst [vmem:[#allocation2 + $0x70] sm:$0xff] %v1059
  %1076 = vst [vmem:[#allocation2 + $0x88] sm:$0xff] %v1060
  %1077 = vst [vmem:[#allocation2 + $0xa0] sm:$0xff] %v1061
  %1078 = vst [vmem:[#allocation2 + $0xb8] sm:$0xff] %v1062
  %1079 = vst [vmem:[#allocation2 + $0xd0] sm:$0xff] %v1063
  %1080 = vst [vmem:[#allocation2 + $0xe8] sm:$0xff] %v1064
  %1081 = vst [vmem:[#allocation2 + $0x100] sm:$0xff] %v1065
  %1082 = vst [vmem:[#allocation2 + $0x118] sm:$0xff] %v1066
  %1083 = vst [vmem:[#allocation2 + $0x130] sm:$0xff] %v1067
  %1084 = vst [vmem:[#allocation2 + $0x148] sm:$0xff] %v1068
  %1085 = vst [vmem:[#allocation2 + $0x160] sm:$0xff] %v1069
  %1086 = vst [vmem:[#allocation2 + $0x178] sm:$0xff] %v1070
  %v1087 = vld [vmem:[#allocation2] sm:$0xff]
  %v1088 = vld [vmem:[#allocation2 + $0x8] sm:$0xff]
  %v1089 = vld [vmem:[#allocation2 + $0x10] sm:$0xff]
  %v1090 = vld [vmem:[#allocation2 + $0x18] sm:$0xff]
  %v1091 = vld [vmem:[#allocation2 + $0x20] sm:$0xff]
  %v1092 = vld [vmem:[#allocation2 + $0x28] sm:$0xff]
  %v1093 = vld [vmem:[#allocation2 + $0x30] sm:$0xff]
  %v1094 = vld [vmem:[#allocation2 + $0x38] sm:$0xff]
  %v1095 = vld [vmem:[#allocation2 + $0x40] sm:$0xff]
  %v1096 = vld [vmem:[#allocation2 + $0x48] sm:$0xff]
  %v1097 = vld [vmem:[#allocation2 + $0x50] sm:$0xff]
  %v1098 = vld [vmem:[#allocation2 + $0x58] sm:$0xff]
  %v1099 = vld [vmem:[#allocation2 + $0x60] sm:$0xff]
  %v1100 = vld [vmem:[#allocation2 + $0x68] sm:$0xff]
  %v1101 = vld [vmem:[#allocation2 + $0x70] sm:$0xff]
  %v1102 = vld [vmem:[#allocation2 + $0x78] sm:$0xff]
  %v1103 = vld [vmem:[#allocation2 + $0x80] sm:$0xff]
  %v1104 = vld [vmem:[#allocation2 + $0x88] sm:$0xff]
  %v1105 = vld [vmem:[#allocation2 + $0x90] sm:$0xff]
  %v1106 = vld [vmem:[#allocation2 + $0x98] sm:$0xff]
  %v1107 = vld [vmem:[#allocation2 + $0xa0] sm:$0xff]
  %v1108 = vld [vmem:[#allocation2 + $0xa8] sm:$0xff]
  %v1109 = vld [vmem:[#allocation2 + $0xb0] sm:$0xff]
  %v1110 = vld [vmem:[#allocation2 + $0xb8] sm:$0xff]
  %v1111 = vld [vmem:[#allocation2 + $0xc0] sm:$0xff]
  %v1112 = vld [vmem:[#allocation2 + $0xc8] sm:$0xff]
  %v1113 = vld [vmem:[#allocation2 + $0xd0] sm:$0xff]
  %v1114 = vld [vmem:[#allocation2 + $0xd8] sm:$0xff]
  %v1115 = vld [vmem:[#allocation2 + $0xe0] sm:$0xff]
  %v1116 = vld [vmem:[#allocation2 + $0xe8] sm:$0xff]
  %v1117 = vld [vmem:[#allocation2 + $0xf0] sm:$0xff]
  %v1118 = vld [vmem:[#allocation2 + $0xf8] sm:$0xff]
  %v1119 = vld [vmem:[#allocation2 + $0x100] sm:$0xff]
  %v1120 = vld [vmem:[#allocation2 + $0x108] sm:$0xff]
  %v1121 = vld [vmem:[#allocation2 + $0x110] sm:$0xff]
  %v1122 = vld [vmem:[#allocation2 + $0x118] sm:$0xff]
  %v1123 = vld [vmem:[#allocation2 + $0x120] sm:$0xff]
  %v1124 = vld [vmem:[#allocation2 + $0x128] sm:$0xff]
  %v1125 = vld [vmem:[#allocation2 + $0x130] sm:$0xff]
  %v1126 = vld [vmem:[#allocation2 + $0x138] sm:$0xff]
  %v1127 = vld [vmem:[#allocation2 + $0x140] sm:$0xff]
  %v1128 = vld [vmem:[#allocation2 + $0x148] sm:$0xff]
  %v1129 = vld [vmem:[#allocation2 + $0x150] sm:$0xff]
  %v1130 = vld [vmem:[#allocation2 + $0x158] sm:$0xff]
  %v1131 = vld [vmem:[#allocation2 + $0x160] sm:$0xff]
  %v1132 = vld [vmem:[#allocation2 + $0x168] sm:$0xff]
  %v1133 = vld [vmem:[#allocation2 + $0x170] sm:$0xff]
  %v1134 = vld [vmem:[#allocation2 + $0x178] sm:$0xff]
  %v1135 = vld [vmem:[%s1] sm:$0xf]
  %v1136 = vld [vmem:[%s1 + $0x4] sm:$0xf]
  %v1137 = vld [vmem:[%s1 + $0x8] sm:$0xf]
  %v1138 = vld [vmem:[%s1 + $0xc] sm:$0xf]
  %v1139 = vld [vmem:[%s1 + $0x10] sm:$0xf]
  %v1140 = vld [vmem:[%s1 + $0x14] sm:$0xf]
  %v1141 = vld [vmem:[%s1 + $0x18] sm:$0xf]
  %v1142 = vld [vmem:[%s1 + $0x1c] sm:$0xf]
  %v1143 = vld [vmem:[%s1 + $0x20] sm:$0xf]
  %v1144 = vld [vmem:[%s1 + $0x24] sm:$0xf]
  %v1145 = vld [vmem:[%s1 + $0x28] sm:$0xf]
  %v1146 = vld [vmem:[%s1 + $0x2c] sm:$0xf]
  %v1147 = vld [vmem:[%s1 + $0x30] sm:$0xf]
  %v1148 = vld [vmem:[%s1 + $0x34] sm:$0xf]
  %v1149 = vld [vmem:[%s1 + $0x38] sm:$0xf]
  %v1150 = vld [vmem:[%s1 + $0x3c] sm:$0xf]
  %v1151 = vld [vmem:[%s1 + $0x40] sm:$0xf]
  %v1152 = vld [vmem:[%s1 + $0x44] sm:$0xf]
  %v1153 = vld [vmem:[%s1 + $0x48] sm:$0xf]
  %v1154 = vld [vmem:[%s1 + $0x4c] sm:$0xf]
  %v1155 = vld [vmem:[%s1 + $0x50] sm:$0xf]
  %v1156 = vld [vmem:[%s1 + $0x54] sm:$0xf]
  %v1157 = vld [vmem:[%s1 + $0x58] sm:$0xf]
  %v1158 = vld [vmem:[%s1 + $0x5c] sm:$0xf]
  %v1159 = vld [vmem:[%s1 + $0x60] sm:$0xf]
  %v1160 = vld [vmem:[%s1 + $0x64] sm:$0xf]
  %v1161 = vld [vmem:[%s1 + $0x68] sm:$0xf]
  %v1162 = vld [vmem:[%s1 + $0x6c] sm:$0xf]
  %v1163 = vld [vmem:[%s1 + $0x70] sm:$0xf]
  %v1164 = vld [vmem:[%s1 + $0x74] sm:$0xf]
  %v1165 = vld [vmem:[%s1 + $0x78] sm:$0xf]
  %v1166 = vld [vmem:[%s1 + $0x7c] sm:$0xf]
  %v1167 = vld [vmem:[%s1 + $0x80] sm:$0xf]
  %v1168 = vld [vmem:[%s1 + $0x84] sm:$0xf]
  %v1169 = vld [vmem:[%s1 + $0x88] sm:$0xf]
  %v1170 = vld [vmem:[%s1 + $0x8c] sm:$0xf]
  %v1171 = vld [vmem:[%s1 + $0x90] sm:$0xf]
  %v1172 = vld [vmem:[%s1 + $0x94] sm:$0xf]
  %v1173 = vld [vmem:[%s1 + $0x98] sm:$0xf]
  %v1174 = vld [vmem:[%s1 + $0x9c] sm:$0xf]
  %v1175 = vld [vmem:[%s1 + $0xa0] sm:$0xf]
  %v1176 = vld [vmem:[%s1 + $0xa4] sm:$0xf]
  %v1177 = vld [vmem:[%s1 + $0xa8] sm:$0xf]
  %v1178 = vld [vmem:[%s1 + $0xac] sm:$0xf]
  %v1179 = vld [vmem:[%s1 + $0xb0] sm:$0xf]
  %v1180 = vld [vmem:[%s1 + $0xb4] sm:$0xf]
  %v1181 = vld [vmem:[%s1 + $0xb8] sm:$0xf]
  %v1182 = vld [vmem:[%s1 + $0xbc] sm:$0xf]
  %v1231 = vunpack.c.l.b16 %v1135
  %v1232 = vunpack.c.l.b16 %v1136
  %v1233 = vunpack.c.l.b16 %v1137
  %v1234 = vunpack.c.l.b16 %v1138
  %v1235 = vunpack.c.l.b16 %v1139
  %v1236 = vunpack.c.l.b16 %v1140
  %v1237 = vunpack.c.l.b16 %v1141
  %v1238 = vunpack.c.l.b16 %v1142
  %v1239 = vunpack.c.l.b16 %v1143
  %v1240 = vunpack.c.l.b16 %v1144
  %v1241 = vunpack.c.l.b16 %v1145
  %v1242 = vunpack.c.l.b16 %v1146
  %v1243 = vunpack.c.l.b16 %v1147
  %v1244 = vunpack.c.l.b16 %v1148
  %v1245 = vunpack.c.l.b16 %v1149
  %v1246 = vunpack.c.l.b16 %v1150
  %v1247 = vunpack.c.l.b16 %v1151
  %v1248 = vunpack.c.l.b16 %v1152
  %v1249 = vunpack.c.l.b16 %v1153
  %v1250 = vunpack.c.l.b16 %v1154
  %v1251 = vunpack.c.l.b16 %v1155
  %v1252 = vunpack.c.l.b16 %v1156
  %v1253 = vunpack.c.l.b16 %v1157
  %v1254 = vunpack.c.l.b16 %v1158
  %v1255 = vunpack.c.l.b16 %v1159
  %v1256 = vunpack.c.l.b16 %v1160
  %v1257 = vunpack.c.l.b16 %v1161
  %v1258 = vunpack.c.l.b16 %v1162
  %v1259 = vunpack.c.l.b16 %v1163
  %v1260 = vunpack.c.l.b16 %v1164
  %v1261 = vunpack.c.l.b16 %v1165
  %v1262 = vunpack.c.l.b16 %v1166
  %v1263 = vunpack.c.l.b16 %v1167
  %v1264 = vunpack.c.l.b16 %v1168
  %v1265 = vunpack.c.l.b16 %v1169
  %v1266 = vunpack.c.l.b16 %v1170
  %v1267 = vunpack.c.l.b16 %v1171
  %v1268 = vunpack.c.l.b16 %v1172
  %v1269 = vunpack.c.l.b16 %v1173
  %v1270 = vunpack.c.l.b16 %v1174
  %v1271 = vunpack.c.l.b16 %v1175
  %v1272 = vunpack.c.l.b16 %v1176
  %v1273 = vunpack.c.l.b16 %v1177
  %v1274 = vunpack.c.l.b16 %v1178
  %v1275 = vunpack.c.l.b16 %v1179
  %v1276 = vunpack.c.l.b16 %v1180
  %v1277 = vunpack.c.l.b16 %v1181
  %v1278 = vunpack.c.l.b16 %v1182
  %v1279 = vpack.c.b16 %v1232, %v1231
  %v1280 = vpack.c.b16 %v1234, %v1233
  %v1281 = vpack.c.b16 %v1236, %v1235
  %v1282 = vpack.c.b16 %v1238, %v1237
  %v1283 = vpack.c.b16 %v1240, %v1239
  %v1284 = vpack.c.b16 %v1242, %v1241
  %v1285 = vpack.c.b16 %v1244, %v1243
  %v1286 = vpack.c.b16 %v1246, %v1245
  %v1287 = vpack.c.b16 %v1248, %v1247
  %v1288 = vpack.c.b16 %v1250, %v1249
  %v1289 = vpack.c.b16 %v1252, %v1251
  %v1290 = vpack.c.b16 %v1254, %v1253
  %v1291 = vpack.c.b16 %v1256, %v1255
  %v1292 = vpack.c.b16 %v1258, %v1257
  %v1293 = vpack.c.b16 %v1260, %v1259
  %v1294 = vpack.c.b16 %v1262, %v1261
  %v1295 = vpack.c.b16 %v1264, %v1263
  %v1296 = vpack.c.b16 %v1266, %v1265
  %v1297 = vpack.c.b16 %v1268, %v1267
  %v1298 = vpack.c.b16 %v1270, %v1269
  %v1299 = vpack.c.b16 %v1272, %v1271
  %v1300 = vpack.c.b16 %v1274, %v1273
  %v1301 = vpack.c.b16 %v1276, %v1275
  %v1302 = vpack.c.b16 %v1278, %v1277
  %1327 = vmatprep.subr.bf16.mxu0 0
  %1328 = vmatpush1.bf16.msra.mxu0 %v1279
  %1329 = vmatprep.subr.bf16.mxu0 0
  %1330 = vmatpush1.bf16.msra.mxu0 %v1280
  %1331 = vmatprep.subr.bf16.mxu0 0
  %1332 = vmatpush1.bf16.msra.mxu0 %v1281
  %1333 = vmatprep.subr.bf16.mxu0 0
  %1334 = vmatpush1.bf16.msra.mxu0 %v1282
  %1335 = vmatprep.subr.bf16.mxu0 0
  %1336 = vmatpush1.bf16.msra.mxu0 %v1283
  %1337 = vmatprep.subr.bf16.mxu0 0
  %1338 = vmatpush1.bf16.msra.mxu0 %v1284
  %1339 = vmatprep.subr.bf16.mxu0 0
  %1340 = vmatpush1.bf16.msra.mxu0 %v1285
  %1341 = vmatprep.subr.bf16.mxu0 0
  %1342 = vmatpush1.bf16.msra.mxu0 %v1286
  %1343 = vmatprep.subr.bf16.mxu0 0
  %1344 = vmatpush1.bf16.msra.mxu0 %v1287
  %1345 = vmatprep.subr.bf16.mxu0 0
  %1346 = vmatpush1.bf16.msra.mxu0 %v1288
  %1347 = vmatprep.subr.bf16.mxu0 0
  %1348 = vmatpush1.bf16.msra.mxu0 %v1289
  %1349 = vmatprep.subr.bf16.mxu0 0
  %1350 = vmatpush1.bf16.msra.mxu0 %v1290
  %1351 = vmatprep.subr.bf16.mxu0 0
  %1352 = vmatpush1.bf16.msra.mxu0 %v1291
  %1353 = vmatprep.subr.bf16.mxu0 0
  %1354 = vmatpush1.bf16.msra.mxu0 %v1292
  %1355 = vmatprep.subr.bf16.mxu0 0
  %1356 = vmatpush1.bf16.msra.mxu0 %v1293
  %1357 = vmatprep.subr.bf16.mxu0 0
  %1358 = vmatpush1.bf16.msra.mxu0 %v1294
  %1359 = vmatprep.mubr.bf16.mxu0 %v1088
  %1360 = vmatmul.mubr.bf16.gmra.mrb[0].mxu0 %v1087
  %v1361 = vpop.f32.mrb[0].mxu0
  %v1362 = vadd.f32 0.0, %v1361
  %v1363 = vpop.f32.mrb[0].mxu0
  %v1364 = vpop.f32.mrb[0].mxu0
  %v1365 = vadd.f32 0.0, %v1364
  %v1366 = vpop.f32.mrb[0].mxu0
  %1367 = vmatprep.mubr.bf16.mxu0 %v1091
  %1368 = vmatmul.mubr.bf16.gmra.mrb[0].mxu0 %v1090
  %v1369 = vpop.f32.mrb[0].mxu0
  %v1370 = vadd.f32 0.0, %v1369
  %v1371 = vpop.f32.mrb[0].mxu0
  %v1372 = vpop.f32.mrb[0].mxu0
  %v1373 = vadd.f32 0.0, %v1372
  %v1374 = vpop.f32.mrb[0].mxu0
  %1375 = vmatprep.mubr.bf16.mxu0 %v1094
  %1376 = vmatmul.mubr.bf16.gmra.mrb[0].mxu0 %v1093
  %v1377 = vpop.f32.mrb[0].mxu0
  %v1378 = vadd.f32 0.0, %v1377
  %v1379 = vpop.f32.mrb[0].mxu0
  %v1380 = vpop.f32.mrb[0].mxu0
  %v1381 = vadd.f32 0.0, %v1380
  %v1382 = vpop.f32.mrb[0].mxu0
  %1383 = vmatprep.mubr.bf16.mxu0 %v1097
  %1384 = vmatmul.mubr.bf16.gmra.mrb[0].mxu0 %v1096
  %v1385 = vpop.f32.mrb[0].mxu0
  %v1386 = vadd.f32 0.0, %v1385
  %v1387 = vpop.f32.mrb[0].mxu0
  %v1388 = vpop.f32.mrb[0].mxu0
  %v1389 = vadd.f32 0.0, %v1388
  %v1390 = vpop.f32.mrb[0].mxu0
  %1391 = vmatprep.mubr.bf16.mxu0 %v1100
  %1392 = vmatmul.mubr.bf16.gmra.mrb[0].mxu0 %v1099
  %v1393 = vpop.f32.mrb[0].mxu0
  %v1394 = vadd.f32 0.0, %v1393
  %v1395 = vpop.f32.mrb[0].mxu0
  %v1396 = vpop.f32.mrb[0].mxu0
  %v1397 = vadd.f32 0.0, %v1396
  %v1398 = vpop.f32.mrb[0].mxu0
  %1399 = vmatprep.mubr.bf16.mxu0 %v1103
  %1400 = vmatmul.mubr.bf16.gmra.mrb[0].mxu0 %v1102
  %v1401 = vpop.f32.mrb[0].mxu0
  %v1402 = vadd.f32 0.0, %v1401
  %v1403 = vpop.f32.mrb[0].mxu0
  %v1404 = vpop.f32.mrb[0].mxu0
  %v1405 = vadd.f32 0.0, %v1404
  %v1406 = vpop.f32.mrb[0].mxu0
  %1407 = vmatprep.mubr.bf16.mxu0 %v1106
  %1408 = vmatmul.mubr.bf16.gmra.mrb[0].mxu0 %v1105
  %v1409 = vpop.f32.mrb[0].mxu0
  %v1410 = vadd.f32 0.0, %v1409
  %v1411 = vpop.f32.mrb[0].mxu0
  %v1412 = vpop.f32.mrb[0].mxu0
  %v1413 = vadd.f32 0.0, %v1412
  %v1414 = vpop.f32.mrb[0].mxu0
  %1415 = vmatprep.mubr.bf16.mxu0 %v1109
  %1416 = vmatmul.mubr.bf16.gmra.mrb[0].mxu0 %v1108
  %v1417 = vpop.f32.mrb[0].mxu0
  %v1418 = vadd.f32 0.0, %v1417
  %v1419 = vpop.f32.mrb[0].mxu0
  %v1420 = vpop.f32.mrb[0].mxu0
  %v1421 = vadd.f32 0.0, %v1420
  %v1422 = vpop.f32.mrb[0].mxu0
  %1423 = vmatprep.mubr.bf16.mxu0 %v1112
  %1424 = vmatmul.mubr.bf16.gmra.mrb[0].mxu0 %v1111
  %v1425 = vpop.f32.mrb[0].mxu0
  %v1426 = vadd.f32 0.0, %v1425
  %v1427 = vpop.f32.mrb[0].mxu0
  %v1428 = vpop.f32.mrb[0].mxu0
  %v1429 = vadd.f32 0.0, %v1428
  %v1430 = vpop.f32.mrb[0].mxu0
  %1431 = vmatprep.mubr.bf16.mxu0 %v1115
  %1432 = vmatmul.mubr.bf16.gmra.mrb[0].mxu0 %v1114
  %v1433 = vpop.f32.mrb[0].mxu0
  %v1434 = vadd.f32 0.0, %v1433
  %v1435 = vpop.f32.mrb[0].mxu0
  %v1436 = vpop.f32.mrb[0].mxu0
  %v1437 = vadd.f32 0.0, %v1436
  %v1438 = vpop.f32.mrb[0].mxu0
  %1439 = vmatprep.mubr.bf16.mxu0 %v1118
  %1440 = vmatmul.mubr.bf16.gmra.mrb[0].mxu0 %v1117
  %v1441 = vpop.f32.mrb[0].mxu0
  %v1442 = vadd.f32 0.0, %v1441
  %v1443 = vpop.f32.mrb[0].mxu0
  %v1444 = vpop.f32.mrb[0].mxu0
  %v1445 = vadd.f32 0.0, %v1444
  %v1446 = vpop.f32.mrb[0].mxu0
  %1447 = vmatprep.mubr.bf16.mxu0 %v1121
  %1448 = vmatmul.mubr.bf16.gmra.mrb[0].mxu0 %v1120
  %v1449 = vpop.f32.mrb[0].mxu0
  %v1450 = vadd.f32 0.0, %v1449
  %v1451 = vpop.f32.mrb[0].mxu0
  %v1452 = vpop.f32.mrb[0].mxu0
  %v1453 = vadd.f32 0.0, %v1452
  %v1454 = vpop.f32.mrb[0].mxu0
  %1455 = vmatprep.mubr.bf16.mxu0 %v1124
  %1456 = vmatmul.mubr.bf16.gmra.mrb[0].mxu0 %v1123
  %v1457 = vpop.f32.mrb[0].mxu0
  %v1458 = vadd.f32 0.0, %v1457
  %v1459 = vpop.f32.mrb[0].mxu0
  %v1460 = vpop.f32.mrb[0].mxu0
  %v1461 = vadd.f32 0.0, %v1460
  %v1462 = vpop.f32.mrb[0].mxu0
  %1463 = vmatprep.mubr.bf16.mxu0 %v1127
  %1464 = vmatmul.mubr.bf16.gmra.mrb[0].mxu0 %v1126
  %v1465 = vpop.f32.mrb[0].mxu0
  %v1466 = vadd.f32 0.0, %v1465
  %v1467 = vpop.f32.mrb[0].mxu0
  %v1468 = vpop.f32.mrb[0].mxu0
  %v1469 = vadd.f32 0.0, %v1468
  %v1470 = vpop.f32.mrb[0].mxu0
  %1471 = vmatprep.mubr.bf16.mxu0 %v1130
  %1472 = vmatmul.mubr.bf16.gmra.mrb[0].mxu0 %v1129
  %v1473 = vpop.f32.mrb[0].mxu0
  %v1474 = vadd.f32 0.0, %v1473
  %v1475 = vpop.f32.mrb[0].mxu0
  %v1476 = vpop.f32.mrb[0].mxu0
  %v1477 = vadd.f32 0.0, %v1476
  %v1478 = vpop.f32.mrb[0].mxu0
  %1479 = vmatprep.mubr.bf16.mxu0 %v1133
  %1480 = vmatmul.mubr.bf16.gmra.mrb[0].mxu0 %v1132
  %v1481 = vpop.f32.mrb[0].mxu0
  %v1482 = vadd.f32 0.0, %v1481
  %v1483 = vpop.f32.mrb[0].mxu0
  %v1484 = vpop.f32.mrb[0].mxu0
  %v1485 = vadd.f32 0.0, %v1484
  %v1486 = vpop.f32.mrb[0].mxu0
  %1487 = vdwg.mxu0
  %1488 = vmatprep.subr.bf16.mxu0 0
  %1489 = vmatpush1.bf16.msra.mxu0 %v1295
  %1490 = vmatprep.subr.bf16.mxu0 0
  %1491 = vmatpush1.bf16.msra.mxu0 %v1296
  %1492 = vmatprep.subr.bf16.mxu0 0
  %1493 = vmatpush1.bf16.msra.mxu0 %v1297
  %1494 = vmatprep.subr.bf16.mxu0 0
  %1495 = vmatpush1.bf16.msra.mxu0 %v1298
  %1496 = vmatprep.subr.bf16.mxu0 0
  %1497 = vmatpush1.bf16.msra.mxu0 %v1299
  %1498 = vmatprep.subr.bf16.mxu0 0
  %1499 = vmatpush1.bf16.msra.mxu0 %v1300
  %1500 = vmatprep.subr.bf16.mxu0 0
  %1501 = vmatpush1.bf16.msra.mxu0 %v1301
  %1502 = vmatprep.subr.bf16.mxu0 0
  %1503 = vmatpush1.bf16.msra.mxu0 %v1302
  %1504 = vmatprep.subr.bf16.mxu0 0
  %1505 = vmatpush1.bf16.msra.mxu0 0
  %1506 = vmatprep.subr.bf16.mxu0 0
  %1507 = vmatpush1.bf16.msra.mxu0 0
  %1508 = vmatprep.subr.bf16.mxu0 0
  %1509 = vmatpush1.bf16.msra.mxu0 0
  %1510 = vmatprep.subr.bf16.mxu0 0
  %1511 = vmatpush1.bf16.msra.mxu0 0
  %1512 = vmatprep.subr.bf16.mxu0 0
  %1513 = vmatpush1.bf16.msra.mxu0 0
  %1514 = vmatprep.subr.bf16.mxu0 0
  %1515 = vmatpush1.bf16.msra.mxu0 0
  %1516 = vmatprep.subr.bf16.mxu0 0
  %1517 = vmatpush1.bf16.msra.mxu0 0
  %1518 = vmatprep.subr.bf16.mxu0 0
  %1519 = vmatpush1.bf16.msra.mxu0 0
  %1520 = vmatprep.mubr.bf16.mxu0 0
  %1521 = vmatmul.mubr.bf16.gmra.mrb[0].mxu0 %v1089
  %v1522 = vpop.f32.mrb[0].mxu0
  %v1523 = vadd.f32 %v1362, %v1522
  %v1524 = vpop.f32.mrb[0].mxu0
  %v1525 = vpop.f32.mrb[0].mxu0
  %v1526 = vadd.f32 %v1365, %v1525
  %v1527 = vpop.f32.mrb[0].mxu0
  %1528 = vmatprep.mubr.bf16.mxu0 0
  %1529 = vmatmul.mubr.bf16.gmra.mrb[0].mxu0 %v1092
  %v1530 = vpop.f32.mrb[0].mxu0
  %v1531 = vadd.f32 %v1370, %v1530
  %v1532 = vpop.f32.mrb[0].mxu0
  %v1533 = vpop.f32.mrb[0].mxu0
  %v1534 = vadd.f32 %v1373, %v1533
  %v1535 = vpop.f32.mrb[0].mxu0
  %1536 = vmatprep.mubr.bf16.mxu0 0
  %1537 = vmatmul.mubr.bf16.gmra.mrb[0].mxu0 %v1095
  %v1538 = vpop.f32.mrb[0].mxu0
  %v1539 = vadd.f32 %v1378, %v1538
  %v1540 = vpop.f32.mrb[0].mxu0
  %v1541 = vpop.f32.mrb[0].mxu0
  %v1542 = vadd.f32 %v1381, %v1541
  %v1543 = vpop.f32.mrb[0].mxu0
  %1544 = vmatprep.mubr.bf16.mxu0 0
  %1545 = vmatmul.mubr.bf16.gmra.mrb[0].mxu0 %v1098
  %v1546 = vpop.f32.mrb[0].mxu0
  %v1547 = vadd.f32 %v1386, %v1546
  %v1548 = vpop.f32.mrb[0].mxu0
  %v1549 = vpop.f32.mrb[0].mxu0
  %v1550 = vadd.f32 %v1389, %v1549
  %v1551 = vpop.f32.mrb[0].mxu0
  %1552 = vmatprep.mubr.bf16.mxu0 0
  %1553 = vmatmul.mubr.bf16.gmra.mrb[0].mxu0 %v1101
  %v1554 = vpop.f32.mrb[0].mxu0
  %v1555 = vadd.f32 %v1394, %v1554
  %v1556 = vpop.f32.mrb[0].mxu0
  %v1557 = vpop.f32.mrb[0].mxu0
  %v1558 = vadd.f32 %v1397, %v1557
  %v1559 = vpop.f32.mrb[0].mxu0
  %1560 = vmatprep.mubr.bf16.mxu0 0
  %1561 = vmatmul.mubr.bf16.gmra.mrb[0].mxu0 %v1104
  %v1562 = vpop.f32.mrb[0].mxu0
  %v1563 = vadd.f32 %v1402, %v1562
  %v1564 = vpop.f32.mrb[0].mxu0
  %v1565 = vpop.f32.mrb[0].mxu0
  %v1566 = vadd.f32 %v1405, %v1565
  %v1567 = vpop.f32.mrb[0].mxu0
  %1568 = vmatprep.mubr.bf16.mxu0 0
  %1569 = vmatmul.mubr.bf16.gmra.mrb[0].mxu0 %v1107
  %v1570 = vpop.f32.mrb[0].mxu0
  %v1571 = vadd.f32 %v1410, %v1570
  %v1572 = vpop.f32.mrb[0].mxu0
  %v1573 = vpop.f32.mrb[0].mxu0
  %v1574 = vadd.f32 %v1413, %v1573
  %v1575 = vpop.f32.mrb[0].mxu0
  %1576 = vmatprep.mubr.bf16.mxu0 0
  %1577 = vmatmul.mubr.bf16.gmra.mrb[0].mxu0 %v1110
  %v1578 = vpop.f32.mrb[0].mxu0
  %v1579 = vadd.f32 %v1418, %v1578
  %v1580 = vpop.f32.mrb[0].mxu0
  %v1581 = vpop.f32.mrb[0].mxu0
  %v1582 = vadd.f32 %v1421, %v1581
  %v1583 = vpop.f32.mrb[0].mxu0
  %1584 = vmatprep.mubr.bf16.mxu0 0
  %1585 = vmatmul.mubr.bf16.gmra.mrb[0].mxu0 %v1113
  %v1586 = vpop.f32.mrb[0].mxu0
  %v1587 = vadd.f32 %v1426, %v1586
  %v1588 = vpop.f32.mrb[0].mxu0
  %v1589 = vpop.f32.mrb[0].mxu0
  %v1590 = vadd.f32 %v1429, %v1589
  %v1591 = vpop.f32.mrb[0].mxu0
  %1592 = vmatprep.mubr.bf16.mxu0 0
  %1593 = vmatmul.mubr.bf16.gmra.mrb[0].mxu0 %v1116
  %v1594 = vpop.f32.mrb[0].mxu0
  %v1595 = vadd.f32 %v1434, %v1594
  %v1596 = vpop.f32.mrb[0].mxu0
  %v1597 = vpop.f32.mrb[0].mxu0
  %v1598 = vadd.f32 %v1437, %v1597
  %v1599 = vpop.f32.mrb[0].mxu0
  %1600 = vmatprep.mubr.bf16.mxu0 0
  %1601 = vmatmul.mubr.bf16.gmra.mrb[0].mxu0 %v1119
  %v1602 = vpop.f32.mrb[0].mxu0
  %v1603 = vadd.f32 %v1442, %v1602
  %v1604 = vpop.f32.mrb[0].mxu0
  %v1605 = vpop.f32.mrb[0].mxu0
  %v1606 = vadd.f32 %v1445, %v1605
  %v1607 = vpop.f32.mrb[0].mxu0
  %1608 = vmatprep.mubr.bf16.mxu0 0
  %1609 = vmatmul.mubr.bf16.gmra.mrb[0].mxu0 %v1122
  %v1610 = vpop.f32.mrb[0].mxu0
  %v1611 = vadd.f32 %v1450, %v1610
  %v1612 = vpop.f32.mrb[0].mxu0
  %v1613 = vpop.f32.mrb[0].mxu0
  %v1614 = vadd.f32 %v1453, %v1613
  %v1615 = vpop.f32.mrb[0].mxu0
  %1616 = vmatprep.mubr.bf16.mxu0 0
  %1617 = vmatmul.mubr.bf16.gmra.mrb[0].mxu0 %v1125
  %v1618 = vpop.f32.mrb[0].mxu0
  %v1619 = vadd.f32 %v1458, %v1618
  %v1620 = vpop.f32.mrb[0].mxu0
  %v1621 = vpop.f32.mrb[0].mxu0
  %v1622 = vadd.f32 %v1461, %v1621
  %v1623 = vpop.f32.mrb[0].mxu0
  %1624 = vmatprep.mubr.bf16.mxu0 0
  %1625 = vmatmul.mubr.bf16.gmra.mrb[0].mxu0 %v1128
  %v1626 = vpop.f32.mrb[0].mxu0
  %v1627 = vadd.f32 %v1466, %v1626
  %v1628 = vpop.f32.mrb[0].mxu0
  %v1629 = vpop.f32.mrb[0].mxu0
  %v1630 = vadd.f32 %v1469, %v1629
  %v1631 = vpop.f32.mrb[0].mxu0
  %1632 = vmatprep.mubr.bf16.mxu0 0
  %1633 = vmatmul.mubr.bf16.gmra.mrb[0].mxu0 %v1131
  %v1634 = vpop.f32.mrb[0].mxu0
  %v1635 = vadd.f32 %v1474, %v1634
  %v1636 = vpop.f32.mrb[0].mxu0
  %v1637 = vpop.f32.mrb[0].mxu0
  %v1638 = vadd.f32 %v1477, %v1637
  %v1639 = vpop.f32.mrb[0].mxu0
  %1640 = vmatprep.mubr.bf16.mxu0 0
  %1641 = vmatmul.mubr.bf16.gmra.mrb[0].mxu0 %v1134
  %v1642 = vpop.f32.mrb[0].mxu0
  %v1643 = vadd.f32 %v1482, %v1642
  %v1644 = vpop.f32.mrb[0].mxu0
  %v1645 = vpop.f32.mrb[0].mxu0
  %v1646 = vadd.f32 %v1485, %v1645
  %v1647 = vpop.f32.mrb[0].mxu0
  %1648 = vdwg.mxu0
  %v1649 = vld [vmem:[%s2] sm:$0x1]
  %v1650 = vld [vmem:[%s3] sm:$0x1]
  %v1651 = vadd.f32 %v1523, %v1526
  %v1652 = vadd.f32 %v1651, %v1531
  %v1653 = vadd.f32 %v1652, %v1534
  %v1654 = vadd.f32 %v1653, %v1539
  %v1655 = vadd.f32 %v1654, %v1542
  %v1656 = vadd.f32 %v1655, %v1547
  %v1657 = vadd.f32 %v1656, %v1550
  %v1658 = vadd.f32 %v1657, %v1555
  %v1659 = vadd.f32 %v1658, %v1558
  %v1660 = vadd.f32 %v1659, %v1563
  %v1661 = vadd.f32 %v1660, %v1566
  %v1662 = vadd.f32 %v1661, %v1571
  %v1663 = vadd.f32 %v1662, %v1574
  %v1664 = vadd.f32 %v1663, %v1579
  %v1665 = vadd.f32 %v1664, %v1582
  %v1666 = vadd.f32 %v1665, %v1587
  %v1667 = vadd.f32 %v1666, %v1590
  %v1668 = vadd.f32 %v1667, %v1595
  %v1669 = vadd.f32 %v1668, %v1598
  %v1670 = vadd.f32 %v1669, %v1603
  %v1671 = vadd.f32 %v1670, %v1606
  %v1672 = vadd.f32 %v1671, %v1611
  %v1673 = vadd.f32 %v1672, %v1614
  %v1674 = vadd.f32 %v1673, %v1619
  %v1675 = vadd.f32 %v1674, %v1622
  %v1676 = vadd.f32 %v1675, %v1627
  %v1677 = vadd.f32 %v1676, %v1630
  %v1678 = vadd.f32 %v1677, %v1635
  %v1679 = vadd.f32 %v1678, %v1638
  %v1680 = vadd.f32 %v1679, %v1643
  %v1681 = vadd.f32 %v1680, %v1646
  %v1682 = vrot.slane %v1681, 4
  %v1683 = vadd.f32 %v1681, %v1682
  %v1684 = vrot.slane %v1683, 2
  %v1685 = vadd.f32 %v1683, %v1684
  %v1686 = vrot.slane %v1685, 1
  %v1687 = vadd.f32 %v1685, %v1686
  %v1688 = vmul.f32 %v1523, %v1523
  %v1689 = vmul.f32 %v1526, %v1526
  %v1690 = vmul.f32 %v1531, %v1531
  %v1691 = vmul.f32 %v1534, %v1534
  %v1692 = vmul.f32 %v1539, %v1539
  %v1693 = vmul.f32 %v1542, %v1542
  %v1694 = vmul.f32 %v1547, %v1547
  %v1695 = vmul.f32 %v1550, %v1550
  %v1696 = vmul.f32 %v1555, %v1555
  %v1697 = vmul.f32 %v1558, %v1558
  %v1698 = vmul.f32 %v1563, %v1563
  %v1699 = vmul.f32 %v1566, %v1566
  %v1700 = vmul.f32 %v1571, %v1571
  %v1701 = vmul.f32 %v1574, %v1574
  %v1702 = vmul.f32 %v1579, %v1579
  %v1703 = vmul.f32 %v1582, %v1582
  %v1704 = vmul.f32 %v1587, %v1587
  %v1705 = vmul.f32 %v1590, %v1590
  %v1706 = vmul.f32 %v1595, %v1595
  %v1707 = vmul.f32 %v1598, %v1598
  %v1708 = vmul.f32 %v1603, %v1603
  %v1709 = vmul.f32 %v1606, %v1606
  %v1710 = vmul.f32 %v1611, %v1611
  %v1711 = vmul.f32 %v1614, %v1614
  %v1712 = vmul.f32 %v1619, %v1619
  %v1713 = vmul.f32 %v1622, %v1622
  %v1714 = vmul.f32 %v1627, %v1627
  %v1715 = vmul.f32 %v1630, %v1630
  %v1716 = vmul.f32 %v1635, %v1635
  %v1717 = vmul.f32 %v1638, %v1638
  %v1718 = vmul.f32 %v1643, %v1643
  %v1719 = vmul.f32 %v1646, %v1646
  %v1720 = vadd.f32 %v1688, %v1689
  %v1721 = vadd.f32 %v1720, %v1690
  %v1722 = vadd.f32 %v1721, %v1691
  %v1723 = vadd.f32 %v1722, %v1692
  %v1724 = vadd.f32 %v1723, %v1693
  %v1725 = vadd.f32 %v1724, %v1694
  %v1726 = vadd.f32 %v1725, %v1695
  %v1727 = vadd.f32 %v1726, %v1696
  %v1728 = vadd.f32 %v1727, %v1697
  %v1729 = vadd.f32 %v1728, %v1698
  %v1730 = vadd.f32 %v1729, %v1699
  %v1731 = vadd.f32 %v1730, %v1700
  %v1732 = vadd.f32 %v1731, %v1701
  %v1733 = vadd.f32 %v1732, %v1702
  %v1734 = vadd.f32 %v1733, %v1703
  %v1735 = vadd.f32 %v1734, %v1704
  %v1736 = vadd.f32 %v1735, %v1705
  %v1737 = vadd.f32 %v1736, %v1706
  %v1738 = vadd.f32 %v1737, %v1707
  %v1739 = vadd.f32 %v1738, %v1708
  %v1740 = vadd.f32 %v1739, %v1709
  %v1741 = vadd.f32 %v1740, %v1710
  %v1742 = vadd.f32 %v1741, %v1711
  %v1743 = vadd.f32 %v1742, %v1712
  %v1744 = vadd.f32 %v1743, %v1713
  %v1745 = vadd.f32 %v1744, %v1714
  %v1746 = vadd.f32 %v1745, %v1715
  %v1747 = vadd.f32 %v1746, %v1716
  %v1748 = vadd.f32 %v1747, %v1717
  %v1749 = vadd.f32 %v1748, %v1718
  %v1750 = vadd.f32 %v1749, %v1719
  %v1751 = vrot.slane %v1750, 4
  %v1752 = vadd.f32 %v1750, %v1751
  %v1753 = vrot.slane %v1752, 2
  %v1754 = vadd.f32 %v1752, %v1753
  %v1755 = vrot.slane %v1754, 1
  %v1756 = vadd.f32 %v1754, %v1755
  %1757 = vmatprep.subr.mxu0 0.0
  %1758 = vmatpush1.msra.mxu0 %v766
  %1759 = vmatprep.subr.mxu0 0.0
  %1760 = vmatpush1.msra.mxu0 %v767
  %1761 = vmatprep.subr.mxu0 0.0
  %1762 = vmatpush1.msra.mxu0 %v768
  %1763 = vmatprep.subr.mxu0 0.0
  %1764 = vmatpush1.msra.mxu0 %v769
  %1765 = vmatprep.subr.mxu0 0.0
  %1766 = vmatpush1.msra.mxu0 %v770
  %1767 = vmatprep.subr.mxu0 0.0
  %1768 = vmatpush1.msra.mxu0 %v771
  %1769 = vmatprep.subr.mxu0 0.0
  %1770 = vmatpush1.msra.mxu0 %v772
  %1771 = vmatprep.subr.mxu0 0.0
  %1772 = vmatpush1.msra.mxu0 %v773
  %1773 = vmatprep.subr.mxu0 0.0
  %1774 = vmatpush1.msra.mxu0 %v774
  %1775 = vmatprep.subr.mxu0 0.0
  %1776 = vmatpush1.msra.mxu0 %v775
  %1777 = vmatprep.subr.mxu0 0.0
  %1778 = vmatpush1.msra.mxu0 %v776
  %1779 = vmatprep.subr.mxu0 0.0
  %1780 = vmatpush1.msra.mxu0 %v777
  %1781 = vmatprep.subr.mxu0 0.0
  %1782 = vmatpush1.msra.mxu0 %v778
  %1783 = vmatprep.subr.mxu0 0.0
  %1784 = vmatpush1.msra.mxu0 %v779
  %1785 = vmatprep.subr.mxu0 0.0
  %1786 = vmatpush1.msra.mxu0 %v780
  %1787 = vmatprep.subr.mxu0 0.0
  %1788 = vmatpush1.msra.mxu0 %v781
  %1789 = vmatprep.subr.mxu0 0.0
  %1790 = vmatpush1.msra.mxu0 0.0
  %1791 = vmatprep.subr.mxu0 0.0
  %1792 = vmatpush1.msra.mxu0 0.0
  %1793 = vmatprep.subr.mxu0 0.0
  %1794 = vmatpush1.msra.mxu0 0.0
  %1795 = vmatprep.subr.mxu0 0.0
  %1796 = vmatpush1.msra.mxu0 0.0
  %1797 = vmatprep.subr.mxu0 0.0
  %1798 = vmatpush1.msra.mxu0 0.0
  %1799 = vmatprep.subr.mxu0 0.0
  %1800 = vmatpush1.msra.mxu0 0.0
  %1801 = vmatprep.subr.mxu0 0.0
  %1802 = vmatpush1.msra.mxu0 0.0
  %1803 = vmatprep.subr.mxu0 0.0
  %1804 = vmatpush1.msra.mxu0 0.0
  %1805 = vmatprep.subr.mxu0 0.0
  %1806 = vmatpush1.msra.mxu0 0.0
  %1807 = vmatprep.subr.mxu0 0.0
  %1808 = vmatpush1.msra.mxu0 0.0
  %1809 = vmatprep.subr.mxu0 0.0
  %1810 = vmatpush1.msra.mxu0 0.0
  %1811 = vmatprep.subr.mxu0 0.0
  %1812 = vmatpush1.msra.mxu0 0.0
  %1813 = vmatprep.subr.mxu0 0.0
  %1814 = vmatpush1.msra.mxu0 0.0
  %1815 = vmatprep.subr.mxu0 0.0
  %1816 = vmatpush1.msra.mxu0 0.0
  %1817 = vmatprep.subr.mxu0 0.0
  %1818 = vmatpush1.msra.mxu0 0.0
  %1819 = vmatprep.subr.mxu0 0.0
  %1820 = vmatpush1.msra.mxu0 0.0
  %1821 = vmatprep.mubr.f32.mxu0 0.0
  %1822 = vmatmul.mubr.f32.gmra.mrb[0].mxu0 %v1687
  %v1823 = vpop.f32.mrb[0].mxu0
  %v1824 = vadd.f32 0.0, %v1823
  %v1825 = vpop.f32.mrb[0].mxu0
  %1826 = vdwg.mxu0
  %v1827 = vmul.f32 %v1824, 0.00024414063
  %1828 = vmatprep.subr.mxu0 0.0
  %1829 = vmatpush1.msra.mxu0 %v766
  %1830 = vmatprep.subr.mxu0 0.0
  %1831 = vmatpush1.msra.mxu0 %v767
  %1832 = vmatprep.subr.mxu0 0.0
  %1833 = vmatpush1.msra.mxu0 %v768
  %1834 = vmatprep.subr.mxu0 0.0
  %1835 = vmatpush1.msra.mxu0 %v769
  %1836 = vmatprep.subr.mxu0 0.0
  %1837 = vmatpush1.msra.mxu0 %v770
  %1838 = vmatprep.subr.mxu0 0.0
  %1839 = vmatpush1.msra.mxu0 %v771
  %1840 = vmatprep.subr.mxu0 0.0
  %1841 = vmatpush1.msra.mxu0 %v772
  %1842 = vmatprep.subr.mxu0 0.0
  %1843 = vmatpush1.msra.mxu0 %v773
  %1844 = vmatprep.subr.mxu0 0.0
  %1845 = vmatpush1.msra.mxu0 %v774
  %1846 = vmatprep.subr.mxu0 0.0
  %1847 = vmatpush1.msra.mxu0 %v775
  %1848 = vmatprep.subr.mxu0 0.0
  %1849 = vmatpush1.msra.mxu0 %v776
  %1850 = vmatprep.subr.mxu0 0.0
  %1851 = vmatpush1.msra.mxu0 %v777
  %1852 = vmatprep.subr.mxu0 0.0
  %1853 = vmatpush1.msra.mxu0 %v778
  %1854 = vmatprep.subr.mxu0 0.0
  %1855 = vmatpush1.msra.mxu0 %v779
  %1856 = vmatprep.subr.mxu0 0.0
  %1857 = vmatpush1.msra.mxu0 %v780
  %1858 = vmatprep.subr.mxu0 0.0
  %1859 = vmatpush1.msra.mxu0 %v781
  %1860 = vmatprep.subr.mxu0 0.0
  %1861 = vmatpush1.msra.mxu0 0.0
  %1862 = vmatprep.subr.mxu0 0.0
  %1863 = vmatpush1.msra.mxu0 0.0
  %1864 = vmatprep.subr.mxu0 0.0
  %1865 = vmatpush1.msra.mxu0 0.0
  %1866 = vmatprep.subr.mxu0 0.0
  %1867 = vmatpush1.msra.mxu0 0.0
  %1868 = vmatprep.subr.mxu0 0.0
  %1869 = vmatpush1.msra.mxu0 0.0
  %1870 = vmatprep.subr.mxu0 0.0
  %1871 = vmatpush1.msra.mxu0 0.0
  %1872 = vmatprep.subr.mxu0 0.0
  %1873 = vmatpush1.msra.mxu0 0.0
  %1874 = vmatprep.subr.mxu0 0.0
  %1875 = vmatpush1.msra.mxu0 0.0
  %1876 = vmatprep.subr.mxu0 0.0
  %1877 = vmatpush1.msra.mxu0 0.0
  %1878 = vmatprep.subr.mxu0 0.0
  %1879 = vmatpush1.msra.mxu0 0.0
  %1880 = vmatprep.subr.mxu0 0.0
  %1881 = vmatpush1.msra.mxu0 0.0
  %1882 = vmatprep.subr.mxu0 0.0
  %1883 = vmatpush1.msra.mxu0 0.0
  %1884 = vmatprep.subr.mxu0 0.0
  %1885 = vmatpush1.msra.mxu0 0.0
  %1886 = vmatprep.subr.mxu0 0.0
  %1887 = vmatpush1.msra.mxu0 0.0
  %1888 = vmatprep.subr.mxu0 0.0
  %1889 = vmatpush1.msra.mxu0 0.0
  %1890 = vmatprep.subr.mxu0 0.0
  %1891 = vmatpush1.msra.mxu0 0.0
  %1892 = vmatprep.mubr.f32.mxu0 0.0
  %1893 = vmatmul.mubr.f32.gmra.mrb[0].mxu0 %v1756
  %v1894 = vpop.f32.mrb[0].mxu0
  %v1895 = vadd.f32 0.0, %v1894
  %v1896 = vpop.f32.mrb[0].mxu0
  %1897 = vdwg.mxu0
  %v1898 = vmul.f32 %v1895, 0.00024414063
  %v1899 = vmul.f32 %v1827, %v1827
  %v1900 = vsub.f32 %v1898, %v1899
  %v1901 = vadd.f32 %v1900, 1e-05
  %v1902 = vrsqrt.pop %v1901
  %v1903 = vmul.f32 %v1649, %v1902
  %v1904 = vmul.f32 %v1827, %v1903
  %v1905 = vsub.f32 %v1650, %v1904
  %vm1906 = vcmask 64512
  %v1908 = vsel %vm1906, %v1903, 0
  %1910 = vmatprep.subr.mxu0 0.0
  %1911 = vmatpush1.msra.mxu0 %v796
  %1912 = vmatprep.subr.mxu0 0.0
  %1913 = vmatpush1.msra.mxu0 0.0
  %1914 = vmatprep.subr.mxu0 0.0
  %1915 = vmatpush1.msra.mxu0 0.0
  %1916 = vmatprep.subr.mxu0 0.0
  %1917 = vmatpush1.msra.mxu0 0.0
  %1918 = vmatprep.subr.mxu0 0.0
  %1919 = vmatpush1.msra.mxu0 0.0
  %1920 = vmatprep.subr.mxu0 0.0
  %1921 = vmatpush1.msra.mxu0 0.0
  %1922 = vmatprep.subr.mxu0 0.0
  %1923 = vmatpush1.msra.mxu0 0.0
  %1924 = vmatprep.subr.mxu0 0.0
  %1925 = vmatpush1.msra.mxu0 0.0
  %1926 = vmatprep.subr.mxu0 0.0
  %1927 = vmatpush1.msra.mxu0 0.0
  %1928 = vmatprep.subr.mxu0 0.0
  %1929 = vmatpush1.msra.mxu0 0.0
  %1930 = vmatprep.subr.mxu0 0.0
  %1931 = vmatpush1.msra.mxu0 0.0
  %1932 = vmatprep.subr.mxu0 0.0
  %1933 = vmatpush1.msra.mxu0 0.0
  %1934 = vmatprep.subr.mxu0 0.0
  %1935 = vmatpush1.msra.mxu0 0.0
  %1936 = vmatprep.subr.mxu0 0.0
  %1937 = vmatpush1.msra.mxu0 0.0
  %1938 = vmatprep.subr.mxu0 0.0
  %1939 = vmatpush1.msra.mxu0 0.0
  %1940 = vmatprep.subr.mxu0 0.0
  %1941 = vmatpush1.msra.mxu0 0.0
  %1942 = vmatprep.subr.mxu0 0.0
  %1943 = vmatpush1.msra.mxu0 0.0
  %1944 = vmatprep.subr.mxu0 0.0
  %1945 = vmatpush1.msra.mxu0 0.0
  %1946 = vmatprep.subr.mxu0 0.0
  %1947 = vmatpush1.msra.mxu0 0.0
  %1948 = vmatprep.subr.mxu0 0.0
  %1949 = vmatpush1.msra.mxu0 0.0
  %1950 = vmatprep.subr.mxu0 0.0
  %1951 = vmatpush1.msra.mxu0 0.0
  %1952 = vmatprep.subr.mxu0 0.0
  %1953 = vmatpush1.msra.mxu0 0.0
  %1954 = vmatprep.subr.mxu0 0.0
  %1955 = vmatpush1.msra.mxu0 0.0
  %1956 = vmatprep.subr.mxu0 0.0
  %1957 = vmatpush1.msra.mxu0 0.0
  %1958 = vmatprep.subr.mxu0 0.0
  %1959 = vmatpush1.msra.mxu0 0.0
  %1960 = vmatprep.subr.mxu0 0.0
  %1961 = vmatpush1.msra.mxu0 0.0
  %1962 = vmatprep.subr.mxu0 0.0
  %1963 = vmatpush1.msra.mxu0 0.0
  %1964 = vmatprep.subr.mxu0 0.0
  %1965 = vmatpush1.msra.mxu0 0.0
  %1966 = vmatprep.subr.mxu0 0.0
  %1967 = vmatpush1.msra.mxu0 0.0
  %1968 = vmatprep.subr.mxu0 0.0
  %1969 = vmatpush1.msra.mxu0 0.0
  %1970 = vmatprep.subr.mxu0 0.0
  %1971 = vmatpush1.msra.mxu0 0.0
  %1972 = vmatprep.subr.mxu0 0.0
  %1973 = vmatpush1.msra.mxu0 0.0
  %1974 = vmatprep.mubr.f32.mxu0 0.0
  %1975 = vmatmul.mubr.f32.gmra.mrb[0].mxu0 %v1908
  %v1976 = vpop.f32.mrb[0].mxu0
  %v1977 = vadd.f32 0.0, %v1976
  %v1978 = vpop.f32.mrb[0].mxu0
  %1979 = vdwg.mxu0
  %v1981 = vsel %vm1906, %v1905, 0
  %1983 = vmatprep.subr.mxu0 0.0
  %1984 = vmatpush1.msra.mxu0 %v796
  %1985 = vmatprep.subr.mxu0 0.0
  %1986 = vmatpush1.msra.mxu0 0.0
  %1987 = vmatprep.subr.mxu0 0.0
  %1988 = vmatpush1.msra.mxu0 0.0
  %1989 = vmatprep.subr.mxu0 0.0
  %1990 = vmatpush1.msra.mxu0 0.0
  %1991 = vmatprep.subr.mxu0 0.0
  %1992 = vmatpush1.msra.mxu0 0.0
  %1993 = vmatprep.subr.mxu0 0.0
  %1994 = vmatpush1.msra.mxu0 0.0
  %1995 = vmatprep.subr.mxu0 0.0
  %1996 = vmatpush1.msra.mxu0 0.0
  %1997 = vmatprep.subr.mxu0 0.0
  %1998 = vmatpush1.msra.mxu0 0.0
  %1999 = vmatprep.subr.mxu0 0.0
  %2000 = vmatpush1.msra.mxu0 0.0
  %2001 = vmatprep.subr.mxu0 0.0
  %2002 = vmatpush1.msra.mxu0 0.0
  %2003 = vmatprep.subr.mxu0 0.0
  %2004 = vmatpush1.msra.mxu0 0.0
  %2005 = vmatprep.subr.mxu0 0.0
  %2006 = vmatpush1.msra.mxu0 0.0
  %2007 = vmatprep.subr.mxu0 0.0
  %2008 = vmatpush1.msra.mxu0 0.0
  %2009 = vmatprep.subr.mxu0 0.0
  %2010 = vmatpush1.msra.mxu0 0.0
  %2011 = vmatprep.subr.mxu0 0.0
  %2012 = vmatpush1.msra.mxu0 0.0
  %2013 = vmatprep.subr.mxu0 0.0
  %2014 = vmatpush1.msra.mxu0 0.0
  %2015 = vmatprep.subr.mxu0 0.0
  %2016 = vmatpush1.msra.mxu0 0.0
  %2017 = vmatprep.subr.mxu0 0.0
  %2018 = vmatpush1.msra.mxu0 0.0
  %2019 = vmatprep.subr.mxu0 0.0
  %2020 = vmatpush1.msra.mxu0 0.0
  %2021 = vmatprep.subr.mxu0 0.0
  %2022 = vmatpush1.msra.mxu0 0.0
  %2023 = vmatprep.subr.mxu0 0.0
  %2024 = vmatpush1.msra.mxu0 0.0
  %2025 = vmatprep.subr.mxu0 0.0
  %2026 = vmatpush1.msra.mxu0 0.0
  %2027 = vmatprep.subr.mxu0 0.0
  %2028 = vmatpush1.msra.mxu0 0.0
  %2029 = vmatprep.subr.mxu0 0.0
  %2030 = vmatpush1.msra.mxu0 0.0
  %2031 = vmatprep.subr.mxu0 0.0
  %2032 = vmatpush1.msra.mxu0 0.0
  %2033 = vmatprep.subr.mxu0 0.0
  %2034 = vmatpush1.msra.mxu0 0.0
  %2035 = vmatprep.subr.mxu0 0.0
  %2036 = vmatpush1.msra.mxu0 0.0
  %2037 = vmatprep.subr.mxu0 0.0
  %2038 = vmatpush1.msra.mxu0 0.0
  %2039 = vmatprep.subr.mxu0 0.0
  %2040 = vmatpush1.msra.mxu0 0.0
  %2041 = vmatprep.subr.mxu0 0.0
  %2042 = vmatpush1.msra.mxu0 0.0
  %2043 = vmatprep.subr.mxu0 0.0
  %2044 = vmatpush1.msra.mxu0 0.0
  %2045 = vmatprep.subr.mxu0 0.0
  %2046 = vmatpush1.msra.mxu0 0.0
  %2047 = vmatprep.mubr.f32.mxu0 0.0
  %2048 = vmatmul.mubr.f32.gmra.mrb[0].mxu0 %v1981
  %v2049 = vpop.f32.mrb[0].mxu0
  %v2050 = vadd.f32 0.0, %v2049
  %v2051 = vpop.f32.mrb[0].mxu0
  %2052 = vdwg.mxu0
  %v2053 = vlaneseq
  %v2054 = vshrl.u32 %v2053, 7
  %v2055 = vsub.s32 0, %v2054
  %v2056 = vrot.slane %v1977, %v2055
  %v2057 = vmul.f32 %v1523, %v2056
  %v2058 = vmul.f32 %v1526, %v2056
  %v2059 = vmul.f32 %v1531, %v2056
  %v2060 = vmul.f32 %v1534, %v2056
  %v2061 = vmul.f32 %v1539, %v2056
  %v2062 = vmul.f32 %v1542, %v2056
  %v2063 = vmul.f32 %v1547, %v2056
  %v2064 = vmul.f32 %v1550, %v2056
  %v2065 = vmul.f32 %v1555, %v2056
  %v2066 = vmul.f32 %v1558, %v2056
  %v2067 = vmul.f32 %v1563, %v2056
  %v2068 = vmul.f32 %v1566, %v2056
  %v2069 = vmul.f32 %v1571, %v2056
  %v2070 = vmul.f32 %v1574, %v2056
  %v2071 = vmul.f32 %v1579, %v2056
  %v2072 = vmul.f32 %v1582, %v2056
  %v2073 = vmul.f32 %v1587, %v2056
  %v2074 = vmul.f32 %v1590, %v2056
  %v2075 = vmul.f32 %v1595, %v2056
  %v2076 = vmul.f32 %v1598, %v2056
  %v2077 = vmul.f32 %v1603, %v2056
  %v2078 = vmul.f32 %v1606, %v2056
  %v2079 = vmul.f32 %v1611, %v2056
  %v2080 = vmul.f32 %v1614, %v2056
  %v2081 = vmul.f32 %v1619, %v2056
  %v2082 = vmul.f32 %v1622, %v2056
  %v2083 = vmul.f32 %v1627, %v2056
  %v2084 = vmul.f32 %v1630, %v2056
  %v2085 = vmul.f32 %v1635, %v2056
  %v2086 = vmul.f32 %v1638, %v2056
  %v2087 = vmul.f32 %v1643, %v2056
  %v2088 = vmul.f32 %v1646, %v2056
  %v2089 = vlaneseq
  %v2090 = vshrl.u32 %v2089, 7
  %v2091 = vsub.s32 0, %v2090
  %v2092 = vrot.slane %v2050, %v2091
  %v2093 = vadd.f32 %v2057, %v2092
  %v2094 = vadd.f32 %v2058, %v2092
  %v2095 = vadd.f32 %v2059, %v2092
  %v2096 = vadd.f32 %v2060, %v2092
  %v2097 = vadd.f32 %v2061, %v2092
  %v2098 = vadd.f32 %v2062, %v2092
  %v2099 = vadd.f32 %v2063, %v2092
  %v2100 = vadd.f32 %v2064, %v2092
  %v2101 = vadd.f32 %v2065, %v2092
  %v2102 = vadd.f32 %v2066, %v2092
  %v2103 = vadd.f32 %v2067, %v2092
  %v2104 = vadd.f32 %v2068, %v2092
  %v2105 = vadd.f32 %v2069, %v2092
  %v2106 = vadd.f32 %v2070, %v2092
  %v2107 = vadd.f32 %v2071, %v2092
  %v2108 = vadd.f32 %v2072, %v2092
  %v2109 = vadd.f32 %v2073, %v2092
  %v2110 = vadd.f32 %v2074, %v2092
  %v2111 = vadd.f32 %v2075, %v2092
  %v2112 = vadd.f32 %v2076, %v2092
  %v2113 = vadd.f32 %v2077, %v2092
  %v2114 = vadd.f32 %v2078, %v2092
  %v2115 = vadd.f32 %v2079, %v2092
  %v2116 = vadd.f32 %v2080, %v2092
  %v2117 = vadd.f32 %v2081, %v2092
  %v2118 = vadd.f32 %v2082, %v2092
  %v2119 = vadd.f32 %v2083, %v2092
  %v2120 = vadd.f32 %v2084, %v2092
  %v2121 = vadd.f32 %v2085, %v2092
  %v2122 = vadd.f32 %v2086, %v2092
  %v2123 = vadd.f32 %v2087, %v2092
  %v2124 = vadd.f32 %v2088, %v2092
  %v2125 = vmax.f32 %v2093, 0.0
  %v2126 = vmax.f32 %v2094, 0.0
  %v2127 = vmax.f32 %v2095, 0.0
  %v2128 = vmax.f32 %v2096, 0.0
  %v2129 = vmax.f32 %v2097, 0.0
  %v2130 = vmax.f32 %v2098, 0.0
  %v2131 = vmax.f32 %v2099, 0.0
  %v2132 = vmax.f32 %v2100, 0.0
  %v2133 = vmax.f32 %v2101, 0.0
  %v2134 = vmax.f32 %v2102, 0.0
  %v2135 = vmax.f32 %v2103, 0.0
  %v2136 = vmax.f32 %v2104, 0.0
  %v2137 = vmax.f32 %v2105, 0.0
  %v2138 = vmax.f32 %v2106, 0.0
  %v2139 = vmax.f32 %v2107, 0.0
  %v2140 = vmax.f32 %v2108, 0.0
  %v2141 = vmax.f32 %v2109, 0.0
  %v2142 = vmax.f32 %v2110, 0.0
  %v2143 = vmax.f32 %v2111, 0.0
  %v2144 = vmax.f32 %v2112, 0.0
  %v2145 = vmax.f32 %v2113, 0.0
  %v2146 = vmax.f32 %v2114, 0.0
  %v2147 = vmax.f32 %v2115, 0.0
  %v2148 = vmax.f32 %v2116, 0.0
  %v2149 = vmax.f32 %v2117, 0.0
  %v2150 = vmax.f32 %v2118, 0.0
  %v2151 = vmax.f32 %v2119, 0.0
  %v2152 = vmax.f32 %v2120, 0.0
  %v2153 = vmax.f32 %v2121, 0.0
  %v2154 = vmax.f32 %v2122, 0.0
  %v2155 = vmax.f32 %v2123, 0.0
  %v2156 = vmax.f32 %v2124, 0.0
  %v2157 = vrot.slane %v2125, 7
  %v2158 = vrot.slane %v2126, 7
  %v2159 = vrot.slane %v2127, 7
  %v2160 = vrot.slane %v2128, 7
  %v2161 = vrot.slane %v2129, 7
  %v2162 = vrot.slane %v2130, 7
  %v2163 = vrot.slane %v2131, 7
  %v2164 = vrot.slane %v2132, 7
  %v2165 = vrot.slane %v2133, 7
  %v2166 = vrot.slane %v2134, 7
  %v2167 = vrot.slane %v2135, 7
  %v2168 = vrot.slane %v2136, 7
  %v2169 = vrot.slane %v2137, 7
  %v2170 = vrot.slane %v2138, 7
  %v2171 = vrot.slane %v2139, 7
  %v2172 = vrot.slane %v2140, 7
  %v2173 = vrot.slane %v2141, 7
  %v2174 = vrot.slane %v2142, 7
  %v2175 = vrot.slane %v2143, 7
  %v2176 = vrot.slane %v2144, 7
  %v2177 = vrot.slane %v2145, 7
  %v2178 = vrot.slane %v2146, 7
  %v2179 = vrot.slane %v2147, 7
  %v2180 = vrot.slane %v2148, 7
  %v2181 = vrot.slane %v2149, 7
  %v2182 = vrot.slane %v2150, 7
  %v2183 = vrot.slane %v2151, 7
  %v2184 = vrot.slane %v2152, 7
  %v2185 = vrot.slane %v2153, 7
  %v2186 = vrot.slane %v2154, 7
  %v2187 = vrot.slane %v2155, 7
  %v2188 = vrot.slane %v2156, 7
  %v2189 = vsel %vm829, %v2187, %v2188
  %v2190 = vsel %vm829, %v2186, %v2187
  %v2191 = vsel %vm829, %v2185, %v2186
  %v2192 = vsel %vm829, %v2184, %v2185
  %v2193 = vsel %vm829, %v2183, %v2184
  %v2194 = vsel %vm829, %v2182, %v2183
  %v2195 = vsel %vm829, %v2181, %v2182
  %v2196 = vsel %vm829, %v2180, %v2181
  %v2197 = vsel %vm829, %v2179, %v2180
  %v2198 = vsel %vm829, %v2178, %v2179
  %v2199 = vsel %vm829, %v2177, %v2178
  %v2200 = vsel %vm829, %v2176, %v2177
  %v2201 = vsel %vm829, %v2175, %v2176
  %v2202 = vsel %vm829, %v2174, %v2175
  %v2203 = vsel %vm829, %v2173, %v2174
  %v2204 = vsel %vm829, %v2172, %v2173
  %v2205 = vsel %vm829, %v2171, %v2172
  %v2206 = vsel %vm829, %v2170, %v2171
  %v2207 = vsel %vm829, %v2169, %v2170
  %v2208 = vsel %vm829, %v2168, %v2169
  %v2209 = vsel %vm829, %v2167, %v2168
  %v2210 = vsel %vm829, %v2166, %v2167
  %v2211 = vsel %vm829, %v2165, %v2166
  %v2212 = vsel %vm829, %v2164, %v2165
  %v2213 = vsel %vm829, %v2163, %v2164
  %v2214 = vsel %vm829, %v2162, %v2163
  %v2215 = vsel %vm829, %v2161, %v2162
  %v2216 = vsel %vm829, %v2160, %v2161
  %v2217 = vsel %vm829, %v2159, %v2160
  %v2218 = vsel %vm829, %v2158, %v2159
  %v2219 = vsel %vm829, %v2157, %v2158
  %v2220 = vsel %vm829, %v2188, %v2157
  %v2221 = vsel %vm476, 0.0, %v2220
  %v2222 = vsel %vm477, 0.0, %v2219
  %v2223 = vsel %vm478, 0.0, %v2218
  %v2224 = vsel %vm479, 0.0, %v2217
  %v2225 = vsel %vm480, 0.0, %v2216
  %v2226 = vsel %vm481, 0.0, %v2215
  %v2227 = vsel %vm482, 0.0, %v2214
  %v2228 = vsel %vm483, 0.0, %v2213
  %v2229 = vsel %vm484, 0.0, %v2212
  %v2230 = vsel %vm485, 0.0, %v2211
  %v2231 = vsel %vm486, 0.0, %v2210
  %v2232 = vsel %vm487, 0.0, %v2209
  %v2233 = vsel %vm488, 0.0, %v2208
  %v2234 = vsel %vm489, 0.0, %v2207
  %v2235 = vsel %vm490, 0.0, %v2206
  %v2236 = vsel %vm491, 0.0, %v2205
  %v2237 = vsel %vm492, 0.0, %v2204
  %v2238 = vsel %vm493, 0.0, %v2203
  %v2239 = vsel %vm494, 0.0, %v2202
  %v2240 = vsel %vm495, 0.0, %v2201
  %v2241 = vsel %vm496, 0.0, %v2200
  %v2242 = vsel %vm497, 0.0, %v2199
  %v2243 = vsel %vm498, 0.0, %v2198
  %v2244 = vsel %vm499, 0.0, %v2197
  %v2245 = vsel %vm500, 0.0, %v2196
  %v2246 = vsel %vm501, 0.0, %v2195
  %v2247 = vsel %vm502, 0.0, %v2194
  %v2248 = vsel %vm503, 0.0, %v2193
  %v2249 = vsel %vm504, 0.0, %v2192
  %v2250 = vsel %vm505, 0.0, %v2191
  %v2251 = vsel %vm506, 0.0, %v2190
  %v2252 = vsel %vm507, 0.0, %v2189
  %v2253 = vrot.slane %v2125, 1
  %v2254 = vrot.slane %v2126, 1
  %v2255 = vrot.slane %v2127, 1
  %v2256 = vrot.slane %v2128, 1
  %v2257 = vrot.slane %v2129, 1
  %v2258 = vrot.slane %v2130, 1
  %v2259 = vrot.slane %v2131, 1
  %v2260 = vrot.slane %v2132, 1
  %v2261 = vrot.slane %v2133, 1
  %v2262 = vrot.slane %v2134, 1
  %v2263 = vrot.slane %v2135, 1
  %v2264 = vrot.slane %v2136, 1
  %v2265 = vrot.slane %v2137, 1
  %v2266 = vrot.slane %v2138, 1
  %v2267 = vrot.slane %v2139, 1
  %v2268 = vrot.slane %v2140, 1
  %v2269 = vrot.slane %v2141, 1
  %v2270 = vrot.slane %v2142, 1
  %v2271 = vrot.slane %v2143, 1
  %v2272 = vrot.slane %v2144, 1
  %v2273 = vrot.slane %v2145, 1
  %v2274 = vrot.slane %v2146, 1
  %v2275 = vrot.slane %v2147, 1
  %v2276 = vrot.slane %v2148, 1
  %v2277 = vrot.slane %v2149, 1
  %v2278 = vrot.slane %v2150, 1
  %v2279 = vrot.slane %v2151, 1
  %v2280 = vrot.slane %v2152, 1
  %v2281 = vrot.slane %v2153, 1
  %v2282 = vrot.slane %v2154, 1
  %v2283 = vrot.slane %v2155, 1
  %v2284 = vrot.slane %v2156, 1
  %v2285 = vsel %vm926, %v2283, %v2284
  %v2286 = vsel %vm926, %v2282, %v2283
  %v2287 = vsel %vm926, %v2281, %v2282
  %v2288 = vsel %vm926, %v2280, %v2281
  %v2289 = vsel %vm926, %v2279, %v2280
  %v2290 = vsel %vm926, %v2278, %v2279
  %v2291 = vsel %vm926, %v2277, %v2278
  %v2292 = vsel %vm926, %v2276, %v2277
  %v2293 = vsel %vm926, %v2275, %v2276
  %v2294 = vsel %vm926, %v2274, %v2275
  %v2295 = vsel %vm926, %v2273, %v2274
  %v2296 = vsel %vm926, %v2272, %v2273
  %v2297 = vsel %vm926, %v2271, %v2272
  %v2298 = vsel %vm926, %v2270, %v2271
  %v2299 = vsel %vm926, %v2269, %v2270
  %v2300 = vsel %vm926, %v2268, %v2269
  %v2301 = vsel %vm926, %v2267, %v2268
  %v2302 = vsel %vm926, %v2266, %v2267
  %v2303 = vsel %vm926, %v2265, %v2266
  %v2304 = vsel %vm926, %v2264, %v2265
  %v2305 = vsel %vm926, %v2263, %v2264
  %v2306 = vsel %vm926, %v2262, %v2263
  %v2307 = vsel %vm926, %v2261, %v2262
  %v2308 = vsel %vm926, %v2260, %v2261
  %v2309 = vsel %vm926, %v2259, %v2260
  %v2310 = vsel %vm926, %v2258, %v2259
  %v2311 = vsel %vm926, %v2257, %v2258
  %v2312 = vsel %vm926, %v2256, %v2257
  %v2313 = vsel %vm926, %v2255, %v2256
  %v2314 = vsel %vm926, %v2254, %v2255
  %v2315 = vsel %vm926, %v2253, %v2254
  %v2316 = vsel %vm926, %v2284, %v2253
  %v2317 = vsel %vm508, 0.0, %v2315
  %v2318 = vsel %vm509, 0.0, %v2314
  %v2319 = vsel %vm510, 0.0, %v2313
  %v2320 = vsel %vm511, 0.0, %v2312
  %v2321 = vsel %vm512, 0.0, %v2311
  %v2322 = vsel %vm513, 0.0, %v2310
  %v2323 = vsel %vm514, 0.0, %v2309
  %v2324 = vsel %vm515, 0.0, %v2308
  %v2325 = vsel %vm516, 0.0, %v2307
  %v2326 = vsel %vm517, 0.0, %v2306
  %v2327 = vsel %vm518, 0.0, %v2305
  %v2328 = vsel %vm519, 0.0, %v2304
  %v2329 = vsel %vm520, 0.0, %v2303
  %v2330 = vsel %vm521, 0.0, %v2302
  %v2331 = vsel %vm522, 0.0, %v2301
  %v2332 = vsel %vm523, 0.0, %v2300
  %v2333 = vsel %vm524, 0.0, %v2299
  %v2334 = vsel %vm525, 0.0, %v2298
  %v2335 = vsel %vm526, 0.0, %v2297
  %v2336 = vsel %vm527, 0.0, %v2296
  %v2337 = vsel %vm528, 0.0, %v2295
  %v2338 = vsel %vm529, 0.0, %v2294
  %v2339 = vsel %vm530, 0.0, %v2293
  %v2340 = vsel %vm531, 0.0, %v2292
  %v2341 = vsel %vm532, 0.0, %v2291
  %v2342 = vsel %vm533, 0.0, %v2290
  %v2343 = vsel %vm534, 0.0, %v2289
  %v2344 = vsel %vm535, 0.0, %v2288
  %v2345 = vsel %vm536, 0.0, %v2287
  %v2346 = vsel %vm537, 0.0, %v2286
  %v2347 = vsel %vm538, 0.0, %v2285
  %v2348 = vsel %vm539, 0.0, %v2316
  %v2349 = vpack.c.bf16 %v2222, %v2221
  %v2350 = vpack.c.bf16 %v2224, %v2223
  %v2351 = vpack.c.bf16 %v2226, %v2225
  %v2352 = vpack.c.bf16 %v2228, %v2227
  %v2353 = vpack.c.bf16 %v2230, %v2229
  %v2354 = vpack.c.bf16 %v2232, %v2231
  %v2355 = vpack.c.bf16 %v2234, %v2233
  %v2356 = vpack.c.bf16 %v2236, %v2235
  %v2357 = vpack.c.bf16 %v2238, %v2237
  %v2358 = vpack.c.bf16 %v2240, %v2239
  %v2359 = vpack.c.bf16 %v2242, %v2241
  %v2360 = vpack.c.bf16 %v2244, %v2243
  %v2361 = vpack.c.bf16 %v2246, %v2245
  %v2362 = vpack.c.bf16 %v2248, %v2247
  %v2363 = vpack.c.bf16 %v2250, %v2249
  %v2364 = vpack.c.bf16 %v2252, %v2251
  %2365 = vst [vmem:[#allocation2] sm:$0xff] %v2349
  %2366 = vst [vmem:[#allocation2 + $0x18] sm:$0xff] %v2350
  %2367 = vst [vmem:[#allocation2 + $0x30] sm:$0xff] %v2351
  %2368 = vst [vmem:[#allocation2 + $0x48] sm:$0xff] %v2352
  %2369 = vst [vmem:[#allocation2 + $0x60] sm:$0xff] %v2353
  %2370 = vst [vmem:[#allocation2 + $0x78] sm:$0xff] %v2354
  %2371 = vst [vmem:[#allocation2 + $0x90] sm:$0xff] %v2355
  %2372 = vst [vmem:[#allocation2 + $0xa8] sm:$0xff] %v2356
  %2373 = vst [vmem:[#allocation2 + $0xc0] sm:$0xff] %v2357
  %2374 = vst [vmem:[#allocation2 + $0xd8] sm:$0xff] %v2358
  %2375 = vst [vmem:[#allocation2 + $0xf0] sm:$0xff] %v2359
  %2376 = vst [vmem:[#allocation2 + $0x108] sm:$0xff] %v2360
  %2377 = vst [vmem:[#allocation2 + $0x120] sm:$0xff] %v2361
  %2378 = vst [vmem:[#allocation2 + $0x138] sm:$0xff] %v2362
  %2379 = vst [vmem:[#allocation2 + $0x150] sm:$0xff] %v2363
  %2380 = vst [vmem:[#allocation2 + $0x168] sm:$0xff] %v2364
  %v2381 = vpack.c.bf16 %v2126, %v2125
  %v2382 = vpack.c.bf16 %v2128, %v2127
  %v2383 = vpack.c.bf16 %v2130, %v2129
  %v2384 = vpack.c.bf16 %v2132, %v2131
  %v2385 = vpack.c.bf16 %v2134, %v2133
  %v2386 = vpack.c.bf16 %v2136, %v2135
  %v2387 = vpack.c.bf16 %v2138, %v2137
  %v2388 = vpack.c.bf16 %v2140, %v2139
  %v2389 = vpack.c.bf16 %v2142, %v2141
  %v2390 = vpack.c.bf16 %v2144, %v2143
  %v2391 = vpack.c.bf16 %v2146, %v2145
  %v2392 = vpack.c.bf16 %v2148, %v2147
  %v2393 = vpack.c.bf16 %v2150, %v2149
  %v2394 = vpack.c.bf16 %v2152, %v2151
  %v2395 = vpack.c.bf16 %v2154, %v2153
  %v2396 = vpack.c.bf16 %v2156, %v2155
  %2397 = vst [vmem:[#allocation2 + $0x8] sm:$0xff] %v2381
  %2398 = vst [vmem:[#allocation2 + $0x20] sm:$0xff] %v2382
  %2399 = vst [vmem:[#allocation2 + $0x38] sm:$0xff] %v2383
  %2400 = vst [vmem:[#allocation2 + $0x50] sm:$0xff] %v2384
  %2401 = vst [vmem:[#allocation2 + $0x68] sm:$0xff] %v2385
  %2402 = vst [vmem:[#allocation2 + $0x80] sm:$0xff] %v2386
  %2403 = vst [vmem:[#allocation2 + $0x98] sm:$0xff] %v2387
  %2404 = vst [vmem:[#allocation2 + $0xb0] sm:$0xff] %v2388
  %2405 = vst [vmem:[#allocation2 + $0xc8] sm:$0xff] %v2389
  %2406 = vst [vmem:[#allocation2 + $0xe0] sm:$0xff] %v2390
  %2407 = vst [vmem:[#allocation2 + $0xf8] sm:$0xff] %v2391
  %2408 = vst [vmem:[#allocation2 + $0x110] sm:$0xff] %v2392
  %2409 = vst [vmem:[#allocation2 + $0x128] sm:$0xff] %v2393
  %2410 = vst [vmem:[#allocation2 + $0x140] sm:$0xff] %v2394
  %2411 = vst [vmem:[#allocation2 + $0x158] sm:$0xff] %v2395
  %2412 = vst [vmem:[#allocation2 + $0x170] sm:$0xff] %v2396
  %v2413 = vpack.c.bf16 %v2318, %v2317
  %v2414 = vpack.c.bf16 %v2320, %v2319
  %v2415 = vpack.c.bf16 %v2322, %v2321
  %v2416 = vpack.c.bf16 %v2324, %v2323
  %v2417 = vpack.c.bf16 %v2326, %v2325
  %v2418 = vpack.c.bf16 %v2328, %v2327
  %v2419 = vpack.c.bf16 %v2330, %v2329
  %v2420 = vpack.c.bf16 %v2332, %v2331
  %v2421 = vpack.c.bf16 %v2334, %v2333
  %v2422 = vpack.c.bf16 %v2336, %v2335
  %v2423 = vpack.c.bf16 %v2338, %v2337
  %v2424 = vpack.c.bf16 %v2340, %v2339
  %v2425 = vpack.c.bf16 %v2342, %v2341
  %v2426 = vpack.c.bf16 %v2344, %v2343
  %v2427 = vpack.c.bf16 %v2346, %v2345
  %v2428 = vpack.c.bf16 %v2348, %v2347
  %2429 = vst [vmem:[#allocation2 + $0x10] sm:$0xff] %v2413
  %2430 = vst [vmem:[#allocation2 + $0x28] sm:$0xff] %v2414
  %2431 = vst [vmem:[#allocation2 + $0x40] sm:$0xff] %v2415
  %2432 = vst [vmem:[#allocation2 + $0x58] sm:$0xff] %v2416
  %2433 = vst [vmem:[#allocation2 + $0x70] sm:$0xff] %v2417
  %2434 = vst [vmem:[#allocation2 + $0x88] sm:$0xff] %v2418
  %2435 = vst [vmem:[#allocation2 + $0xa0] sm:$0xff] %v2419
  %2436 = vst [vmem:[#allocation2 + $0xb8] sm:$0xff] %v2420
  %2437 = vst [vmem:[#allocation2 + $0xd0] sm:$0xff] %v2421
  %2438 = vst [vmem:[#allocation2 + $0xe8] sm:$0xff] %v2422
  %2439 = vst [vmem:[#allocation2 + $0x100] sm:$0xff] %v2423
  %2440 = vst [vmem:[#allocation2 + $0x118] sm:$0xff] %v2424
  %2441 = vst [vmem:[#allocation2 + $0x130] sm:$0xff] %v2425
  %2442 = vst [vmem:[#allocation2 + $0x148] sm:$0xff] %v2426
  %2443 = vst [vmem:[#allocation2 + $0x160] sm:$0xff] %v2427
  %2444 = vst [vmem:[#allocation2 + $0x178] sm:$0xff] %v2428
  %v2445 = vld [vmem:[#allocation2] sm:$0xff]
  %v2446 = vld [vmem:[#allocation2 + $0x8] sm:$0xff]
  %v2447 = vld [vmem:[#allocation2 + $0x10] sm:$0xff]
  %v2448 = vld [vmem:[#allocation2 + $0x18] sm:$0xff]
  %v2449 = vld [vmem:[#allocation2 + $0x20] sm:$0xff]
  %v2450 = vld [vmem:[#allocation2 + $0x28] sm:$0xff]
  %v2451 = vld [vmem:[#allocation2 + $0x30] sm:$0xff]
  %v2452 = vld [vmem:[#allocation2 + $0x38] sm:$0xff]
  %v2453 = vld [vmem:[#allocation2 + $0x40] sm:$0xff]
  %v2454 = vld [vmem:[#allocation2 + $0x48] sm:$0xff]
  %v2455 = vld [vmem:[#allocation2 + $0x50] sm:$0xff]
  %v2456 = vld [vmem:[#allocation2 + $0x58] sm:$0xff]
  %v2457 = vld [vmem:[#allocation2 + $0x60] sm:$0xff]
  %v2458 = vld [vmem:[#allocation2 + $0x68] sm:$0xff]
  %v2459 = vld [vmem:[#allocation2 + $0x70] sm:$0xff]
  %v2460 = vld [vmem:[#allocation2 + $0x78] sm:$0xff]
  %v2461 = vld [vmem:[#allocation2 + $0x80] sm:$0xff]
  %v2462 = vld [vmem:[#allocation2 + $0x88] sm:$0xff]
  %v2463 = vld [vmem:[#allocation2 + $0x90] sm:$0xff]
  %v2464 = vld [vmem:[#allocation2 + $0x98] sm:$0xff]
  %v2465 = vld [vmem:[#allocation2 + $0xa0] sm:$0xff]
  %v2466 = vld [vmem:[#allocation2 + $0xa8] sm:$0xff]
  %v2467 = vld [vmem:[#allocation2 + $0xb0] sm:$0xff]
  %v2468 = vld [vmem:[#allocation2 + $0xb8] sm:$0xff]
  %v2469 = vld [vmem:[#allocation2 + $0xc0] sm:$0xff]
  %v2470 = vld [vmem:[#allocation2 + $0xc8] sm:$0xff]
  %v2471 = vld [vmem:[#allocation2 + $0xd0] sm:$0xff]
  %v2472 = vld [vmem:[#allocation2 + $0xd8] sm:$0xff]
  %v2473 = vld [vmem:[#allocation2 + $0xe0] sm:$0xff]
  %v2474 = vld [vmem:[#allocation2 + $0xe8] sm:$0xff]
  %v2475 = vld [vmem:[#allocation2 + $0xf0] sm:$0xff]
  %v2476 = vld [vmem:[#allocation2 + $0xf8] sm:$0xff]
  %v2477 = vld [vmem:[#allocation2 + $0x100] sm:$0xff]
  %v2478 = vld [vmem:[#allocation2 + $0x108] sm:$0xff]
  %v2479 = vld [vmem:[#allocation2 + $0x110] sm:$0xff]
  %v2480 = vld [vmem:[#allocation2 + $0x118] sm:$0xff]
  %v2481 = vld [vmem:[#allocation2 + $0x120] sm:$0xff]
  %v2482 = vld [vmem:[#allocation2 + $0x128] sm:$0xff]
  %v2483 = vld [vmem:[#allocation2 + $0x130] sm:$0xff]
  %v2484 = vld [vmem:[#allocation2 + $0x138] sm:$0xff]
  %v2485 = vld [vmem:[#allocation2 + $0x140] sm:$0xff]
  %v2486 = vld [vmem:[#allocation2 + $0x148] sm:$0xff]
  %v2487 = vld [vmem:[#allocation2 + $0x150] sm:$0xff]
  %v2488 = vld [vmem:[#allocation2 + $0x158] sm:$0xff]
  %v2489 = vld [vmem:[#allocation2 + $0x160] sm:$0xff]
  %v2490 = vld [vmem:[#allocation2 + $0x168] sm:$0xff]
  %v2491 = vld [vmem:[#allocation2 + $0x170] sm:$0xff]
  %v2492 = vld [vmem:[#allocation2 + $0x178] sm:$0xff]
  %v2493 = vld [vmem:[%s4] sm:$0xf]
  %v2494 = vld [vmem:[%s4 + $0x4] sm:$0xf]
  %v2495 = vld [vmem:[%s4 + $0x8] sm:$0xf]
  %v2496 = vld [vmem:[%s4 + $0xc] sm:$0xf]
  %v2497 = vld [vmem:[%s4 + $0x10] sm:$0xf]
  %v2498 = vld [vmem:[%s4 + $0x14] sm:$0xf]
  %v2499 = vld [vmem:[%s4 + $0x18] sm:$0xf]
  %v2500 = vld [vmem:[%s4 + $0x1c] sm:$0xf]
  %v2501 = vld [vmem:[%s4 + $0x20] sm:$0xf]
  %v2502 = vld [vmem:[%s4 + $0x24] sm:$0xf]
  %v2503 = vld [vmem:[%s4 + $0x28] sm:$0xf]
  %v2504 = vld [vmem:[%s4 + $0x2c] sm:$0xf]
  %v2505 = vld [vmem:[%s4 + $0x30] sm:$0xf]
  %v2506 = vld [vmem:[%s4 + $0x34] sm:$0xf]
  %v2507 = vld [vmem:[%s4 + $0x38] sm:$0xf]
  %v2508 = vld [vmem:[%s4 + $0x3c] sm:$0xf]
  %v2509 = vld [vmem:[%s4 + $0x40] sm:$0xf]
  %v2510 = vld [vmem:[%s4 + $0x44] sm:$0xf]
  %v2511 = vld [vmem:[%s4 + $0x48] sm:$0xf]
  %v2512 = vld [vmem:[%s4 + $0x4c] sm:$0xf]
  %v2513 = vld [vmem:[%s4 + $0x50] sm:$0xf]
  %v2514 = vld [vmem:[%s4 + $0x54] sm:$0xf]
  %v2515 = vld [vmem:[%s4 + $0x58] sm:$0xf]
  %v2516 = vld [vmem:[%s4 + $0x5c] sm:$0xf]
  %v2517 = vld [vmem:[%s4 + $0x60] sm:$0xf]
  %v2518 = vld [vmem:[%s4 + $0x64] sm:$0xf]
  %v2519 = vld [vmem:[%s4 + $0x68] sm:$0xf]
  %v2520 = vld [vmem:[%s4 + $0x6c] sm:$0xf]
  %v2521 = vld [vmem:[%s4 + $0x70] sm:$0xf]
  %v2522 = vld [vmem:[%s4 + $0x74] sm:$0xf]
  %v2523 = vld [vmem:[%s4 + $0x78] sm:$0xf]
  %v2524 = vld [vmem:[%s4 + $0x7c] sm:$0xf]
  %v2525 = vld [vmem:[%s4 + $0x80] sm:$0xf]
  %v2526 = vld [vmem:[%s4 + $0x84] sm:$0xf]
  %v2527 = vld [vmem:[%s4 + $0x88] sm:$0xf]
  %v2528 = vld [vmem:[%s4 + $0x8c] sm:$0xf]
  %v2529 = vld [vmem:[%s4 + $0x90] sm:$0xf]
  %v2530 = vld [vmem:[%s4 + $0x94] sm:$0xf]
  %v2531 = vld [vmem:[%s4 + $0x98] sm:$0xf]
  %v2532 = vld [vmem:[%s4 + $0x9c] sm:$0xf]
  %v2533 = vld [vmem:[%s4 + $0xa0] sm:$0xf]
  %v2534 = vld [vmem:[%s4 + $0xa4] sm:$0xf]
  %v2535 = vld [vmem:[%s4 + $0xa8] sm:$0xf]
  %v2536 = vld [vmem:[%s4 + $0xac] sm:$0xf]
  %v2537 = vld [vmem:[%s4 + $0xb0] sm:$0xf]
  %v2538 = vld [vmem:[%s4 + $0xb4] sm:$0xf]
  %v2539 = vld [vmem:[%s4 + $0xb8] sm:$0xf]
  %v2540 = vld [vmem:[%s4 + $0xbc] sm:$0xf]
  %v2589 = vunpack.c.l.b16 %v2493
  %v2590 = vunpack.c.l.b16 %v2494
  %v2591 = vunpack.c.l.b16 %v2495
  %v2592 = vunpack.c.l.b16 %v2496
  %v2593 = vunpack.c.l.b16 %v2497
  %v2594 = vunpack.c.l.b16 %v2498
  %v2595 = vunpack.c.l.b16 %v2499
  %v2596 = vunpack.c.l.b16 %v2500
  %v2597 = vunpack.c.l.b16 %v2501
  %v2598 = vunpack.c.l.b16 %v2502
  %v2599 = vunpack.c.l.b16 %v2503
  %v2600 = vunpack.c.l.b16 %v2504
  %v2601 = vunpack.c.l.b16 %v2505
  %v2602 = vunpack.c.l.b16 %v2506
  %v2603 = vunpack.c.l.b16 %v2507
  %v2604 = vunpack.c.l.b16 %v2508
  %v2605 = vunpack.c.l.b16 %v2509
  %v2606 = vunpack.c.l.b16 %v2510
  %v2607 = vunpack.c.l.b16 %v2511
  %v2608 = vunpack.c.l.b16 %v2512
  %v2609 = vunpack.c.l.b16 %v2513
  %v2610 = vunpack.c.l.b16 %v2514
  %v2611 = vunpack.c.l.b16 %v2515
  %v2612 = vunpack.c.l.b16 %v2516
  %v2613 = vunpack.c.l.b16 %v2517
  %v2614 = vunpack.c.l.b16 %v2518
  %v2615 = vunpack.c.l.b16 %v2519
  %v2616 = vunpack.c.l.b16 %v2520
  %v2617 = vunpack.c.l.b16 %v2521
  %v2618 = vunpack.c.l.b16 %v2522
  %v2619 = vunpack.c.l.b16 %v2523
  %v2620 = vunpack.c.l.b16 %v2524
  %v2621 = vunpack.c.l.b16 %v2525
  %v2622 = vunpack.c.l.b16 %v2526
  %v2623 = vunpack.c.l.b16 %v2527
  %v2624 = vunpack.c.l.b16 %v2528
  %v2625 = vunpack.c.l.b16 %v2529
  %v2626 = vunpack.c.l.b16 %v2530
  %v2627 = vunpack.c.l.b16 %v2531
  %v2628 = vunpack.c.l.b16 %v2532
  %v2629 = vunpack.c.l.b16 %v2533
  %v2630 = vunpack.c.l.b16 %v2534
  %v2631 = vunpack.c.l.b16 %v2535
  %v2632 = vunpack.c.l.b16 %v2536
  %v2633 = vunpack.c.l.b16 %v2537
  %v2634 = vunpack.c.l.b16 %v2538
  %v2635 = vunpack.c.l.b16 %v2539
  %v2636 = vunpack.c.l.b16 %v2540
  %v2637 = vpack.c.b16 %v2590, %v2589
  %v2638 = vpack.c.b16 %v2592, %v2591
  %v2639 = vpack.c.b16 %v2594, %v2593
  %v2640 = vpack.c.b16 %v2596, %v2595
  %v2641 = vpack.c.b16 %v2598, %v2597
  %v2642 = vpack.c.b16 %v2600, %v2599
  %v2643 = vpack.c.b16 %v2602, %v2601
  %v2644 = vpack.c.b16 %v2604, %v2603
  %v2645 = vpack.c.b16 %v2606, %v2605
  %v2646 = vpack.c.b16 %v2608, %v2607
  %v2647 = vpack.c.b16 %v2610, %v2609
  %v2648 = vpack.c.b16 %v2612, %v2611
  %v2649 = vpack.c.b16 %v2614, %v2613
  %v2650 = vpack.c.b16 %v2616, %v2615
  %v2651 = vpack.c.b16 %v2618, %v2617
  %v2652 = vpack.c.b16 %v2620, %v2619
  %v2653 = vpack.c.b16 %v2622, %v2621
  %v2654 = vpack.c.b16 %v2624, %v2623
  %v2655 = vpack.c.b16 %v2626, %v2625
  %v2656 = vpack.c.b16 %v2628, %v2627
  %v2657 = vpack.c.b16 %v2630, %v2629
  %v2658 = vpack.c.b16 %v2632, %v2631
  %v2659 = vpack.c.b16 %v2634, %v2633
  %v2660 = vpack.c.b16 %v2636, %v2635
  %2685 = vmatprep.subr.bf16.mxu0 0
  %2686 = vmatpush1.bf16.msra.mxu0 %v2637
  %2687 = vmatprep.subr.bf16.mxu0 0
  %2688 = vmatpush1.bf16.msra.mxu0 %v2638
  %2689 = vmatprep.subr.bf16.mxu0 0
  %2690 = vmatpush1.bf16.msra.mxu0 %v2639
  %2691 = vmatprep.subr.bf16.mxu0 0
  %2692 = vmatpush1.bf16.msra.mxu0 %v2640
  %2693 = vmatprep.subr.bf16.mxu0 0
  %2694 = vmatpush1.bf16.msra.mxu0 %v2641
  %2695 = vmatprep.subr.bf16.mxu0 0
  %2696 = vmatpush1.bf16.msra.mxu0 %v2642
  %2697 = vmatprep.subr.bf16.mxu0 0
  %2698 = vmatpush1.bf16.msra.mxu0 %v2643
  %2699 = vmatprep.subr.bf16.mxu0 0
  %2700 = vmatpush1.bf16.msra.mxu0 %v2644
  %2701 = vmatprep.subr.bf16.mxu0 0
  %2702 = vmatpush1.bf16.msra.mxu0 %v2645
  %2703 = vmatprep.subr.bf16.mxu0 0
  %2704 = vmatpush1.bf16.msra.mxu0 %v2646
  %2705 = vmatprep.subr.bf16.mxu0 0
  %2706 = vmatpush1.bf16.msra.mxu0 %v2647
  %2707 = vmatprep.subr.bf16.mxu0 0
  %2708 = vmatpush1.bf16.msra.mxu0 %v2648
  %2709 = vmatprep.subr.bf16.mxu0 0
  %2710 = vmatpush1.bf16.msra.mxu0 %v2649
  %2711 = vmatprep.subr.bf16.mxu0 0
  %2712 = vmatpush1.bf16.msra.mxu0 %v2650
  %2713 = vmatprep.subr.bf16.mxu0 0
  %2714 = vmatpush1.bf16.msra.mxu0 %v2651
  %2715 = vmatprep.subr.bf16.mxu0 0
  %2716 = vmatpush1.bf16.msra.mxu0 %v2652
  %2717 = vmatprep.mubr.bf16.mxu0 %v2446
  %2718 = vmatmul.mubr.bf16.gmra.mrb[0].mxu0 %v2445
  %v2719 = vpop.f32.mrb[0].mxu0
  %v2720 = vadd.f32 0.0, %v2719
  %v2721 = vpop.f32.mrb[0].mxu0
  %v2722 = vpop.f32.mrb[0].mxu0
  %v2723 = vadd.f32 0.0, %v2722
  %v2724 = vpop.f32.mrb[0].mxu0
  %2725 = vmatprep.mubr.bf16.mxu0 %v2449
  %2726 = vmatmul.mubr.bf16.gmra.mrb[0].mxu0 %v2448
  %v2727 = vpop.f32.mrb[0].mxu0
  %v2728 = vadd.f32 0.0, %v2727
  %v2729 = vpop.f32.mrb[0].mxu0
  %v2730 = vpop.f32.mrb[0].mxu0
  %v2731 = vadd.f32 0.0, %v2730
  %v2732 = vpop.f32.mrb[0].mxu0
  %2733 = vmatprep.mubr.bf16.mxu0 %v2452
  %2734 = vmatmul.mubr.bf16.gmra.mrb[0].mxu0 %v2451
  %v2735 = vpop.f32.mrb[0].mxu0
  %v2736 = vadd.f32 0.0, %v2735
  %v2737 = vpop.f32.mrb[0].mxu0
  %v2738 = vpop.f32.mrb[0].mxu0
  %v2739 = vadd.f32 0.0, %v2738
  %v2740 = vpop.f32.mrb[0].mxu0
  %2741 = vmatprep.mubr.bf16.mxu0 %v2455
  %2742 = vmatmul.mubr.bf16.gmra.mrb[0].mxu0 %v2454
  %v2743 = vpop.f32.mrb[0].mxu0
  %v2744 = vadd.f32 0.0, %v2743
  %v2745 = vpop.f32.mrb[0].mxu0
  %v2746 = vpop.f32.mrb[0].mxu0
  %v2747 = vadd.f32 0.0, %v2746
  %v2748 = vpop.f32.mrb[0].mxu0
  %2749 = vmatprep.mubr.bf16.mxu0 %v2458
  %2750 = vmatmul.mubr.bf16.gmra.mrb[0].mxu0 %v2457
  %v2751 = vpop.f32.mrb[0].mxu0
  %v2752 = vadd.f32 0.0, %v2751
  %v2753 = vpop.f32.mrb[0].mxu0
  %v2754 = vpop.f32.mrb[0].mxu0
  %v2755 = vadd.f32 0.0, %v2754
  %v2756 = vpop.f32.mrb[0].mxu0
  %2757 = vmatprep.mubr.bf16.mxu0 %v2461
  %2758 = vmatmul.mubr.bf16.gmra.mrb[0].mxu0 %v2460
  %v2759 = vpop.f32.mrb[0].mxu0
  %v2760 = vadd.f32 0.0, %v2759
  %v2761 = vpop.f32.mrb[0].mxu0
  %v2762 = vpop.f32.mrb[0].mxu0
  %v2763 = vadd.f32 0.0, %v2762
  %v2764 = vpop.f32.mrb[0].mxu0
  %2765 = vmatprep.mubr.bf16.mxu0 %v2464
  %2766 = vmatmul.mubr.bf16.gmra.mrb[0].mxu0 %v2463
  %v2767 = vpop.f32.mrb[0].mxu0
  %v2768 = vadd.f32 0.0, %v2767
  %v2769 = vpop.f32.mrb[0].mxu0
  %v2770 = vpop.f32.mrb[0].mxu0
  %v2771 = vadd.f32 0.0, %v2770
  %v2772 = vpop.f32.mrb[0].mxu0
  %2773 = vmatprep.mubr.bf16.mxu0 %v2467
  %2774 = vmatmul.mubr.bf16.gmra.mrb[0].mxu0 %v2466
  %v2775 = vpop.f32.mrb[0].mxu0
  %v2776 = vadd.f32 0.0, %v2775
  %v2777 = vpop.f32.mrb[0].mxu0
  %v2778 = vpop.f32.mrb[0].mxu0
  %v2779 = vadd.f32 0.0, %v2778
  %v2780 = vpop.f32.mrb[0].mxu0
  %2781 = vmatprep.mubr.bf16.mxu0 %v2470
  %2782 = vmatmul.mubr.bf16.gmra.mrb[0].mxu0 %v2469
  %v2783 = vpop.f32.mrb[0].mxu0
  %v2784 = vadd.f32 0.0, %v2783
  %v2785 = vpop.f32.mrb[0].mxu0
  %v2786 = vpop.f32.mrb[0].mxu0
  %v2787 = vadd.f32 0.0, %v2786
  %v2788 = vpop.f32.mrb[0].mxu0
  %2789 = vmatprep.mubr.bf16.mxu0 %v2473
  %2790 = vmatmul.mubr.bf16.gmra.mrb[0].mxu0 %v2472
  %v2791 = vpop.f32.mrb[0].mxu0
  %v2792 = vadd.f32 0.0, %v2791
  %v2793 = vpop.f32.mrb[0].mxu0
  %v2794 = vpop.f32.mrb[0].mxu0
  %v2795 = vadd.f32 0.0, %v2794
  %v2796 = vpop.f32.mrb[0].mxu0
  %2797 = vmatprep.mubr.bf16.mxu0 %v2476
  %2798 = vmatmul.mubr.bf16.gmra.mrb[0].mxu0 %v2475
  %v2799 = vpop.f32.mrb[0].mxu0
  %v2800 = vadd.f32 0.0, %v2799
  %v2801 = vpop.f32.mrb[0].mxu0
  %v2802 = vpop.f32.mrb[0].mxu0
  %v2803 = vadd.f32 0.0, %v2802
  %v2804 = vpop.f32.mrb[0].mxu0
  %2805 = vmatprep.mubr.bf16.mxu0 %v2479
  %2806 = vmatmul.mubr.bf16.gmra.mrb[0].mxu0 %v2478
  %v2807 = vpop.f32.mrb[0].mxu0
  %v2808 = vadd.f32 0.0, %v2807
  %v2809 = vpop.f32.mrb[0].mxu0
  %v2810 = vpop.f32.mrb[0].mxu0
  %v2811 = vadd.f32 0.0, %v2810
  %v2812 = vpop.f32.mrb[0].mxu0
  %2813 = vmatprep.mubr.bf16.mxu0 %v2482
  %2814 = vmatmul.mubr.bf16.gmra.mrb[0].mxu0 %v2481
  %v2815 = vpop.f32.mrb[0].mxu0
  %v2816 = vadd.f32 0.0, %v2815
  %v2817 = vpop.f32.mrb[0].mxu0
  %v2818 = vpop.f32.mrb[0].mxu0
  %v2819 = vadd.f32 0.0, %v2818
  %v2820 = vpop.f32.mrb[0].mxu0
  %2821 = vmatprep.mubr.bf16.mxu0 %v2485
  %2822 = vmatmul.mubr.bf16.gmra.mrb[0].mxu0 %v2484
  %v2823 = vpop.f32.mrb[0].mxu0
  %v2824 = vadd.f32 0.0, %v2823
  %v2825 = vpop.f32.mrb[0].mxu0
  %v2826 = vpop.f32.mrb[0].mxu0
  %v2827 = vadd.f32 0.0, %v2826
  %v2828 = vpop.f32.mrb[0].mxu0
  %2829 = vmatprep.mubr.bf16.mxu0 %v2488
  %2830 = vmatmul.mubr.bf16.gmra.mrb[0].mxu0 %v2487
  %v2831 = vpop.f32.mrb[0].mxu0
  %v2832 = vadd.f32 0.0, %v2831
  %v2833 = vpop.f32.mrb[0].mxu0
  %v2834 = vpop.f32.mrb[0].mxu0
  %v2835 = vadd.f32 0.0, %v2834
  %v2836 = vpop.f32.mrb[0].mxu0
  %2837 = vmatprep.mubr.bf16.mxu0 %v2491
  %2838 = vmatmul.mubr.bf16.gmra.mrb[0].mxu0 %v2490
  %v2839 = vpop.f32.mrb[0].mxu0
  %v2840 = vadd.f32 0.0, %v2839
  %v2841 = vpop.f32.mrb[0].mxu0
  %v2842 = vpop.f32.mrb[0].mxu0
  %v2843 = vadd.f32 0.0, %v2842
  %v2844 = vpop.f32.mrb[0].mxu0
  %2845 = vdwg.mxu0
  %2846 = vmatprep.subr.bf16.mxu0 0
  %2847 = vmatpush1.bf16.msra.mxu0 %v2653
  %2848 = vmatprep.subr.bf16.mxu0 0
  %2849 = vmatpush1.bf16.msra.mxu0 %v2654
  %2850 = vmatprep.subr.bf16.mxu0 0
  %2851 = vmatpush1.bf16.msra.mxu0 %v2655
  %2852 = vmatprep.subr.bf16.mxu0 0
  %2853 = vmatpush1.bf16.msra.mxu0 %v2656
  %2854 = vmatprep.subr.bf16.mxu0 0
  %2855 = vmatpush1.bf16.msra.mxu0 %v2657
  %2856 = vmatprep.subr.bf16.mxu0 0
  %2857 = vmatpush1.bf16.msra.mxu0 %v2658
  %2858 = vmatprep.subr.bf16.mxu0 0
  %2859 = vmatpush1.bf16.msra.mxu0 %v2659
  %2860 = vmatprep.subr.bf16.mxu0 0
  %2861 = vmatpush1.bf16.msra.mxu0 %v2660
  %2862 = vmatprep.subr.bf16.mxu0 0
  %2863 = vmatpush1.bf16.msra.mxu0 0
  %2864 = vmatprep.subr.bf16.mxu0 0
  %2865 = vmatpush1.bf16.msra.mxu0 0
  %2866 = vmatprep.subr.bf16.mxu0 0
  %2867 = vmatpush1.bf16.msra.mxu0 0
  %2868 = vmatprep.subr.bf16.mxu0 0
  %2869 = vmatpush1.bf16.msra.mxu0 0
  %2870 = vmatprep.subr.bf16.mxu0 0
  %2871 = vmatpush1.bf16.msra.mxu0 0
  %2872 = vmatprep.subr.bf16.mxu0 0
  %2873 = vmatpush1.bf16.msra.mxu0 0
  %2874 = vmatprep.subr.bf16.mxu0 0
  %2875 = vmatpush1.bf16.msra.mxu0 0
  %2876 = vmatprep.subr.bf16.mxu0 0
  %2877 = vmatpush1.bf16.msra.mxu0 0
  %2878 = vmatprep.mubr.bf16.mxu0 0
  %2879 = vmatmul.mubr.bf16.gmra.mrb[0].mxu0 %v2447
  %v2880 = vpop.f32.mrb[0].mxu0
  %v2881 = vadd.f32 %v2720, %v2880
  %v2882 = vpop.f32.mrb[0].mxu0
  %v2883 = vpop.f32.mrb[0].mxu0
  %v2884 = vadd.f32 %v2723, %v2883
  %v2885 = vpop.f32.mrb[0].mxu0
  %2886 = vmatprep.mubr.bf16.mxu0 0
  %2887 = vmatmul.mubr.bf16.gmra.mrb[0].mxu0 %v2450
  %v2888 = vpop.f32.mrb[0].mxu0
  %v2889 = vadd.f32 %v2728, %v2888
  %v2890 = vpop.f32.mrb[0].mxu0
  %v2891 = vpop.f32.mrb[0].mxu0
  %v2892 = vadd.f32 %v2731, %v2891
  %v2893 = vpop.f32.mrb[0].mxu0
  %2894 = vmatprep.mubr.bf16.mxu0 0
  %2895 = vmatmul.mubr.bf16.gmra.mrb[0].mxu0 %v2453
  %v2896 = vpop.f32.mrb[0].mxu0
  %v2897 = vadd.f32 %v2736, %v2896
  %v2898 = vpop.f32.mrb[0].mxu0
  %v2899 = vpop.f32.mrb[0].mxu0
  %v2900 = vadd.f32 %v2739, %v2899
  %v2901 = vpop.f32.mrb[0].mxu0
  %2902 = vmatprep.mubr.bf16.mxu0 0
  %2903 = vmatmul.mubr.bf16.gmra.mrb[0].mxu0 %v2456
  %v2904 = vpop.f32.mrb[0].mxu0
  %v2905 = vadd.f32 %v2744, %v2904
  %v2906 = vpop.f32.mrb[0].mxu0
  %v2907 = vpop.f32.mrb[0].mxu0
  %v2908 = vadd.f32 %v2747, %v2907
  %v2909 = vpop.f32.mrb[0].mxu0
  %2910 = vmatprep.mubr.bf16.mxu0 0
  %2911 = vmatmul.mubr.bf16.gmra.mrb[0].mxu0 %v2459
  %v2912 = vpop.f32.mrb[0].mxu0
  %v2913 = vadd.f32 %v2752, %v2912
  %v2914 = vpop.f32.mrb[0].mxu0
  %v2915 = vpop.f32.mrb[0].mxu0
  %v2916 = vadd.f32 %v2755, %v2915
  %v2917 = vpop.f32.mrb[0].mxu0
  %2918 = vmatprep.mubr.bf16.mxu0 0
  %2919 = vmatmul.mubr.bf16.gmra.mrb[0].mxu0 %v2462
  %v2920 = vpop.f32.mrb[0].mxu0
  %v2921 = vadd.f32 %v2760, %v2920
  %v2922 = vpop.f32.mrb[0].mxu0
  %v2923 = vpop.f32.mrb[0].mxu0
  %v2924 = vadd.f32 %v2763, %v2923
  %v2925 = vpop.f32.mrb[0].mxu0
  %2926 = vmatprep.mubr.bf16.mxu0 0
  %2927 = vmatmul.mubr.bf16.gmra.mrb[0].mxu0 %v2465
  %v2928 = vpop.f32.mrb[0].mxu0
  %v2929 = vadd.f32 %v2768, %v2928
  %v2930 = vpop.f32.mrb[0].mxu0
  %v2931 = vpop.f32.mrb[0].mxu0
  %v2932 = vadd.f32 %v2771, %v2931
  %v2933 = vpop.f32.mrb[0].mxu0
  %2934 = vmatprep.mubr.bf16.mxu0 0
  %2935 = vmatmul.mubr.bf16.gmra.mrb[0].mxu0 %v2468
  %v2936 = vpop.f32.mrb[0].mxu0
  %v2937 = vadd.f32 %v2776, %v2936
  %v2938 = vpop.f32.mrb[0].mxu0
  %v2939 = vpop.f32.mrb[0].mxu0
  %v2940 = vadd.f32 %v2779, %v2939
  %v2941 = vpop.f32.mrb[0].mxu0
  %2942 = vmatprep.mubr.bf16.mxu0 0
  %2943 = vmatmul.mubr.bf16.gmra.mrb[0].mxu0 %v2471
  %v2944 = vpop.f32.mrb[0].mxu0
  %v2945 = vadd.f32 %v2784, %v2944
  %v2946 = vpop.f32.mrb[0].mxu0
  %v2947 = vpop.f32.mrb[0].mxu0
  %v2948 = vadd.f32 %v2787, %v2947
  %v2949 = vpop.f32.mrb[0].mxu0
  %2950 = vmatprep.mubr.bf16.mxu0 0
  %2951 = vmatmul.mubr.bf16.gmra.mrb[0].mxu0 %v2474
  %v2952 = vpop.f32.mrb[0].mxu0
  %v2953 = vadd.f32 %v2792, %v2952
  %v2954 = vpop.f32.mrb[0].mxu0
  %v2955 = vpop.f32.mrb[0].mxu0
  %v2956 = vadd.f32 %v2795, %v2955
  %v2957 = vpop.f32.mrb[0].mxu0
  %2958 = vmatprep.mubr.bf16.mxu0 0
  %2959 = vmatmul.mubr.bf16.gmra.mrb[0].mxu0 %v2477
  %v2960 = vpop.f32.mrb[0].mxu0
  %v2961 = vadd.f32 %v2800, %v2960
  %v2962 = vpop.f32.mrb[0].mxu0
  %v2963 = vpop.f32.mrb[0].mxu0
  %v2964 = vadd.f32 %v2803, %v2963
  %v2965 = vpop.f32.mrb[0].mxu0
  %2966 = vmatprep.mubr.bf16.mxu0 0
  %2967 = vmatmul.mubr.bf16.gmra.mrb[0].mxu0 %v2480
  %v2968 = vpop.f32.mrb[0].mxu0
  %v2969 = vadd.f32 %v2808, %v2968
  %v2970 = vpop.f32.mrb[0].mxu0
  %v2971 = vpop.f32.mrb[0].mxu0
  %v2972 = vadd.f32 %v2811, %v2971
  %v2973 = vpop.f32.mrb[0].mxu0
  %2974 = vmatprep.mubr.bf16.mxu0 0
  %2975 = vmatmul.mubr.bf16.gmra.mrb[0].mxu0 %v2483
  %v2976 = vpop.f32.mrb[0].mxu0
  %v2977 = vadd.f32 %v2816, %v2976
  %v2978 = vpop.f32.mrb[0].mxu0
  %v2979 = vpop.f32.mrb[0].mxu0
  %v2980 = vadd.f32 %v2819, %v2979
  %v2981 = vpop.f32.mrb[0].mxu0
  %2982 = vmatprep.mubr.bf16.mxu0 0
  %2983 = vmatmul.mubr.bf16.gmra.mrb[0].mxu0 %v2486
  %v2984 = vpop.f32.mrb[0].mxu0
  %v2985 = vadd.f32 %v2824, %v2984
  %v2986 = vpop.f32.mrb[0].mxu0
  %v2987 = vpop.f32.mrb[0].mxu0
  %v2988 = vadd.f32 %v2827, %v2987
  %v2989 = vpop.f32.mrb[0].mxu0
  %2990 = vmatprep.mubr.bf16.mxu0 0
  %2991 = vmatmul.mubr.bf16.gmra.mrb[0].mxu0 %v2489
  %v2992 = vpop.f32.mrb[0].mxu0
  %v2993 = vadd.f32 %v2832, %v2992
  %v2994 = vpop.f32.mrb[0].mxu0
  %v2995 = vpop.f32.mrb[0].mxu0
  %v2996 = vadd.f32 %v2835, %v2995
  %v2997 = vpop.f32.mrb[0].mxu0
  %2998 = vmatprep.mubr.bf16.mxu0 0
  %2999 = vmatmul.mubr.bf16.gmra.mrb[0].mxu0 %v2492
  %v3000 = vpop.f32.mrb[0].mxu0
  %v3001 = vadd.f32 %v2840, %v3000
  %v3002 = vpop.f32.mrb[0].mxu0
  %v3003 = vpop.f32.mrb[0].mxu0
  %v3004 = vadd.f32 %v2843, %v3003
  %v3005 = vpop.f32.mrb[0].mxu0
  %3006 = vdwg.mxu0
  %v3007 = vld [vmem:[%s5] sm:$0x1]
  %v3008 = vld [vmem:[%s6] sm:$0x1]
  %v3009 = vadd.f32 %v2881, %v2884
  %v3010 = vadd.f32 %v3009, %v2889
  %v3011 = vadd.f32 %v3010, %v2892
  %v3012 = vadd.f32 %v3011, %v2897
  %v3013 = vadd.f32 %v3012, %v2900
  %v3014 = vadd.f32 %v3013, %v2905
  %v3015 = vadd.f32 %v3014, %v2908
  %v3016 = vadd.f32 %v3015, %v2913
  %v3017 = vadd.f32 %v3016, %v2916
  %v3018 = vadd.f32 %v3017, %v2921
  %v3019 = vadd.f32 %v3018, %v2924
  %v3020 = vadd.f32 %v3019, %v2929
  %v3021 = vadd.f32 %v3020, %v2932
  %v3022 = vadd.f32 %v3021, %v2937
  %v3023 = vadd.f32 %v3022, %v2940
  %v3024 = vadd.f32 %v3023, %v2945
  %v3025 = vadd.f32 %v3024, %v2948
  %v3026 = vadd.f32 %v3025, %v2953
  %v3027 = vadd.f32 %v3026, %v2956
  %v3028 = vadd.f32 %v3027, %v2961
  %v3029 = vadd.f32 %v3028, %v2964
  %v3030 = vadd.f32 %v3029, %v2969
  %v3031 = vadd.f32 %v3030, %v2972
  %v3032 = vadd.f32 %v3031, %v2977
  %v3033 = vadd.f32 %v3032, %v2980
  %v3034 = vadd.f32 %v3033, %v2985
  %v3035 = vadd.f32 %v3034, %v2988
  %v3036 = vadd.f32 %v3035, %v2993
  %v3037 = vadd.f32 %v3036, %v2996
  %v3038 = vadd.f32 %v3037, %v3001
  %v3039 = vadd.f32 %v3038, %v3004
  %v3040 = vrot.slane %v3039, 4
  %v3041 = vadd.f32 %v3039, %v3040
  %v3042 = vrot.slane %v3041, 2
  %v3043 = vadd.f32 %v3041, %v3042
  %v3044 = vrot.slane %v3043, 1
  %v3045 = vadd.f32 %v3043, %v3044
  %v3046 = vmul.f32 %v2881, %v2881
  %v3047 = vmul.f32 %v2884, %v2884
  %v3048 = vmul.f32 %v2889, %v2889
  %v3049 = vmul.f32 %v2892, %v2892
  %v3050 = vmul.f32 %v2897, %v2897
  %v3051 = vmul.f32 %v2900, %v2900
  %v3052 = vmul.f32 %v2905, %v2905
  %v3053 = vmul.f32 %v2908, %v2908
  %v3054 = vmul.f32 %v2913, %v2913
  %v3055 = vmul.f32 %v2916, %v2916
  %v3056 = vmul.f32 %v2921, %v2921
  %v3057 = vmul.f32 %v2924, %v2924
  %v3058 = vmul.f32 %v2929, %v2929
  %v3059 = vmul.f32 %v2932, %v2932
  %v3060 = vmul.f32 %v2937, %v2937
  %v3061 = vmul.f32 %v2940, %v2940
  %v3062 = vmul.f32 %v2945, %v2945
  %v3063 = vmul.f32 %v2948, %v2948
  %v3064 = vmul.f32 %v2953, %v2953
  %v3065 = vmul.f32 %v2956, %v2956
  %v3066 = vmul.f32 %v2961, %v2961
  %v3067 = vmul.f32 %v2964, %v2964
  %v3068 = vmul.f32 %v2969, %v2969
  %v3069 = vmul.f32 %v2972, %v2972
  %v3070 = vmul.f32 %v2977, %v2977
  %v3071 = vmul.f32 %v2980, %v2980
  %v3072 = vmul.f32 %v2985, %v2985
  %v3073 = vmul.f32 %v2988, %v2988
  %v3074 = vmul.f32 %v2993, %v2993
  %v3075 = vmul.f32 %v2996, %v2996
  %v3076 = vmul.f32 %v3001, %v3001
  %v3077 = vmul.f32 %v3004, %v3004
  %v3078 = vadd.f32 %v3046, %v3047
  %v3079 = vadd.f32 %v3078, %v3048
  %v3080 = vadd.f32 %v3079, %v3049
  %v3081 = vadd.f32 %v3080, %v3050
  %v3082 = vadd.f32 %v3081, %v3051
  %v3083 = vadd.f32 %v3082, %v3052
  %v3084 = vadd.f32 %v3083, %v3053
  %v3085 = vadd.f32 %v3084, %v3054
  %v3086 = vadd.f32 %v3085, %v3055
  %v3087 = vadd.f32 %v3086, %v3056
  %v3088 = vadd.f32 %v3087, %v3057
  %v3089 = vadd.f32 %v3088, %v3058
  %v3090 = vadd.f32 %v3089, %v3059
  %v3091 = vadd.f32 %v3090, %v3060
  %v3092 = vadd.f32 %v3091, %v3061
  %v3093 = vadd.f32 %v3092, %v3062
  %v3094 = vadd.f32 %v3093, %v3063
  %v3095 = vadd.f32 %v3094, %v3064
  %v3096 = vadd.f32 %v3095, %v3065
  %v3097 = vadd.f32 %v3096, %v3066
  %v3098 = vadd.f32 %v3097, %v3067
  %v3099 = vadd.f32 %v3098, %v3068
  %v3100 = vadd.f32 %v3099, %v3069
  %v3101 = vadd.f32 %v3100, %v3070
  %v3102 = vadd.f32 %v3101, %v3071
  %v3103 = vadd.f32 %v3102, %v3072
  %v3104 = vadd.f32 %v3103, %v3073
  %v3105 = vadd.f32 %v3104, %v3074
  %v3106 = vadd.f32 %v3105, %v3075
  %v3107 = vadd.f32 %v3106, %v3076
  %v3108 = vadd.f32 %v3107, %v3077
  %v3109 = vrot.slane %v3108, 4
  %v3110 = vadd.f32 %v3108, %v3109
  %v3111 = vrot.slane %v3110, 2
  %v3112 = vadd.f32 %v3110, %v3111
  %v3113 = vrot.slane %v3112, 1
  %v3114 = vadd.f32 %v3112, %v3113
  %3115 = vmatprep.subr.mxu0 0.0
  %3116 = vmatpush1.msra.mxu0 %v766
  %3117 = vmatprep.subr.mxu0 0.0
  %3118 = vmatpush1.msra.mxu0 %v767
  %3119 = vmatprep.subr.mxu0 0.0
  %3120 = vmatpush1.msra.mxu0 %v768
  %3121 = vmatprep.subr.mxu0 0.0
  %3122 = vmatpush1.msra.mxu0 %v769
  %3123 = vmatprep.subr.mxu0 0.0
  %3124 = vmatpush1.msra.mxu0 %v770
  %3125 = vmatprep.subr.mxu0 0.0
  %3126 = vmatpush1.msra.mxu0 %v771
  %3127 = vmatprep.subr.mxu0 0.0
  %3128 = vmatpush1.msra.mxu0 %v772
  %3129 = vmatprep.subr.mxu0 0.0
  %3130 = vmatpush1.msra.mxu0 %v773
  %3131 = vmatprep.subr.mxu0 0.0
  %3132 = vmatpush1.msra.mxu0 %v774
  %3133 = vmatprep.subr.mxu0 0.0
  %3134 = vmatpush1.msra.mxu0 %v775
  %3135 = vmatprep.subr.mxu0 0.0
  %3136 = vmatpush1.msra.mxu0 %v776
  %3137 = vmatprep.subr.mxu0 0.0
  %3138 = vmatpush1.msra.mxu0 %v777
  %3139 = vmatprep.subr.mxu0 0.0
  %3140 = vmatpush1.msra.mxu0 %v778
  %3141 = vmatprep.subr.mxu0 0.0
  %3142 = vmatpush1.msra.mxu0 %v779
  %3143 = vmatprep.subr.mxu0 0.0
  %3144 = vmatpush1.msra.mxu0 %v780
  %3145 = vmatprep.subr.mxu0 0.0
  %3146 = vmatpush1.msra.mxu0 %v781
  %3147 = vmatprep.subr.mxu0 0.0
  %3148 = vmatpush1.msra.mxu0 0.0
  %3149 = vmatprep.subr.mxu0 0.0
  %3150 = vmatpush1.msra.mxu0 0.0
  %3151 = vmatprep.subr.mxu0 0.0
  %3152 = vmatpush1.msra.mxu0 0.0
  %3153 = vmatprep.subr.mxu0 0.0
  %3154 = vmatpush1.msra.mxu0 0.0
  %3155 = vmatprep.subr.mxu0 0.0
  %3156 = vmatpush1.msra.mxu0 0.0
  %3157 = vmatprep.subr.mxu0 0.0
  %3158 = vmatpush1.msra.mxu0 0.0
  %3159 = vmatprep.subr.mxu0 0.0
  %3160 = vmatpush1.msra.mxu0 0.0
  %3161 = vmatprep.subr.mxu0 0.0
  %3162 = vmatpush1.msra.mxu0 0.0
  %3163 = vmatprep.subr.mxu0 0.0
  %3164 = vmatpush1.msra.mxu0 0.0
  %3165 = vmatprep.subr.mxu0 0.0
  %3166 = vmatpush1.msra.mxu0 0.0
  %3167 = vmatprep.subr.mxu0 0.0
  %3168 = vmatpush1.msra.mxu0 0.0
  %3169 = vmatprep.subr.mxu0 0.0
  %3170 = vmatpush1.msra.mxu0 0.0
  %3171 = vmatprep.subr.mxu0 0.0
  %3172 = vmatpush1.msra.mxu0 0.0
  %3173 = vmatprep.subr.mxu0 0.0
  %3174 = vmatpush1.msra.mxu0 0.0
  %3175 = vmatprep.subr.mxu0 0.0
  %3176 = vmatpush1.msra.mxu0 0.0
  %3177 = vmatprep.subr.mxu0 0.0
  %3178 = vmatpush1.msra.mxu0 0.0
  %3179 = vmatprep.mubr.f32.mxu0 0.0
  %3180 = vmatmul.mubr.f32.gmra.mrb[0].mxu0 %v3045
  %v3181 = vpop.f32.mrb[0].mxu0
  %v3182 = vadd.f32 0.0, %v3181
  %v3183 = vpop.f32.mrb[0].mxu0
  %3184 = vdwg.mxu0
  %v3185 = vmul.f32 %v3182, 0.00024414063
  %3186 = vmatprep.subr.mxu0 0.0
  %3187 = vmatpush1.msra.mxu0 %v766
  %3188 = vmatprep.subr.mxu0 0.0
  %3189 = vmatpush1.msra.mxu0 %v767
  %3190 = vmatprep.subr.mxu0 0.0
  %3191 = vmatpush1.msra.mxu0 %v768
  %3192 = vmatprep.subr.mxu0 0.0
  %3193 = vmatpush1.msra.mxu0 %v769
  %3194 = vmatprep.subr.mxu0 0.0
  %3195 = vmatpush1.msra.mxu0 %v770
  %3196 = vmatprep.subr.mxu0 0.0
  %3197 = vmatpush1.msra.mxu0 %v771
  %3198 = vmatprep.subr.mxu0 0.0
  %3199 = vmatpush1.msra.mxu0 %v772
  %3200 = vmatprep.subr.mxu0 0.0
  %3201 = vmatpush1.msra.mxu0 %v773
  %3202 = vmatprep.subr.mxu0 0.0
  %3203 = vmatpush1.msra.mxu0 %v774
  %3204 = vmatprep.subr.mxu0 0.0
  %3205 = vmatpush1.msra.mxu0 %v775
  %3206 = vmatprep.subr.mxu0 0.0
  %3207 = vmatpush1.msra.mxu0 %v776
  %3208 = vmatprep.subr.mxu0 0.0
  %3209 = vmatpush1.msra.mxu0 %v777
  %3210 = vmatprep.subr.mxu0 0.0
  %3211 = vmatpush1.msra.mxu0 %v778
  %3212 = vmatprep.subr.mxu0 0.0
  %3213 = vmatpush1.msra.mxu0 %v779
  %3214 = vmatprep.subr.mxu0 0.0
  %3215 = vmatpush1.msra.mxu0 %v780
  %3216 = vmatprep.subr.mxu0 0.0
  %3217 = vmatpush1.msra.mxu0 %v781
  %3218 = vmatprep.subr.mxu0 0.0
  %3219 = vmatpush1.msra.mxu0 0.0
  %3220 = vmatprep.subr.mxu0 0.0
  %3221 = vmatpush1.msra.mxu0 0.0
  %3222 = vmatprep.subr.mxu0 0.0
  %3223 = vmatpush1.msra.mxu0 0.0
  %3224 = vmatprep.subr.mxu0 0.0
  %3225 = vmatpush1.msra.mxu0 0.0
  %3226 = vmatprep.subr.mxu0 0.0
  %3227 = vmatpush1.msra.mxu0 0.0
  %3228 = vmatprep.subr.mxu0 0.0
  %3229 = vmatpush1.msra.mxu0 0.0
  %3230 = vmatprep.subr.mxu0 0.0
  %3231 = vmatpush1.msra.mxu0 0.0
  %3232 = vmatprep.subr.mxu0 0.0
  %3233 = vmatpush1.msra.mxu0 0.0
  %3234 = vmatprep.subr.mxu0 0.0
  %3235 = vmatpush1.msra.mxu0 0.0
  %3236 = vmatprep.subr.mxu0 0.0
  %3237 = vmatpush1.msra.mxu0 0.0
  %3238 = vmatprep.subr.mxu0 0.0
  %3239 = vmatpush1.msra.mxu0 0.0
  %3240 = vmatprep.subr.mxu0 0.0
  %3241 = vmatpush1.msra.mxu0 0.0
  %3242 = vmatprep.subr.mxu0 0.0
  %3243 = vmatpush1.msra.mxu0 0.0
  %3244 = vmatprep.subr.mxu0 0.0
  %3245 = vmatpush1.msra.mxu0 0.0
  %3246 = vmatprep.subr.mxu0 0.0
  %3247 = vmatpush1.msra.mxu0 0.0
  %3248 = vmatprep.subr.mxu0 0.0
  %3249 = vmatpush1.msra.mxu0 0.0
  %3250 = vmatprep.mubr.f32.mxu0 0.0
  %3251 = vmatmul.mubr.f32.gmra.mrb[0].mxu0 %v3114
  %v3252 = vpop.f32.mrb[0].mxu0
  %v3253 = vadd.f32 0.0, %v3252
  %v3254 = vpop.f32.mrb[0].mxu0
  %3255 = vdwg.mxu0
  %v3256 = vmul.f32 %v3253, 0.00024414063
  %v3257 = vmul.f32 %v3185, %v3185
  %v3258 = vsub.f32 %v3256, %v3257
  %v3259 = vadd.f32 %v3258, 1e-05
  %v3260 = vrsqrt.pop %v3259
  %v3261 = vmul.f32 %v3007, %v3260
  %v3262 = vmul.f32 %v3185, %v3261
  %v3263 = vsub.f32 %v3008, %v3262
  %v3265 = vsel %vm1906, %v3261, 0
  %3267 = vmatprep.subr.mxu0 0.0
  %3268 = vmatpush1.msra.mxu0 %v796
  %3269 = vmatprep.subr.mxu0 0.0
  %3270 = vmatpush1.msra.mxu0 0.0
  %3271 = vmatprep.subr.mxu0 0.0
  %3272 = vmatpush1.msra.mxu0 0.0
  %3273 = vmatprep.subr.mxu0 0.0
  %3274 = vmatpush1.msra.mxu0 0.0
  %3275 = vmatprep.subr.mxu0 0.0
  %3276 = vmatpush1.msra.mxu0 0.0
  %3277 = vmatprep.subr.mxu0 0.0
  %3278 = vmatpush1.msra.mxu0 0.0
  %3279 = vmatprep.subr.mxu0 0.0
  %3280 = vmatpush1.msra.mxu0 0.0
  %3281 = vmatprep.subr.mxu0 0.0
  %3282 = vmatpush1.msra.mxu0 0.0
  %3283 = vmatprep.subr.mxu0 0.0
  %3284 = vmatpush1.msra.mxu0 0.0
  %3285 = vmatprep.subr.mxu0 0.0
  %3286 = vmatpush1.msra.mxu0 0.0
  %3287 = vmatprep.subr.mxu0 0.0
  %3288 = vmatpush1.msra.mxu0 0.0
  %3289 = vmatprep.subr.mxu0 0.0
  %3290 = vmatpush1.msra.mxu0 0.0
  %3291 = vmatprep.subr.mxu0 0.0
  %3292 = vmatpush1.msra.mxu0 0.0
  %3293 = vmatprep.subr.mxu0 0.0
  %3294 = vmatpush1.msra.mxu0 0.0
  %3295 = vmatprep.subr.mxu0 0.0
  %3296 = vmatpush1.msra.mxu0 0.0
  %3297 = vmatprep.subr.mxu0 0.0
  %3298 = vmatpush1.msra.mxu0 0.0
  %3299 = vmatprep.subr.mxu0 0.0
  %3300 = vmatpush1.msra.mxu0 0.0
  %3301 = vmatprep.subr.mxu0 0.0
  %3302 = vmatpush1.msra.mxu0 0.0
  %3303 = vmatprep.subr.mxu0 0.0
  %3304 = vmatpush1.msra.mxu0 0.0
  %3305 = vmatprep.subr.mxu0 0.0
  %3306 = vmatpush1.msra.mxu0 0.0
  %3307 = vmatprep.subr.mxu0 0.0
  %3308 = vmatpush1.msra.mxu0 0.0
  %3309 = vmatprep.subr.mxu0 0.0
  %3310 = vmatpush1.msra.mxu0 0.0
  %3311 = vmatprep.subr.mxu0 0.0
  %3312 = vmatpush1.msra.mxu0 0.0
  %3313 = vmatprep.subr.mxu0 0.0
  %3314 = vmatpush1.msra.mxu0 0.0
  %3315 = vmatprep.subr.mxu0 0.0
  %3316 = vmatpush1.msra.mxu0 0.0
  %3317 = vmatprep.subr.mxu0 0.0
  %3318 = vmatpush1.msra.mxu0 0.0
  %3319 = vmatprep.subr.mxu0 0.0
  %3320 = vmatpush1.msra.mxu0 0.0
  %3321 = vmatprep.subr.mxu0 0.0
  %3322 = vmatpush1.msra.mxu0 0.0
  %3323 = vmatprep.subr.mxu0 0.0
  %3324 = vmatpush1.msra.mxu0 0.0
  %3325 = vmatprep.subr.mxu0 0.0
  %3326 = vmatpush1.msra.mxu0 0.0
  %3327 = vmatprep.subr.mxu0 0.0
  %3328 = vmatpush1.msra.mxu0 0.0
  %3329 = vmatprep.subr.mxu0 0.0
  %3330 = vmatpush1.msra.mxu0 0.0
  %3331 = vmatprep.mubr.f32.mxu0 0.0
  %3332 = vmatmul.mubr.f32.gmra.mrb[0].mxu0 %v3265
  %v3333 = vpop.f32.mrb[0].mxu0
  %v3334 = vadd.f32 0.0, %v3333
  %v3335 = vpop.f32.mrb[0].mxu0
  %3336 = vdwg.mxu0
  %v3338 = vsel %vm1906, %v3263, 0
  %3340 = vmatprep.subr.mxu0 0.0
  %3341 = vmatpush1.msra.mxu0 %v796
  %3342 = vmatprep.subr.mxu0 0.0
  %3343 = vmatpush1.msra.mxu0 0.0
  %3344 = vmatprep.subr.mxu0 0.0
  %3345 = vmatpush1.msra.mxu0 0.0
  %3346 = vmatprep.subr.mxu0 0.0
  %3347 = vmatpush1.msra.mxu0 0.0
  %3348 = vmatprep.subr.mxu0 0.0
  %3349 = vmatpush1.msra.mxu0 0.0
  %3350 = vmatprep.subr.mxu0 0.0
  %3351 = vmatpush1.msra.mxu0 0.0
  %3352 = vmatprep.subr.mxu0 0.0
  %3353 = vmatpush1.msra.mxu0 0.0
  %3354 = vmatprep.subr.mxu0 0.0
  %3355 = vmatpush1.msra.mxu0 0.0
  %3356 = vmatprep.subr.mxu0 0.0
  %3357 = vmatpush1.msra.mxu0 0.0
  %3358 = vmatprep.subr.mxu0 0.0
  %3359 = vmatpush1.msra.mxu0 0.0
  %3360 = vmatprep.subr.mxu0 0.0
  %3361 = vmatpush1.msra.mxu0 0.0
  %3362 = vmatprep.subr.mxu0 0.0
  %3363 = vmatpush1.msra.mxu0 0.0
  %3364 = vmatprep.subr.mxu0 0.0
  %3365 = vmatpush1.msra.mxu0 0.0
  %3366 = vmatprep.subr.mxu0 0.0
  %3367 = vmatpush1.msra.mxu0 0.0
  %3368 = vmatprep.subr.mxu0 0.0
  %3369 = vmatpush1.msra.mxu0 0.0
  %3370 = vmatprep.subr.mxu0 0.0
  %3371 = vmatpush1.msra.mxu0 0.0
  %3372 = vmatprep.subr.mxu0 0.0
  %3373 = vmatpush1.msra.mxu0 0.0
  %3374 = vmatprep.subr.mxu0 0.0
  %3375 = vmatpush1.msra.mxu0 0.0
  %3376 = vmatprep.subr.mxu0 0.0
  %3377 = vmatpush1.msra.mxu0 0.0
  %3378 = vmatprep.subr.mxu0 0.0
  %3379 = vmatpush1.msra.mxu0 0.0
  %3380 = vmatprep.subr.mxu0 0.0
  %3381 = vmatpush1.msra.mxu0 0.0
  %3382 = vmatprep.subr.mxu0 0.0
  %3383 = vmatpush1.msra.mxu0 0.0
  %3384 = vmatprep.subr.mxu0 0.0
  %3385 = vmatpush1.msra.mxu0 0.0
  %3386 = vmatprep.subr.mxu0 0.0
  %3387 = vmatpush1.msra.mxu0 0.0
  %3388 = vmatprep.subr.mxu0 0.0
  %3389 = vmatpush1.msra.mxu0 0.0
  %3390 = vmatprep.subr.mxu0 0.0
  %3391 = vmatpush1.msra.mxu0 0.0
  %3392 = vmatprep.subr.mxu0 0.0
  %3393 = vmatpush1.msra.mxu0 0.0
  %3394 = vmatprep.subr.mxu0 0.0
  %3395 = vmatpush1.msra.mxu0 0.0
  %3396 = vmatprep.subr.mxu0 0.0
  %3397 = vmatpush1.msra.mxu0 0.0
  %3398 = vmatprep.subr.mxu0 0.0
  %3399 = vmatpush1.msra.mxu0 0.0
  %3400 = vmatprep.subr.mxu0 0.0
  %3401 = vmatpush1.msra.mxu0 0.0
  %3402 = vmatprep.subr.mxu0 0.0
  %3403 = vmatpush1.msra.mxu0 0.0
  %3404 = vmatprep.mubr.f32.mxu0 0.0
  %3405 = vmatmul.mubr.f32.gmra.mrb[0].mxu0 %v3338
  %v3406 = vpop.f32.mrb[0].mxu0
  %v3407 = vadd.f32 0.0, %v3406
  %v3408 = vpop.f32.mrb[0].mxu0
  %3409 = vdwg.mxu0
  %v3410 = vlaneseq
  %v3411 = vshrl.u32 %v3410, 7
  %v3412 = vsub.s32 0, %v3411
  %v3413 = vrot.slane %v3334, %v3412
  %v3414 = vmul.f32 %v2881, %v3413
  %v3415 = vmul.f32 %v2884, %v3413
  %v3416 = vmul.f32 %v2889, %v3413
  %v3417 = vmul.f32 %v2892, %v3413
  %v3418 = vmul.f32 %v2897, %v3413
  %v3419 = vmul.f32 %v2900, %v3413
  %v3420 = vmul.f32 %v2905, %v3413
  %v3421 = vmul.f32 %v2908, %v3413
  %v3422 = vmul.f32 %v2913, %v3413
  %v3423 = vmul.f32 %v2916, %v3413
  %v3424 = vmul.f32 %v2921, %v3413
  %v3425 = vmul.f32 %v2924, %v3413
  %v3426 = vmul.f32 %v2929, %v3413
  %v3427 = vmul.f32 %v2932, %v3413
  %v3428 = vmul.f32 %v2937, %v3413
  %v3429 = vmul.f32 %v2940, %v3413
  %v3430 = vmul.f32 %v2945, %v3413
  %v3431 = vmul.f32 %v2948, %v3413
  %v3432 = vmul.f32 %v2953, %v3413
  %v3433 = vmul.f32 %v2956, %v3413
  %v3434 = vmul.f32 %v2961, %v3413
  %v3435 = vmul.f32 %v2964, %v3413
  %v3436 = vmul.f32 %v2969, %v3413
  %v3437 = vmul.f32 %v2972, %v3413
  %v3438 = vmul.f32 %v2977, %v3413
  %v3439 = vmul.f32 %v2980, %v3413
  %v3440 = vmul.f32 %v2985, %v3413
  %v3441 = vmul.f32 %v2988, %v3413
  %v3442 = vmul.f32 %v2993, %v3413
  %v3443 = vmul.f32 %v2996, %v3413
  %v3444 = vmul.f32 %v3001, %v3413
  %v3445 = vmul.f32 %v3004, %v3413
  %v3446 = vlaneseq
  %v3447 = vshrl.u32 %v3446, 7
  %v3448 = vsub.s32 0, %v3447
  %v3449 = vrot.slane %v3407, %v3448
  %v3450 = vadd.f32 %v3414, %v3449
  %v3451 = vadd.f32 %v3415, %v3449
  %v3452 = vadd.f32 %v3416, %v3449
  %v3453 = vadd.f32 %v3417, %v3449
  %v3454 = vadd.f32 %v3418, %v3449
  %v3455 = vadd.f32 %v3419, %v3449
  %v3456 = vadd.f32 %v3420, %v3449
  %v3457 = vadd.f32 %v3421, %v3449
  %v3458 = vadd.f32 %v3422, %v3449
  %v3459 = vadd.f32 %v3423, %v3449
  %v3460 = vadd.f32 %v3424, %v3449
  %v3461 = vadd.f32 %v3425, %v3449
  %v3462 = vadd.f32 %v3426, %v3449
  %v3463 = vadd.f32 %v3427, %v3449
  %v3464 = vadd.f32 %v3428, %v3449
  %v3465 = vadd.f32 %v3429, %v3449
  %v3466 = vadd.f32 %v3430, %v3449
  %v3467 = vadd.f32 %v3431, %v3449
  %v3468 = vadd.f32 %v3432, %v3449
  %v3469 = vadd.f32 %v3433, %v3449
  %v3470 = vadd.f32 %v3434, %v3449
  %v3471 = vadd.f32 %v3435, %v3449
  %v3472 = vadd.f32 %v3436, %v3449
  %v3473 = vadd.f32 %v3437, %v3449
  %v3474 = vadd.f32 %v3438, %v3449
  %v3475 = vadd.f32 %v3439, %v3449
  %v3476 = vadd.f32 %v3440, %v3449
  %v3477 = vadd.f32 %v3441, %v3449
  %v3478 = vadd.f32 %v3442, %v3449
  %v3479 = vadd.f32 %v3443, %v3449
  %v3480 = vadd.f32 %v3444, %v3449
  %v3481 = vadd.f32 %v3445, %v3449
  %v3482 = vadd.f32 %v3450, %v27
  %v3483 = vadd.f32 %v3451, %v28
  %v3484 = vadd.f32 %v3452, %v29
  %v3485 = vadd.f32 %v3453, %v30
  %v3486 = vadd.f32 %v3454, %v31
  %v3487 = vadd.f32 %v3455, %v32
  %v3488 = vadd.f32 %v3456, %v33
  %v3489 = vadd.f32 %v3457, %v34
  %v3490 = vadd.f32 %v3458, %v35
  %v3491 = vadd.f32 %v3459, %v36
  %v3492 = vadd.f32 %v3460, %v37
  %v3493 = vadd.f32 %v3461, %v38
  %v3494 = vadd.f32 %v3462, %v39
  %v3495 = vadd.f32 %v3463, %v40
  %v3496 = vadd.f32 %v3464, %v41
  %v3497 = vadd.f32 %v3465, %v42
  %v3498 = vadd.f32 %v3466, %v43
  %v3499 = vadd.f32 %v3467, %v44
  %v3500 = vadd.f32 %v3468, %v45
  %v3501 = vadd.f32 %v3469, %v46
  %v3502 = vadd.f32 %v3470, %v47
  %v3503 = vadd.f32 %v3471, %v48
  %v3504 = vadd.f32 %v3472, %v49
  %v3505 = vadd.f32 %v3473, %v50
  %v3506 = vadd.f32 %v3474, %v51
  %v3507 = vadd.f32 %v3475, %v52
  %v3508 = vadd.f32 %v3476, %v53
  %v3509 = vadd.f32 %v3477, %v54
  %v3510 = vadd.f32 %v3478, %v55
  %v3511 = vadd.f32 %v3479, %v56
  %v3512 = vadd.f32 %v3480, %v57
  %v3513 = vadd.f32 %v3481, %v58
  %v3514 = vmax.f32 %v3482, 0.0
  %v3515 = vmax.f32 %v3483, 0.0
  %v3516 = vmax.f32 %v3484, 0.0
  %v3517 = vmax.f32 %v3485, 0.0
  %v3518 = vmax.f32 %v3486, 0.0
  %v3519 = vmax.f32 %v3487, 0.0
  %v3520 = vmax.f32 %v3488, 0.0
  %v3521 = vmax.f32 %v3489, 0.0
  %v3522 = vmax.f32 %v3490, 0.0
  %v3523 = vmax.f32 %v3491, 0.0
  %v3524 = vmax.f32 %v3492, 0.0
  %v3525 = vmax.f32 %v3493, 0.0
  %v3526 = vmax.f32 %v3494, 0.0
  %v3527 = vmax.f32 %v3495, 0.0
  %v3528 = vmax.f32 %v3496, 0.0
  %v3529 = vmax.f32 %v3497, 0.0
  %v3530 = vmax.f32 %v3498, 0.0
  %v3531 = vmax.f32 %v3499, 0.0
  %v3532 = vmax.f32 %v3500, 0.0
  %v3533 = vmax.f32 %v3501, 0.0
  %v3534 = vmax.f32 %v3502, 0.0
  %v3535 = vmax.f32 %v3503, 0.0
  %v3536 = vmax.f32 %v3504, 0.0
  %v3537 = vmax.f32 %v3505, 0.0
  %v3538 = vmax.f32 %v3506, 0.0
  %v3539 = vmax.f32 %v3507, 0.0
  %v3540 = vmax.f32 %v3508, 0.0
  %v3541 = vmax.f32 %v3509, 0.0
  %v3542 = vmax.f32 %v3510, 0.0
  %v3543 = vmax.f32 %v3511, 0.0
  %v3544 = vmax.f32 %v3512, 0.0
  %v3545 = vmax.f32 %v3513, 0.0
  %3546 = vst [vmem:[%s7] sm:$0xff] %v3514
  %3547 = vst [vmem:[%s7 + $0x8] sm:$0xff] %v3515
  %3548 = vst [vmem:[%s7 + $0x10] sm:$0xff] %v3516
  %3549 = vst [vmem:[%s7 + $0x18] sm:$0xff] %v3517
  %3550 = vst [vmem:[%s7 + $0x20] sm:$0xff] %v3518
  %3551 = vst [vmem:[%s7 + $0x28] sm:$0xff] %v3519
  %3552 = vst [vmem:[%s7 + $0x30] sm:$0xff] %v3520
  %3553 = vst [vmem:[%s7 + $0x38] sm:$0xff] %v3521
  %3554 = vst [vmem:[%s7 + $0x40] sm:$0xff] %v3522
  %3555 = vst [vmem:[%s7 + $0x48] sm:$0xff] %v3523
  %3556 = vst [vmem:[%s7 + $0x50] sm:$0xff] %v3524
  %3557 = vst [vmem:[%s7 + $0x58] sm:$0xff] %v3525
  %3558 = vst [vmem:[%s7 + $0x60] sm:$0xff] %v3526
  %3559 = vst [vmem:[%s7 + $0x68] sm:$0xff] %v3527
  %3560 = vst [vmem:[%s7 + $0x70] sm:$0xff] %v3528
  %3561 = vst [vmem:[%s7 + $0x78] sm:$0xff] %v3529
  %3562 = vst [vmem:[%s7 + $0x80] sm:$0xff] %v3530
  %3563 = vst [vmem:[%s7 + $0x88] sm:$0xff] %v3531
  %3564 = vst [vmem:[%s7 + $0x90] sm:$0xff] %v3532
  %3565 = vst [vmem:[%s7 + $0x98] sm:$0xff] %v3533
  %3566 = vst [vmem:[%s7 + $0xa0] sm:$0xff] %v3534
  %3567 = vst [vmem:[%s7 + $0xa8] sm:$0xff] %v3535
  %3568 = vst [vmem:[%s7 + $0xb0] sm:$0xff] %v3536
  %3569 = vst [vmem:[%s7 + $0xb8] sm:$0xff] %v3537
  %3570 = vst [vmem:[%s7 + $0xc0] sm:$0xff] %v3538
  %3571 = vst [vmem:[%s7 + $0xc8] sm:$0xff] %v3539
  %3572 = vst [vmem:[%s7 + $0xd0] sm:$0xff] %v3540
  %3573 = vst [vmem:[%s7 + $0xd8] sm:$0xff] %v3541
  %3574 = vst [vmem:[%s7 + $0xe0] sm:$0xff] %v3542
  %3575 = vst [vmem:[%s7 + $0xe8] sm:$0xff] %v3543
  %3576 = vst [vmem:[%s7 + $0xf0] sm:$0xff] %v3544
  %3577 = vst [vmem:[%s7 + $0xf8] sm:$0xff] %v3545
  // Predicated region
  $region30: #{basic_block_forward.1} parent=0 // pred_check
    _
  $region31: #{basic_block_forward.1} parent=0 // pred_check_branch
    %3579 = sbr.rel (0) target = $region33
  $region32: #{basic_block_forward.1} parent=0 // pred_region
    _
  $region33: #{basic_block_forward.1} parent=0 // pred_fallthru
    _
  // Predicated region
  $region34: #{basic_block_forward.1} parent=0 // pred_check
    _
  $region35: #{basic_block_forward.1} parent=0 // pred_check_branch
    %3581 = sbr.rel (0) target = $region37
  $region36: #{basic_block_forward.1} parent=0 // pred_region
    _
  $region37: #{basic_block_forward.1} parent=0 // pred_fallthru
    _

</llo_original>
